<compile_context>
chip_gen: v7x
topology: tpu7x:2x2x1
jax: 0.10.0
libtpu: 0.0.40
codegen_flags: <defaults>
</compile_context>

<pallas_src>
import math

import jax
import jax.numpy as jnp
from jax.experimental import pallas as pl
from jax.experimental.pallas import tpu as pltpu

# ArcFace constants (identical for every head: s=32.0, m=0.5)
_M = 0.5
_S = 32.0
_COS_M = math.cos(_M)
_SIN_M = math.sin(_M)
_MM = _SIN_M * _M
_THRESHOLD = math.cos(math.pi - _M)
_BN_EPS = 1e-5
_NORM_EPS = 1e-12  # F.normalize eps; also guards the ArcFace column norms

# Fused head layout along the concatenated class axis
_HEAD_SIZES = (168, 11, 18, 1295)      # root, consonant, vowel, unique
_HEAD_OFFSETS = (0, 168, 179, 197)
_C_TOTAL = sum(_HEAD_SIZES)            # 1492
_C_PAD = 12 * 128                      # 1536 -> lane-dense output slab

# bf16 operands for all matmuls (f32 accumulate): native MXU path on
# v5e/v6e/v7x and halves the weight DMA bytes.
_W_DTYPE = jnp.bfloat16


# ----------------------------------------------------------------------------
# Fused kernel: backbone proj (BN1 folded) -> intermid Linear (BN2 folded)
#               -> L2-norm -> fused 4-head ArcFace
# ----------------------------------------------------------------------------
def _fused_kernel(pooled_ref, bb_w_ref, bb_b_ref, inter_w_ref, inter_b_ref,
                  arc_w_ref, labels_ref, out_ref):
    # ---- backbone stand-in projection (BN1 pre-folded into W/b) ------------
    feat = jnp.dot(pooled_ref[...].astype(_W_DTYPE), bb_w_ref[...],
                   preferred_element_type=jnp.float32) + bb_b_ref[...]

    # ---- shared intermid Linear (BN2 pre-folded into W/b), Dropout = id ----
    z = jnp.dot(feat.astype(_W_DTYPE), inter_w_ref[...],
                preferred_element_type=jnp.float32) + inter_b_ref[...]

    # F.normalize(p=2, dim=1): single EUP rsqrt on the serial path
    emb = z * jax.lax.rsqrt(jnp.sum(z * z, axis=1, keepdims=True) + _NORM_EPS)

    # ---- fused ArcFace over the concatenated / padded class axis ----------
    # arc_w columns are already unit-norm (normalized in f32 at init, then
    # cast to bf16), so the matmul directly yields cos(theta).
    cos = jnp.dot(emb.astype(_W_DTYPE), arc_w_ref[...],
                  preferred_element_type=jnp.float32)
    cos = jnp.clip(cos, -1.0, 1.0)
    sin = jnp.sqrt(jnp.maximum(1.0 - cos * cos, 0.0))
    cos_m = cos * _COS_M - sin * _SIN_M
    # fallback where cos - threshold <= 0 (easy_margin=False semantics)
    cos_m = jnp.where((cos - _THRESHOLD) <= 0.0, cos - _MM, cos_m)

    tb, c = cos.shape
    col = jax.lax.broadcasted_iota(jnp.int32, (tb, c), 1)
    labels = labels_ref[...]                                # (TB, 4) int32
    mask = ((col == labels[:, 0:1]) | (col == labels[:, 1:2]) |
            (col == labels[:, 2:3]) | (col == labels[:, 3:4]))
    out_ref[...] = jnp.where(mask, cos_m, cos) * _S


# ----------------------------------------------------------------------------
# Parameters (deterministic, synthetic) — all static affines folded in
# ----------------------------------------------------------------------------
def init_params(key, in_channels, feature_size, embedding_size=512):
    keys = jax.random.split(key, 3)
    p = {}

    # TODO(synk): the timm `create_model` backbone has no clean Pallas
    # equivalent; a global-average-pool + linear projection stands in for it.
    bb_w = 0.1 * jax.random.normal(
        keys[0], (in_channels, feature_size), jnp.float32)
    bb_b = jnp.zeros((1, feature_size), jnp.float32)

    # Eval-mode BatchNorm1d(feature_size): gamma=1, beta=0, mean=0, var=1
    scale1 = jnp.full((1, feature_size), 1.0 / math.sqrt(1.0 + _BN_EPS),
                      jnp.float32)
    shift1 = jnp.zeros((1, feature_size), jnp.float32)
    # Fold BN1 into the backbone projection.
    bb_w = bb_w * scale1
    bb_b = bb_b * scale1 + shift1
    p["backbone_w"] = bb_w.astype(_W_DTYPE)
    p["backbone_b"] = bb_b                                   # f32

    # Shared intermid Linear(feature_size, 512): kaiming_normal_ (fan_in)
    inter_w = jax.random.normal(
        keys[1], (feature_size, embedding_size), jnp.float32
    ) * math.sqrt(2.0 / feature_size)
    inter_b = jnp.zeros((1, embedding_size), jnp.float32)

    # Eval-mode BatchNorm1d(512) folded into the Linear.
    scale2 = jnp.full((1, embedding_size), 1.0 / math.sqrt(1.0 + _BN_EPS),
                      jnp.float32)
    shift2 = jnp.zeros((1, embedding_size), jnp.float32)
    inter_w = inter_w * scale2
    inter_b = inter_b * scale2 + shift2
    p["inter_w"] = inter_w.astype(_W_DTYPE)
    p["inter_b"] = inter_b                                   # f32

    # ArcFace weights: uniform(-1,1) per head (the renorm(2,1,1e-5).mul_(1e5)
    # init + the in-forward l2_norm(axis=0) just column-normalizes), fused
    # along the class axis and zero-padded to lane-dense 1536 columns.
    # Columns are normalized in f32 FIRST, then cast to bf16, so the norms are
    # consistent with the weights fed to the MXU.
    arc_keys = jax.random.split(keys[2], 4)
    heads = [jax.random.uniform(k, (embedding_size, c), jnp.float32, -1.0, 1.0)
             for k, c in zip(arc_keys, _HEAD_SIZES)]
    w_cat = jnp.concatenate(heads, axis=1)
    w_cat = jnp.pad(w_cat, ((0, 0), (0, _C_PAD - _C_TOTAL)))
    col_norm = jnp.sqrt(jnp.sum(w_cat * w_cat, axis=0, keepdims=True))
    w_norm = w_cat / jnp.maximum(col_norm, _NORM_EPS)
    p["arc_w"] = w_norm.astype(_W_DTYPE)                     # (512, 1536) bf16
    return p


# ----------------------------------------------------------------------------
# Forward (MultiHeadModel.forward)
# ----------------------------------------------------------------------------
def multi_head_forward(params, x, root_lbl, cons_lbl, vowel_lbl, uniq_lbl,
                       *, tb_max=128):
    B = x.shape[0]
    # Stand-in backbone front-end: global average pool (NCHW -> (B, C)).
    pooled = jnp.mean(x, axis=(2, 3))

    # Per-head labels shifted into the concatenated class axis -> one (B, 4)
    # int32 block (a single tiny DMA instead of four per-head ones).
    labels = jnp.stack(
        [root_lbl.astype(jnp.int32) + _HEAD_OFFSETS[0],
         cons_lbl.astype(jnp.int32) + _HEAD_OFFSETS[1],
         vowel_lbl.astype(jnp.int32) + _HEAD_OFFSETS[2],
         uniq_lbl.astype(jnp.int32) + _HEAD_OFFSETS[3]], axis=1)

    # Batch tiling: round up to a sublane multiple of 8, pick a tile TB, and
    # pad the batch so the grid divides evenly (padded rows are sliced off).
    b_pad = -(-B // 8) * 8
    tb = min(tb_max, b_pad)
    b_pad = -(-b_pad // tb) * tb
    if b_pad != B:
        pooled = jnp.pad(pooled, ((0, b_pad - B), (0, 0)))
        labels = jnp.pad(labels, ((0, b_pad - B), (0, 0)))
    feat_dim = pooled.shape[1]

    # Weights use a constant index_map -> stay resident in VMEM across the
    # batch grid; only the (TB, F) input, (TB, 4) labels and (TB, 1536)
    # output stream per step.  VMEM footprint at TB=128 is ~3.5 MB, far under
    # the scoped default on v5e (16 MiB) / v6e / v7x (32 MiB); raise
    # vmem_limit_bytes only if tb_max is pushed past ~1024.
    grid = (b_pad // tb,)
    out = pl.pallas_call(
        _fused_kernel,
        out_shape=jax.ShapeDtypeStruct((b_pad, _C_PAD), jnp.float32),
        grid_spec=pltpu.PrefetchScalarGridSpec(
            num_scalar_prefetch=0,
            grid=grid,
            in_specs=[
                pl.BlockSpec((tb, feat_dim), lambda i: (i, 0)),        # pooled
                pl.BlockSpec(params["backbone_w"].shape, lambda i: (0, 0)),
                pl.BlockSpec(params["backbone_b"].shape, lambda i: (0, 0)),
                pl.BlockSpec(params["inter_w"].shape, lambda i: (0, 0)),
                pl.BlockSpec(params["inter_b"].shape, lambda i: (0, 0)),
                pl.BlockSpec(params["arc_w"].shape, lambda i: (0, 0)),
                pl.BlockSpec((tb, 4), lambda i: (i, 0)),               # labels
            ],
            out_specs=pl.BlockSpec((tb, _C_PAD), lambda i: (i, 0)),
        ),
        compiler_params=pltpu.CompilerParams(
            dimension_semantics=("parallel",)),   # lets v7x's 2 TCs split B
    )(pooled, params["backbone_w"], params["backbone_b"],
      params["inter_w"], params["inter_b"], params["arc_w"], labels)

    out = out[:B]
    o0, o1, o2, o3 = _HEAD_OFFSETS
    root = out[:, o0:o0 + _HEAD_SIZES[0]]
    consonant = out[:, o1:o1 + _HEAD_SIZES[1]]
    vowel = out[:, o2:o2 + _HEAD_SIZES[2]]
    unique = out[:, o3:o3 + _HEAD_SIZES[3]]
    return root, consonant, vowel, unique


if __name__ == "__main__":
    key = jax.random.PRNGKey(0)
    kx, kp, k1, k2, k3, k4 = jax.random.split(key, 6)

    B, C, H, W = 8, 4, 16, 16
    feature_size = 64

    x = jax.random.normal(kx, (B, C, H, W), jnp.float32)
    params = init_params(kp, C, feature_size)

    root_lbl = jax.random.randint(k1, (B,), 0, 168, dtype=jnp.int32)
    cons_lbl = jax.random.randint(k2, (B,), 0, 11, dtype=jnp.int32)
    vowel_lbl = jax.random.randint(k3, (B,), 0, 18, dtype=jnp.int32)
    uniq_lbl = jax.random.randint(k4, (B,), 0, 1295, dtype=jnp.int32)

    outs = jax.jit(multi_head_forward)(params, x, root_lbl, cons_lbl,
                                       vowel_lbl, uniq_lbl)
    outs = jax.block_until_ready(outs)

    assert outs[0].shape == (B, 168)
    assert outs[1].shape == (B, 11)
    assert outs[2].shape == (B, 18)
    assert outs[3].shape == (B, 1295)
    assert all(bool(jnp.all(jnp.isfinite(o))) for o in outs)
    print("KERNEL_OK")
</pallas_src>

<mosaic_0001>
module attributes {stable_mosaic.version = 11 : i64} {
  func.func @_fused_kernel(%arg0: i32, %arg1: memref<8x4xf32, #tpu.memory_space<vmem>>, %arg2: memref<4x64xbf16, #tpu.memory_space<vmem>>, %arg3: memref<1x64xf32, #tpu.memory_space<vmem>>, %arg4: memref<64x512xbf16, #tpu.memory_space<vmem>>, %arg5: memref<1x512xf32, #tpu.memory_space<vmem>>, %arg6: memref<512x1536xbf16, #tpu.memory_space<vmem>>, %arg7: memref<8x4xi32, #tpu.memory_space<vmem>>, %arg8: memref<8x1536xf32, #tpu.memory_space<vmem>>) attributes {dimension_semantics = [#tpu.dimension_semantics<parallel>], iteration_bounds = array<i64: 1>, scalar_prefetch = 0 : i64, scratch_operands = 0 : i64, tpu.core_type = #tpu.core_type<tc>, window_params = [{transform_indices = @transform_0, window_bounds = array<i64: 8, 4>}, {pipeline_mode = #tpu.pipeline_mode<synchronous>, transform_indices = @transform_1, window_bounds = array<i64: 4, 64>}, {pipeline_mode = #tpu.pipeline_mode<synchronous>, transform_indices = @transform_2, window_bounds = array<i64: 1, 64>}, {pipeline_mode = #tpu.pipeline_mode<synchronous>, transform_indices = @transform_3, window_bounds = array<i64: 64, 512>}, {pipeline_mode = #tpu.pipeline_mode<synchronous>, transform_indices = @transform_4, window_bounds = array<i64: 1, 512>}, {pipeline_mode = #tpu.pipeline_mode<synchronous>, transform_indices = @transform_5, window_bounds = array<i64: 512, 1536>}, {transform_indices = @transform_6, window_bounds = array<i64: 8, 4>}, {transform_indices = @transform_7, window_bounds = array<i64: 8, 1536>}]} {
    %c0 = arith.constant 0 : index
    %c0_0 = arith.constant 0 : index
    %0 = vector.load %arg1[%c0, %c0_0] : memref<8x4xf32, #tpu.memory_space<vmem>>, vector<8x4xf32>
    %1 = arith.truncf %0 : vector<8x4xf32> to vector<8x4xbf16>
    %c0_1 = arith.constant 0 : index
    %c0_2 = arith.constant 0 : index
    %2 = vector.load %arg2[%c0_1, %c0_2] : memref<4x64xbf16, #tpu.memory_space<vmem>>, vector<4x64xbf16>
    %cst = arith.constant dense<0.000000e+00> : vector<8x64xf32>
    %3 = tpu.matmul %1, %2, %cst {dimension_numbers = #tpu.dot_dimension_numbers<[1], [0], [0], [1], [0, 0, 1, 1], [], []>} : vector<8x4xbf16>, vector<4x64xbf16>, vector<8x64xf32> -> vector<8x64xf32>
    %c0_3 = arith.constant 0 : index
    %c0_4 = arith.constant 0 : index
    %4 = vector.load %arg3[%c0_3, %c0_4] : memref<1x64xf32, #tpu.memory_space<vmem>>, vector<1x64xf32>
    %5 = vector.broadcast %4 : vector<1x64xf32> to vector<8x64xf32>
    %6 = arith.addf %3, %5 : vector<8x64xf32>
    %7 = arith.truncf %6 : vector<8x64xf32> to vector<8x64xbf16>
    %c0_5 = arith.constant 0 : index
    %c0_6 = arith.constant 0 : index
    %8 = vector.load %arg4[%c0_5, %c0_6] : memref<64x512xbf16, #tpu.memory_space<vmem>>, vector<64x512xbf16>
    %cst_7 = arith.constant dense<0.000000e+00> : vector<8x512xf32>
    %9 = tpu.matmul %7, %8, %cst_7 {dimension_numbers = #tpu.dot_dimension_numbers<[1], [0], [0], [1], [0, 0, 1, 1], [], []>} : vector<8x64xbf16>, vector<64x512xbf16>, vector<8x512xf32> -> vector<8x512xf32>
    %c0_8 = arith.constant 0 : index
    %c0_9 = arith.constant 0 : index
    %10 = vector.load %arg5[%c0_8, %c0_9] : memref<1x512xf32, #tpu.memory_space<vmem>>, vector<1x512xf32>
    %11 = vector.broadcast %10 : vector<1x512xf32> to vector<8x512xf32>
    %12 = arith.addf %9, %11 : vector<8x512xf32>
    %13 = arith.mulf %12, %12 : vector<8x512xf32>
    %cst_10 = arith.constant dense<0.000000e+00> : vector<8xf32>
    %14 = vector.multi_reduction <add>, %13, %cst_10 [1] : vector<8x512xf32> to vector<8xf32>
    %15 = vector.shape_cast %14 : vector<8xf32> to vector<8x1xf32>
    %cst_11 = arith.constant 9.99999996E-13 : f32
    %16 = vector.broadcast %cst_11 : f32 to vector<8x1xf32>
    %17 = arith.addf %15, %16 : vector<8x1xf32>
    %18 = math.rsqrt %17 : vector<8x1xf32>
    %19 = vector.broadcast %18 : vector<8x1xf32> to vector<8x512xf32>
    %20 = arith.mulf %12, %19 : vector<8x512xf32>
    %21 = arith.truncf %20 : vector<8x512xf32> to vector<8x512xbf16>
    %c0_12 = arith.constant 0 : index
    %c0_13 = arith.constant 0 : index
    %22 = vector.load %arg6[%c0_12, %c0_13] : memref<512x1536xbf16, #tpu.memory_space<vmem>>, vector<512x1536xbf16>
    %cst_14 = arith.constant dense<0.000000e+00> : vector<8x1536xf32>
    %23 = tpu.matmul %21, %22, %cst_14 {dimension_numbers = #tpu.dot_dimension_numbers<[1], [0], [0], [1], [0, 0, 1, 1], [], []>} : vector<8x512xbf16>, vector<512x1536xbf16>, vector<8x1536xf32> -> vector<8x1536xf32>
    %cst_15 = arith.constant -1.000000e+00 : f32
    %cst_16 = arith.constant 1.000000e+00 : f32
    %24 = vector.broadcast %cst_15 : f32 to vector<8x1536xf32>
    %25 = arith.maximumf %24, %23 : vector<8x1536xf32>
    %26 = vector.broadcast %cst_16 : f32 to vector<8x1536xf32>
    %27 = arith.minimumf %26, %25 : vector<8x1536xf32>
    %28 = arith.mulf %27, %27 : vector<8x1536xf32>
    %cst_17 = arith.constant 1.000000e+00 : f32
    %29 = vector.broadcast %cst_17 : f32 to vector<8x1536xf32>
    %30 = arith.subf %29, %28 : vector<8x1536xf32>
    %cst_18 = arith.constant 0.000000e+00 : f32
    %31 = vector.broadcast %cst_18 : f32 to vector<8x1536xf32>
    %32 = arith.maximumf %30, %31 : vector<8x1536xf32>
    %33 = math.sqrt %32 : vector<8x1536xf32>
    %cst_19 = arith.constant 0.87758255 : f32
    %34 = vector.broadcast %cst_19 : f32 to vector<8x1536xf32>
    %35 = arith.mulf %27, %34 : vector<8x1536xf32>
    %cst_20 = arith.constant 0.47942555 : f32
    %36 = vector.broadcast %cst_20 : f32 to vector<8x1536xf32>
    %37 = arith.mulf %33, %36 : vector<8x1536xf32>
    %38 = arith.subf %35, %37 : vector<8x1536xf32>
    %cst_21 = arith.constant -0.87758255 : f32
    %39 = vector.broadcast %cst_21 : f32 to vector<8x1536xf32>
    %40 = arith.subf %27, %39 : vector<8x1536xf32>
    %cst_22 = arith.constant 0.000000e+00 : f32
    %41 = vector.broadcast %cst_22 : f32 to vector<8x1536xf32>
    %42 = arith.cmpf ole, %40, %41 : vector<8x1536xf32>
    %cst_23 = arith.constant 0.239712775 : f32
    %43 = vector.broadcast %cst_23 : f32 to vector<8x1536xf32>
    %44 = arith.subf %27, %43 : vector<8x1536xf32>
    %45 = arith.select %42, %44, %38 : vector<8x1536xi1>, vector<8x1536xf32>
    %46 = tpu.iota {dimensions = array<i32: 1>} : vector<8x1536xi32>
    %c0_24 = arith.constant 0 : index
    %c0_25 = arith.constant 0 : index
    %47 = vector.load %arg7[%c0_24, %c0_25] : memref<8x4xi32, #tpu.memory_space<vmem>>, vector<8x4xi32>
    %48 = vector.extract_strided_slice %47 {offsets = [0, 0], sizes = [8, 1], strides = [1, 1]} : vector<8x4xi32> to vector<8x1xi32>
    %49 = vector.broadcast %48 : vector<8x1xi32> to vector<8x1536xi32>
    %50 = arith.cmpi eq, %46, %49 : vector<8x1536xi32>
    %51 = vector.extract_strided_slice %47 {offsets = [0, 1], sizes = [8, 1], strides = [1, 1]} : vector<8x4xi32> to vector<8x1xi32>
    %52 = vector.broadcast %51 : vector<8x1xi32> to vector<8x1536xi32>
    %53 = arith.cmpi eq, %46, %52 : vector<8x1536xi32>
    %54 = arith.ori %50, %53 : vector<8x1536xi1>
    %55 = vector.extract_strided_slice %47 {offsets = [0, 2], sizes = [8, 1], strides = [1, 1]} : vector<8x4xi32> to vector<8x1xi32>
    %56 = vector.broadcast %55 : vector<8x1xi32> to vector<8x1536xi32>
    %57 = arith.cmpi eq, %46, %56 : vector<8x1536xi32>
    %58 = arith.ori %54, %57 : vector<8x1536xi1>
    %59 = vector.extract_strided_slice %47 {offsets = [0, 3], sizes = [8, 1], strides = [1, 1]} : vector<8x4xi32> to vector<8x1xi32>
    %60 = vector.broadcast %59 : vector<8x1xi32> to vector<8x1536xi32>
    %61 = arith.cmpi eq, %46, %60 : vector<8x1536xi32>
    %62 = arith.ori %58, %61 : vector<8x1536xi1>
    %63 = arith.select %62, %45, %27 : vector<8x1536xi1>, vector<8x1536xf32>
    %cst_26 = arith.constant 3.200000e+01 : f32
    %64 = vector.broadcast %cst_26 : f32 to vector<8x1536xf32>
    %65 = arith.mulf %63, %64 : vector<8x1536xf32>
    %c0_27 = arith.constant 0 : index
    %c0_28 = arith.constant 0 : index
    %66 = vector.load %arg8[%c0_27, %c0_28] : memref<8x1536xf32, #tpu.memory_space<vmem>>, vector<8x1536xf32>
    tpu.vector_store %arg8[%c0_27, %c0_28], %65 {strides = array<i32>} : memref<8x1536xf32, #tpu.memory_space<vmem>>, vector<8x1536xf32>,
    return
  }
  func.func @transform_0(%arg0: i32) -> (i32, i32) {
    %c0_i32 = arith.constant 0 : i32
    %c0_i32_0 = arith.constant 0 : i32
    return %arg0, %c0_i32 : i32, i32
  }
  func.func @transform_1(%arg0: i32) -> (i32, i32) {
    %c0_i32 = arith.constant 0 : i32
    %c0_i32_0 = arith.constant 0 : i32
    %c0_i32_1 = arith.constant 0 : i32
    return %c0_i32, %c0_i32_0 : i32, i32
  }
  func.func @transform_2(%arg0: i32) -> (i32, i32) {
    %c0_i32 = arith.constant 0 : i32
    %c0_i32_0 = arith.constant 0 : i32
    %c0_i32_1 = arith.constant 0 : i32
    return %c0_i32, %c0_i32_0 : i32, i32
  }
  func.func @transform_3(%arg0: i32) -> (i32, i32) {
    %c0_i32 = arith.constant 0 : i32
    %c0_i32_0 = arith.constant 0 : i32
    %c0_i32_1 = arith.constant 0 : i32
    return %c0_i32, %c0_i32_0 : i32, i32
  }
  func.func @transform_4(%arg0: i32) -> (i32, i32) {
    %c0_i32 = arith.constant 0 : i32
    %c0_i32_0 = arith.constant 0 : i32
    %c0_i32_1 = arith.constant 0 : i32
    return %c0_i32, %c0_i32_0 : i32, i32
  }
  func.func @transform_5(%arg0: i32) -> (i32, i32) {
    %c0_i32 = arith.constant 0 : i32
    %c0_i32_0 = arith.constant 0 : i32
    %c0_i32_1 = arith.constant 0 : i32
    return %c0_i32, %c0_i32_0 : i32, i32
  }
  func.func @transform_6(%arg0: i32) -> (i32, i32) {
    %c0_i32 = arith.constant 0 : i32
    %c0_i32_0 = arith.constant 0 : i32
    return %arg0, %c0_i32 : i32, i32
  }
  func.func @transform_7(%arg0: i32) -> (i32, i32) {
    %c0_i32 = arith.constant 0 : i32
    %c0_i32_0 = arith.constant 0 : i32
    return %arg0, %c0_i32 : i32, i32
  }
}

</mosaic_0001>

<llo_original>
// kernel: multi_head_forward.1
$region0: #{multi_head_forward.1}
  #allocation0 [shape = 'u32[]', space=smem, size = 0x4, offset = 0x4, fixed_abs, tag = 'smem constant byte address 0x4 - core index']
  #allocation1 [shape = 'u32[144,128]{1,0:T(1,128)}', space=vmem, size = 0x12000, scoped, tag = 'internal scratch']
  %s0 = inlined_call_operand.vmem [shape: f32[8,4], index: 0, kind: input, shape index: {}]
  %s1 = inlined_call_operand.hbm [shape: bf16[4,64], index: 1, kind: input, shape index: {}]
  %s2 = inlined_call_operand.hbm [shape: f32[1,64], index: 2, kind: input, shape index: {}]
  %s3 = inlined_call_operand.hbm [shape: bf16[64,512], index: 3, kind: input, shape index: {}]
  %s4 = inlined_call_operand.hbm [shape: f32[1,512], index: 4, kind: input, shape index: {}]
  %s5 = inlined_call_operand.hbm [shape: bf16[512,1536], index: 5, kind: input, shape index: {}]
  %s6 = inlined_call_operand.vmem [shape: s32[8,4], index: 6, kind: input, shape index: {}]
  %s7 = inlined_call_operand.vmem [shape: f32[8,1536], index: 7, kind: output, shape index: {}]
  %s8 = sld [smem:[#allocation0]]
  $region58: #{multi_head_forward.1} parent=0
    _
  %s10 = ssub.s32 1, %s8
  %s11 = scalar_select 0, %s10, %s8
  $region1: #{multi_head_forward.1} parent=0
    #allocation2 [shape = 'u8[1024]{0}', space=vmem, size = 0x400, scoped, tag = 'input window, operand 1, single buffered']
    #allocation3 [shape = 's32[1]{0}', space=sflag, size = 0x4, scoped, tag = 'scoped memory for multi_head_forward.1']
    #allocation4 [shape = 'u8[512]{0}', space=vmem, size = 0x400, scoped, tag = 'input window, operand 2, single buffered']
    #allocation5 [shape = 's32[1]{0}', space=sflag, size = 0x4, scoped, tag = 'scoped memory for multi_head_forward.1']
    #allocation6 [shape = 'u8[65536]{0}', space=vmem, size = 0x10000, scoped, tag = 'input window, operand 3, single buffered']
    #allocation7 [shape = 'u8[2048]{0}', space=vmem, size = 0x800, scoped, tag = 'input window, operand 4, single buffered']
    #allocation8 [shape = 's32[1]{0}', space=sflag, size = 0x4, scoped, tag = 'scoped memory for multi_head_forward.1']
    #allocation9 [shape = 'u8[1572864]{0}', space=vmem, size = 0x180000, scoped, tag = 'input window, operand 5, single buffered']
    %12 = vsyncpa [#allocation3], 0
    %13 = vsyncpa [#allocation5], 0
    %14 = vsyncpa [#allocation8], 0
    // Predicated region
    $region2: #{multi_head_forward.1} parent=1 // pred_check
      _
    $region3: #{multi_head_forward.1} parent=1 // pred_check_branch
      %16 = sbr.rel (0) target = $region5
    $region4: #{multi_head_forward.1} parent=1 // pred_region
      _
    $region5: #{multi_head_forward.1} parent=1 // pred_fallthru
      _
    // Predicated region
    $region6: #{multi_head_forward.1} parent=1 // pred_check
      _
    $region7: #{multi_head_forward.1} parent=1 // pred_check_branch
      %18 = sbr.rel (0) target = $region9
    $region8: #{multi_head_forward.1} parent=1 // pred_region
      %s20 = ssub.s32 32, 32
      %21 = vsyncadd [#allocation3], %s20
      %s23 = sshll.u32 [#allocation2], 4
      %s24 = int_to_ptr.vmem [resolvable:$true] %s23
      %26 = dma.hbm_to_vmem [thread:$0]  %s1, 32, %s24, [#allocation3]
    $region9: #{multi_head_forward.1} parent=1 // pred_fallthru
      _
    // Predicated region
    $region10: #{multi_head_forward.1} parent=1 // pred_check
      _
    $region11: #{multi_head_forward.1} parent=1 // pred_check_branch
      %28 = sbr.rel (0) target = $region13
    $region12: #{multi_head_forward.1} parent=1 // pred_region
      %s30 = ssub.s32 16, 16
      %31 = vsyncadd [#allocation5], %s30
      %s33 = sshll.u32 [#allocation4], 4
      %s34 = int_to_ptr.vmem [resolvable:$true] %s33
      %36 = dma.hbm_to_vmem [thread:$0]  %s2, 16, %s34, [#allocation5]
    $region13: #{multi_head_forward.1} parent=1 // pred_fallthru
      _
    // Predicated region
    $region14: #{multi_head_forward.1} parent=1 // pred_check
      _
    $region15: #{multi_head_forward.1} parent=1 // pred_check_branch
      %38 = sbr.rel (0) target = $region17
    $region16: #{multi_head_forward.1} parent=1 // pred_region
      %s40 = ssub.s32 2048, 2048
      %41 = vsyncadd [#allocation5], %s40
      %s42 = sshll.u32 [#allocation6], 4
      %s43 = int_to_ptr.vmem [resolvable:$true] %s42
      %48 = dma.hbm_to_vmem [thread:$0]  %s3, 2048, %s43, [#allocation5], 256, 256, 16
    $region17: #{multi_head_forward.1} parent=1 // pred_fallthru
      _
    // Predicated region
    $region18: #{multi_head_forward.1} parent=1 // pred_check
      _
    $region19: #{multi_head_forward.1} parent=1 // pred_check_branch
      %50 = sbr.rel (0) target = $region21
    $region20: #{multi_head_forward.1} parent=1 // pred_region
      %s52 = ssub.s32 64, 64
      %53 = vsyncadd [#allocation8], %s52
      %s55 = sshll.u32 [#allocation7], 4
      %s56 = int_to_ptr.vmem [resolvable:$true] %s55
      %58 = dma.hbm_to_vmem [thread:$0]  %s4, 64, %s56, [#allocation8]
    $region21: #{multi_head_forward.1} parent=1 // pred_fallthru
      _
    // Predicated region
    $region22: #{multi_head_forward.1} parent=1 // pred_check
      _
    $region23: #{multi_head_forward.1} parent=1 // pred_check_branch
      %60 = sbr.rel (0) target = $region25
    $region24: #{multi_head_forward.1} parent=1 // pred_region
      %s62 = ssub.s32 49152, 49152
      %63 = vsyncadd [#allocation8], %s62
      %s64 = sshll.u32 [#allocation9], 4
      %s65 = int_to_ptr.vmem [resolvable:$true] %s64
      %70 = dma.hbm_to_vmem [thread:$0]  %s5, 49152, %s65, [#allocation8], 768, 768, 48
    $region25: #{multi_head_forward.1} parent=1 // pred_fallthru
      _
    // Predicated region
    $region26: #{multi_head_forward.1} parent=1 // pred_check
      _
    $region27: #{multi_head_forward.1} parent=1 // pred_check_branch
      %72 = sbr.rel (0) target = $region29
    $region28: #{multi_head_forward.1} parent=1 // pred_region
      _
    $region29: #{multi_head_forward.1} parent=1 // pred_fallthru
      _
    // Predicated region
    $region30: #{multi_head_forward.1} parent=1 // pred_check
      _
    $region31: #{multi_head_forward.1} parent=1 // pred_check_branch
      %74 = sbr.rel (0) target = $region33
    $region32: #{multi_head_forward.1} parent=1 // pred_region
      %75 = dma.done [#allocation3], 32
    $region33: #{multi_head_forward.1} parent=1 // pred_fallthru
      _
    // Predicated region
    $region34: #{multi_head_forward.1} parent=1 // pred_check
      _
    $region35: #{multi_head_forward.1} parent=1 // pred_check_branch
      %77 = sbr.rel (0) target = $region37
    $region36: #{multi_head_forward.1} parent=1 // pred_region
      %78 = dma.done [#allocation5], 16
    $region37: #{multi_head_forward.1} parent=1 // pred_fallthru
      _
    // Predicated region
    $region38: #{multi_head_forward.1} parent=1 // pred_check
      _
    $region39: #{multi_head_forward.1} parent=1 // pred_check_branch
      %80 = sbr.rel (0) target = $region41
    $region40: #{multi_head_forward.1} parent=1 // pred_region
      %81 = dma.done [#allocation5], 2048
    $region41: #{multi_head_forward.1} parent=1 // pred_fallthru
      _
    // Predicated region
    $region42: #{multi_head_forward.1} parent=1 // pred_check
      _
    $region43: #{multi_head_forward.1} parent=1 // pred_check_branch
      %83 = sbr.rel (0) target = $region45
    $region44: #{multi_head_forward.1} parent=1 // pred_region
      %84 = dma.done [#allocation8], 64
    $region45: #{multi_head_forward.1} parent=1 // pred_fallthru
      _
    // Predicated region
    $region46: #{multi_head_forward.1} parent=1 // pred_check
      _
    $region47: #{multi_head_forward.1} parent=1 // pred_check_branch
      %86 = sbr.rel (0) target = $region49
    $region48: #{multi_head_forward.1} parent=1 // pred_region
      %87 = dma.done [#allocation8], 49152
    $region49: #{multi_head_forward.1} parent=1 // pred_fallthru
      _
    %v89 = vld [vmem:[%s0] sm:$0xff]
    %v90 = vpack.c.bf16 %v89, %v89
    %v91 = vld [vmem:[#allocation2] sm:$0x3]
    %v92 = vld [vmem:[#allocation4] sm:$0x1]
    %v94 = vlaneseq
    %v95 = vshrl.u32 %v94, 7
    %v96 = vsub.s32 0, %v95
    %v97 = vrot.slane %v92, %v96
    %vm99 = vcmask 31744
    %v101 = vsel %vm99, %v90, 0
    %vm103 = vcmask 1041408
    %v105 = vsel %vm103, %v91, 0
    %107 = vmatprep.subr.bf16.mxu0 0
    %108 = vmatpush1.bf16.msra.mxu0 %v105
    %109 = vmatprep.subr.bf16.mxu0 0
    %110 = vmatpush1.bf16.msra.mxu0 0
    %111 = vmatprep.subr.bf16.mxu0 0
    %112 = vmatpush1.bf16.msra.mxu0 0
    %113 = vmatprep.subr.bf16.mxu0 0
    %114 = vmatpush1.bf16.msra.mxu0 0
    %115 = vmatprep.subr.bf16.mxu0 0
    %116 = vmatpush1.bf16.msra.mxu0 0
    %117 = vmatprep.subr.bf16.mxu0 0
    %118 = vmatpush1.bf16.msra.mxu0 0
    %119 = vmatprep.subr.bf16.mxu0 0
    %120 = vmatpush1.bf16.msra.mxu0 0
    %121 = vmatprep.subr.bf16.mxu0 0
    %122 = vmatpush1.bf16.msra.mxu0 0
    %123 = vmatprep.subr.bf16.mxu0 0
    %124 = vmatpush1.bf16.msra.mxu0 0
    %125 = vmatprep.subr.bf16.mxu0 0
    %126 = vmatpush1.bf16.msra.mxu0 0
    %127 = vmatprep.subr.bf16.mxu0 0
    %128 = vmatpush1.bf16.msra.mxu0 0
    %129 = vmatprep.subr.bf16.mxu0 0
    %130 = vmatpush1.bf16.msra.mxu0 0
    %131 = vmatprep.subr.bf16.mxu0 0
    %132 = vmatpush1.bf16.msra.mxu0 0
    %133 = vmatprep.subr.bf16.mxu0 0
    %134 = vmatpush1.bf16.msra.mxu0 0
    %135 = vmatprep.subr.bf16.mxu0 0
    %136 = vmatpush1.bf16.msra.mxu0 0
    %137 = vmatprep.subr.bf16.mxu0 0
    %138 = vmatpush1.bf16.msra.mxu0 0
    %139 = vmatprep.mubr.bf16.mxu0 0
    %140 = vmatmul.mubr.bf16.gmra.mrb[0].mxu0 %v101
    %v141 = vpop.f32.mrb[0].mxu0
    %v142 = vadd.f32 %v97, %v141
    %v143 = vpop.f32.mrb[0].mxu0
    %v144 = vpop.f32.mrb[0].mxu0
    %v145 = vpop.f32.mrb[0].mxu0
    %146 = vdwg.mxu0
    %v147 = vpack.c.bf16 %v142, %v142
    %v148 = vld [vmem:[#allocation6] sm:$0xff]
    %v149 = vld [vmem:[#allocation6 + $0x8] sm:$0xff]
    %v150 = vld [vmem:[#allocation6 + $0x10] sm:$0xff]
    %v151 = vld [vmem:[#allocation6 + $0x18] sm:$0xff]
    %v152 = vld [vmem:[#allocation6 + $0x20] sm:$0xff]
    %v153 = vld [vmem:[#allocation6 + $0x28] sm:$0xff]
    %v154 = vld [vmem:[#allocation6 + $0x30] sm:$0xff]
    %v155 = vld [vmem:[#allocation6 + $0x38] sm:$0xff]
    %v156 = vld [vmem:[#allocation6 + $0x40] sm:$0xff]
    %v157 = vld [vmem:[#allocation6 + $0x48] sm:$0xff]
    %v158 = vld [vmem:[#allocation6 + $0x50] sm:$0xff]
    %v159 = vld [vmem:[#allocation6 + $0x58] sm:$0xff]
    %v160 = vld [vmem:[#allocation6 + $0x60] sm:$0xff]
    %v161 = vld [vmem:[#allocation6 + $0x68] sm:$0xff]
    %v162 = vld [vmem:[#allocation6 + $0x70] sm:$0xff]
    %v163 = vld [vmem:[#allocation6 + $0x78] sm:$0xff]
    %v164 = vld [vmem:[#allocation7] sm:$0xf]
    %v166 = vlaneseq
    %v167 = vshrl.u32 %v166, 7
    %v168 = vsub.s32 0, %v167
    %v169 = vrot.slane %v164, %v168
    %v170 = vlaneseq
    %v171 = vshrl.u32 %v170, 7
    %v172 = vsub.s32 1, %v171
    %v173 = vrot.slane %v164, %v172
    %v174 = vlaneseq
    %v175 = vshrl.u32 %v174, 7
    %v176 = vsub.s32 2, %v175
    %v177 = vrot.slane %v164, %v176
    %v178 = vlaneseq
    %v179 = vshrl.u32 %v178, 7
    %v180 = vsub.s32 3, %v179
    %v181 = vrot.slane %v164, %v180
    %v202 = vunpack.c.l.b16 %v148
    %v203 = vunpack.c.h.b16 %v148
    %v204 = vunpack.c.l.b16 %v149
    %v205 = vunpack.c.h.b16 %v149
    %v206 = vunpack.c.l.b16 %v150
    %v207 = vunpack.c.h.b16 %v150
    %v208 = vunpack.c.l.b16 %v151
    %v209 = vunpack.c.h.b16 %v151
    %v210 = vunpack.c.l.b16 %v152
    %v211 = vunpack.c.h.b16 %v152
    %v212 = vunpack.c.l.b16 %v153
    %v213 = vunpack.c.h.b16 %v153
    %v214 = vunpack.c.l.b16 %v154
    %v215 = vunpack.c.h.b16 %v154
    %v216 = vunpack.c.l.b16 %v155
    %v217 = vunpack.c.h.b16 %v155
    %v218 = vunpack.c.l.b16 %v156
    %v219 = vunpack.c.h.b16 %v156
    %v220 = vunpack.c.l.b16 %v157
    %v221 = vunpack.c.h.b16 %v157
    %v222 = vunpack.c.l.b16 %v158
    %v223 = vunpack.c.h.b16 %v158
    %v224 = vunpack.c.l.b16 %v159
    %v225 = vunpack.c.h.b16 %v159
    %v226 = vunpack.c.l.b16 %v160
    %v227 = vunpack.c.h.b16 %v160
    %v228 = vunpack.c.l.b16 %v161
    %v229 = vunpack.c.h.b16 %v161
    %v230 = vunpack.c.l.b16 %v162
    %v231 = vunpack.c.h.b16 %v162
    %v232 = vunpack.c.l.b16 %v163
    %v233 = vunpack.c.h.b16 %v163
    %v234 = vpack.c.b16 %v206, %v202
    %v235 = vpack.c.b16 %v207, %v203
    %v236 = vpack.c.b16 %v208, %v204
    %v237 = vpack.c.b16 %v209, %v205
    %v238 = vpack.c.b16 %v214, %v210
    %v239 = vpack.c.b16 %v215, %v211
    %v240 = vpack.c.b16 %v216, %v212
    %v241 = vpack.c.b16 %v217, %v213
    %v242 = vpack.c.b16 %v222, %v218
    %v243 = vpack.c.b16 %v223, %v219
    %v244 = vpack.c.b16 %v224, %v220
    %v245 = vpack.c.b16 %v225, %v221
    %v246 = vpack.c.b16 %v230, %v226
    %v247 = vpack.c.b16 %v231, %v227
    %v248 = vpack.c.b16 %v232, %v228
    %v249 = vpack.c.b16 %v233, %v229
    %vm266 = vcmask 523264
    %v268 = vsel %vm266, %v147, 0
    %270 = vmatprep.subr.bf16.mxu0 %v235
    %271 = vmatpush1.bf16.msra.mxu0 %v234
    %272 = vmatprep.subr.bf16.mxu0 %v239
    %273 = vmatpush1.bf16.msra.mxu0 %v238
    %274 = vmatprep.subr.bf16.mxu0 %v243
    %275 = vmatpush1.bf16.msra.mxu0 %v242
    %276 = vmatprep.subr.bf16.mxu0 %v247
    %277 = vmatpush1.bf16.msra.mxu0 %v246
    %278 = vmatprep.subr.bf16.mxu0 0
    %279 = vmatpush1.bf16.msra.mxu0 0
    %280 = vmatprep.subr.bf16.mxu0 0
    %281 = vmatpush1.bf16.msra.mxu0 0
    %282 = vmatprep.subr.bf16.mxu0 0
    %283 = vmatpush1.bf16.msra.mxu0 0
    %284 = vmatprep.subr.bf16.mxu0 0
    %285 = vmatpush1.bf16.msra.mxu0 0
    %286 = vmatprep.subr.bf16.mxu0 0
    %287 = vmatpush1.bf16.msra.mxu0 0
    %288 = vmatprep.subr.bf16.mxu0 0
    %289 = vmatpush1.bf16.msra.mxu0 0
    %290 = vmatprep.subr.bf16.mxu0 0
    %291 = vmatpush1.bf16.msra.mxu0 0
    %292 = vmatprep.subr.bf16.mxu0 0
    %293 = vmatpush1.bf16.msra.mxu0 0
    %294 = vmatprep.subr.bf16.mxu0 0
    %295 = vmatpush1.bf16.msra.mxu0 0
    %296 = vmatprep.subr.bf16.mxu0 0
    %297 = vmatpush1.bf16.msra.mxu0 0
    %298 = vmatprep.subr.bf16.mxu0 0
    %299 = vmatpush1.bf16.msra.mxu0 0
    %300 = vmatprep.subr.bf16.mxu0 0
    %301 = vmatpush1.bf16.msra.mxu0 0
    %302 = vmatprep.mubr.bf16.mxu0 0
    %303 = vmatmul.mubr.bf16.gmra.mrb[0].mxu0 %v268
    %v304 = vpop.f32.mrb[0].mxu0
    %v305 = vadd.f32 %v169, %v304
    %v306 = vpop.f32.mrb[0].mxu0
    %v307 = vadd.f32 %v173, %v306
    %v308 = vpop.f32.mrb[0].mxu0
    %v309 = vpop.f32.mrb[0].mxu0
    %310 = vdwg.mxu0
    %311 = vmatprep.subr.bf16.mxu0 %v237
    %312 = vmatpush1.bf16.msra.mxu0 %v236
    %313 = vmatprep.subr.bf16.mxu0 %v241
    %314 = vmatpush1.bf16.msra.mxu0 %v240
    %315 = vmatprep.subr.bf16.mxu0 %v245
    %316 = vmatpush1.bf16.msra.mxu0 %v244
    %317 = vmatprep.subr.bf16.mxu0 %v249
    %318 = vmatpush1.bf16.msra.mxu0 %v248
    %319 = vmatprep.subr.bf16.mxu0 0
    %320 = vmatpush1.bf16.msra.mxu0 0
    %321 = vmatprep.subr.bf16.mxu0 0
    %322 = vmatpush1.bf16.msra.mxu0 0
    %323 = vmatprep.subr.bf16.mxu0 0
    %324 = vmatpush1.bf16.msra.mxu0 0
    %325 = vmatprep.subr.bf16.mxu0 0
    %326 = vmatpush1.bf16.msra.mxu0 0
    %327 = vmatprep.subr.bf16.mxu0 0
    %328 = vmatpush1.bf16.msra.mxu0 0
    %329 = vmatprep.subr.bf16.mxu0 0
    %330 = vmatpush1.bf16.msra.mxu0 0
    %331 = vmatprep.subr.bf16.mxu0 0
    %332 = vmatpush1.bf16.msra.mxu0 0
    %333 = vmatprep.subr.bf16.mxu0 0
    %334 = vmatpush1.bf16.msra.mxu0 0
    %335 = vmatprep.subr.bf16.mxu0 0
    %336 = vmatpush1.bf16.msra.mxu0 0
    %337 = vmatprep.subr.bf16.mxu0 0
    %338 = vmatpush1.bf16.msra.mxu0 0
    %339 = vmatprep.subr.bf16.mxu0 0
    %340 = vmatpush1.bf16.msra.mxu0 0
    %341 = vmatprep.subr.bf16.mxu0 0
    %342 = vmatpush1.bf16.msra.mxu0 0
    %343 = vmatprep.mubr.bf16.mxu0 0
    %344 = vmatmul.mubr.bf16.gmra.mrb[0].mxu0 %v268
    %v345 = vpop.f32.mrb[0].mxu0
    %v346 = vadd.f32 %v177, %v345
    %v347 = vpop.f32.mrb[0].mxu0
    %v348 = vadd.f32 %v181, %v347
    %v349 = vpop.f32.mrb[0].mxu0
    %v350 = vpop.f32.mrb[0].mxu0
    %351 = vdwg.mxu0
    %v352 = vmul.f32 %v305, %v305
    %v353 = vmul.f32 %v307, %v307
    %v354 = vmul.f32 %v346, %v346
    %v355 = vmul.f32 %v348, %v348
    %v356 = vadd.f32 %v352, %v353
    %v357 = vadd.f32 %v356, %v354
    %v358 = vadd.f32 %v357, %v355
    %359 = vadd.xlane.f32.xlu0 %v358
    %v360 = vpop.xlane.xlu0 %359
    %v361 = vadd.f32 %v360, 1e-12
    %v362 = vrsqrt.pop %v361
    %v363 = vmul.f32 %v305, %v362
    %v364 = vmul.f32 %v307, %v362
    %v365 = vmul.f32 %v346, %v362
    %v366 = vmul.f32 %v348, %v362
    %v367 = vpack.c.bf16 %v363, %v363
    %v368 = vpack.c.bf16 %v364, %v364
    %v369 = vpack.c.bf16 %v365, %v365
    %v370 = vpack.c.bf16 %v366, %v366
    %v371 = vld [vmem:[#allocation9] sm:$0xff]
    %v372 = vld [vmem:[#allocation9 + $0x8] sm:$0xff]
    %v373 = vld [vmem:[#allocation9 + $0x10] sm:$0xff]
    %v374 = vld [vmem:[#allocation9 + $0x18] sm:$0xff]
    %v375 = vld [vmem:[#allocation9 + $0x20] sm:$0xff]
    %v376 = vld [vmem:[#allocation9 + $0x28] sm:$0xff]
    %v377 = vld [vmem:[#allocation9 + $0x30] sm:$0xff]
    %v378 = vld [vmem:[#allocation9 + $0x38] sm:$0xff]
    %v379 = vld [vmem:[#allocation9 + $0x40] sm:$0xff]
    %v380 = vld [vmem:[#allocation9 + $0x48] sm:$0xff]
    %v381 = vld [vmem:[#allocation9 + $0x50] sm:$0xff]
    %v382 = vld [vmem:[#allocation9 + $0x58] sm:$0xff]
    %v383 = vld [vmem:[#allocation9 + $0x60] sm:$0xff]
    %v384 = vld [vmem:[#allocation9 + $0x68] sm:$0xff]
    %v385 = vld [vmem:[#allocation9 + $0x70] sm:$0xff]
    %v386 = vld [vmem:[#allocation9 + $0x78] sm:$0xff]
    %v387 = vld [vmem:[#allocation9 + $0x80] sm:$0xff]
    %v388 = vld [vmem:[#allocation9 + $0x88] sm:$0xff]
    %v389 = vld [vmem:[#allocation9 + $0x90] sm:$0xff]
    %v390 = vld [vmem:[#allocation9 + $0x98] sm:$0xff]
    %v391 = vld [vmem:[#allocation9 + $0xa0] sm:$0xff]
    %v392 = vld [vmem:[#allocation9 + $0xa8] sm:$0xff]
    %v393 = vld [vmem:[#allocation9 + $0xb0] sm:$0xff]
    %v394 = vld [vmem:[#allocation9 + $0xb8] sm:$0xff]
    %v395 = vld [vmem:[#allocation9 + $0xc0] sm:$0xff]
    %v396 = vld [vmem:[#allocation9 + $0xc8] sm:$0xff]
    %v397 = vld [vmem:[#allocation9 + $0xd0] sm:$0xff]
    %v398 = vld [vmem:[#allocation9 + $0xd8] sm:$0xff]
    %v399 = vld [vmem:[#allocation9 + $0xe0] sm:$0xff]
    %v400 = vld [vmem:[#allocation9 + $0xe8] sm:$0xff]
    %v401 = vld [vmem:[#allocation9 + $0xf0] sm:$0xff]
    %v402 = vld [vmem:[#allocation9 + $0xf8] sm:$0xff]
    %v403 = vld [vmem:[#allocation9 + $0x100] sm:$0xff]
    %v404 = vld [vmem:[#allocation9 + $0x108] sm:$0xff]
    %v405 = vld [vmem:[#allocation9 + $0x110] sm:$0xff]
    %v406 = vld [vmem:[#allocation9 + $0x118] sm:$0xff]
    %v407 = vld [vmem:[#allocation9 + $0x120] sm:$0xff]
    %v408 = vld [vmem:[#allocation9 + $0x128] sm:$0xff]
    %v409 = vld [vmem:[#allocation9 + $0x130] sm:$0xff]
    %v410 = vld [vmem:[#allocation9 + $0x138] sm:$0xff]
    %v411 = vld [vmem:[#allocation9 + $0x140] sm:$0xff]
    %v412 = vld [vmem:[#allocation9 + $0x148] sm:$0xff]
    %v413 = vld [vmem:[#allocation9 + $0x150] sm:$0xff]
    %v414 = vld [vmem:[#allocation9 + $0x158] sm:$0xff]
    %v415 = vld [vmem:[#allocation9 + $0x160] sm:$0xff]
    %v416 = vld [vmem:[#allocation9 + $0x168] sm:$0xff]
    %v417 = vld [vmem:[#allocation9 + $0x170] sm:$0xff]
    %v418 = vld [vmem:[#allocation9 + $0x178] sm:$0xff]
    %v419 = vld [vmem:[#allocation9 + $0x180] sm:$0xff]
    %v420 = vld [vmem:[#allocation9 + $0x188] sm:$0xff]
    %v421 = vld [vmem:[#allocation9 + $0x190] sm:$0xff]
    %v422 = vld [vmem:[#allocation9 + $0x198] sm:$0xff]
    %v423 = vld [vmem:[#allocation9 + $0x1a0] sm:$0xff]
    %v424 = vld [vmem:[#allocation9 + $0x1a8] sm:$0xff]
    %v425 = vld [vmem:[#allocation9 + $0x1b0] sm:$0xff]
    %v426 = vld [vmem:[#allocation9 + $0x1b8] sm:$0xff]
    %v427 = vld [vmem:[#allocation9 + $0x1c0] sm:$0xff]
    %v428 = vld [vmem:[#allocation9 + $0x1c8] sm:$0xff]
    %v429 = vld [vmem:[#allocation9 + $0x1d0] sm:$0xff]
    %v430 = vld [vmem:[#allocation9 + $0x1d8] sm:$0xff]
    %v431 = vld [vmem:[#allocation9 + $0x1e0] sm:$0xff]
    %v432 = vld [vmem:[#allocation9 + $0x1e8] sm:$0xff]
    %v433 = vld [vmem:[#allocation9 + $0x1f0] sm:$0xff]
    %v434 = vld [vmem:[#allocation9 + $0x1f8] sm:$0xff]
    %v435 = vld [vmem:[#allocation9 + $0x200] sm:$0xff]
    %v436 = vld [vmem:[#allocation9 + $0x208] sm:$0xff]
    %v437 = vld [vmem:[#allocation9 + $0x210] sm:$0xff]
    %v438 = vld [vmem:[#allocation9 + $0x218] sm:$0xff]
    %v439 = vld [vmem:[#allocation9 + $0x220] sm:$0xff]
    %v440 = vld [vmem:[#allocation9 + $0x228] sm:$0xff]
    %v441 = vld [vmem:[#allocation9 + $0x230] sm:$0xff]
    %v442 = vld [vmem:[#allocation9 + $0x238] sm:$0xff]
    %v443 = vld [vmem:[#allocation9 + $0x240] sm:$0xff]
    %v444 = vld [vmem:[#allocation9 + $0x248] sm:$0xff]
    %v445 = vld [vmem:[#allocation9 + $0x250] sm:$0xff]
    %v446 = vld [vmem:[#allocation9 + $0x258] sm:$0xff]
    %v447 = vld [vmem:[#allocation9 + $0x260] sm:$0xff]
    %v448 = vld [vmem:[#allocation9 + $0x268] sm:$0xff]
    %v449 = vld [vmem:[#allocation9 + $0x270] sm:$0xff]
    %v450 = vld [vmem:[#allocation9 + $0x278] sm:$0xff]
    %v451 = vld [vmem:[#allocation9 + $0x280] sm:$0xff]
    %v452 = vld [vmem:[#allocation9 + $0x288] sm:$0xff]
    %v453 = vld [vmem:[#allocation9 + $0x290] sm:$0xff]
    %v454 = vld [vmem:[#allocation9 + $0x298] sm:$0xff]
    %v455 = vld [vmem:[#allocation9 + $0x2a0] sm:$0xff]
    %v456 = vld [vmem:[#allocation9 + $0x2a8] sm:$0xff]
    %v457 = vld [vmem:[#allocation9 + $0x2b0] sm:$0xff]
    %v458 = vld [vmem:[#allocation9 + $0x2b8] sm:$0xff]
    %v459 = vld [vmem:[#allocation9 + $0x2c0] sm:$0xff]
    %v460 = vld [vmem:[#allocation9 + $0x2c8] sm:$0xff]
    %v461 = vld [vmem:[#allocation9 + $0x2d0] sm:$0xff]
    %v462 = vld [vmem:[#allocation9 + $0x2d8] sm:$0xff]
    %v463 = vld [vmem:[#allocation9 + $0x2e0] sm:$0xff]
    %v464 = vld [vmem:[#allocation9 + $0x2e8] sm:$0xff]
    %v465 = vld [vmem:[#allocation9 + $0x2f0] sm:$0xff]
    %v466 = vld [vmem:[#allocation9 + $0x2f8] sm:$0xff]
    %v467 = vld [vmem:[#allocation9 + $0x300] sm:$0xff]
    %v468 = vld [vmem:[#allocation9 + $0x308] sm:$0xff]
    %v469 = vld [vmem:[#allocation9 + $0x310] sm:$0xff]
    %v470 = vld [vmem:[#allocation9 + $0x318] sm:$0xff]
    %v471 = vld [vmem:[#allocation9 + $0x320] sm:$0xff]
    %v472 = vld [vmem:[#allocation9 + $0x328] sm:$0xff]
    %v473 = vld [vmem:[#allocation9 + $0x330] sm:$0xff]
    %v474 = vld [vmem:[#allocation9 + $0x338] sm:$0xff]
    %v475 = vld [vmem:[#allocation9 + $0x340] sm:$0xff]
    %v476 = vld [vmem:[#allocation9 + $0x348] sm:$0xff]
    %v477 = vld [vmem:[#allocation9 + $0x350] sm:$0xff]
    %v478 = vld [vmem:[#allocation9 + $0x358] sm:$0xff]
    %v479 = vld [vmem:[#allocation9 + $0x360] sm:$0xff]
    %v480 = vld [vmem:[#allocation9 + $0x368] sm:$0xff]
    %v481 = vld [vmem:[#allocation9 + $0x370] sm:$0xff]
    %v482 = vld [vmem:[#allocation9 + $0x378] sm:$0xff]
    %v483 = vld [vmem:[#allocation9 + $0x380] sm:$0xff]
    %v484 = vld [vmem:[#allocation9 + $0x388] sm:$0xff]
    %v485 = vld [vmem:[#allocation9 + $0x390] sm:$0xff]
    %v486 = vld [vmem:[#allocation9 + $0x398] sm:$0xff]
    %v487 = vld [vmem:[#allocation9 + $0x3a0] sm:$0xff]
    %v488 = vld [vmem:[#allocation9 + $0x3a8] sm:$0xff]
    %v489 = vld [vmem:[#allocation9 + $0x3b0] sm:$0xff]
    %v490 = vld [vmem:[#allocation9 + $0x3b8] sm:$0xff]
    %v491 = vld [vmem:[#allocation9 + $0x3c0] sm:$0xff]
    %v492 = vld [vmem:[#allocation9 + $0x3c8] sm:$0xff]
    %v493 = vld [vmem:[#allocation9 + $0x3d0] sm:$0xff]
    %v494 = vld [vmem:[#allocation9 + $0x3d8] sm:$0xff]
    %v495 = vld [vmem:[#allocation9 + $0x3e0] sm:$0xff]
    %v496 = vld [vmem:[#allocation9 + $0x3e8] sm:$0xff]
    %v497 = vld [vmem:[#allocation9 + $0x3f0] sm:$0xff]
    %v498 = vld [vmem:[#allocation9 + $0x3f8] sm:$0xff]
    %v499 = vld [vmem:[#allocation9 + $0x400] sm:$0xff]
    %v500 = vld [vmem:[#allocation9 + $0x408] sm:$0xff]
    %v501 = vld [vmem:[#allocation9 + $0x410] sm:$0xff]
    %v502 = vld [vmem:[#allocation9 + $0x418] sm:$0xff]
    %v503 = vld [vmem:[#allocation9 + $0x420] sm:$0xff]
    %v504 = vld [vmem:[#allocation9 + $0x428] sm:$0xff]
    %v505 = vld [vmem:[#allocation9 + $0x430] sm:$0xff]
    %v506 = vld [vmem:[#allocation9 + $0x438] sm:$0xff]
    %v507 = vld [vmem:[#allocation9 + $0x440] sm:$0xff]
    %v508 = vld [vmem:[#allocation9 + $0x448] sm:$0xff]
    %v509 = vld [vmem:[#allocation9 + $0x450] sm:$0xff]
    %v510 = vld [vmem:[#allocation9 + $0x458] sm:$0xff]
    %v511 = vld [vmem:[#allocation9 + $0x460] sm:$0xff]
    %v512 = vld [vmem:[#allocation9 + $0x468] sm:$0xff]
    %v513 = vld [vmem:[#allocation9 + $0x470] sm:$0xff]
    %v514 = vld [vmem:[#allocation9 + $0x478] sm:$0xff]
    %v515 = vld [vmem:[#allocation9 + $0x480] sm:$0xff]
    %v516 = vld [vmem:[#allocation9 + $0x488] sm:$0xff]
    %v517 = vld [vmem:[#allocation9 + $0x490] sm:$0xff]
    %v518 = vld [vmem:[#allocation9 + $0x498] sm:$0xff]
    %v519 = vld [vmem:[#allocation9 + $0x4a0] sm:$0xff]
    %v520 = vld [vmem:[#allocation9 + $0x4a8] sm:$0xff]
    %v521 = vld [vmem:[#allocation9 + $0x4b0] sm:$0xff]
    %v522 = vld [vmem:[#allocation9 + $0x4b8] sm:$0xff]
    %v523 = vld [vmem:[#allocation9 + $0x4c0] sm:$0xff]
    %v524 = vld [vmem:[#allocation9 + $0x4c8] sm:$0xff]
    %v525 = vld [vmem:[#allocation9 + $0x4d0] sm:$0xff]
    %v526 = vld [vmem:[#allocation9 + $0x4d8] sm:$0xff]
    %v527 = vld [vmem:[#allocation9 + $0x4e0] sm:$0xff]
    %v528 = vld [vmem:[#allocation9 + $0x4e8] sm:$0xff]
    %v529 = vld [vmem:[#allocation9 + $0x4f0] sm:$0xff]
    %v530 = vld [vmem:[#allocation9 + $0x4f8] sm:$0xff]
    %v531 = vld [vmem:[#allocation9 + $0x500] sm:$0xff]
    %v532 = vld [vmem:[#allocation9 + $0x508] sm:$0xff]
    %v533 = vld [vmem:[#allocation9 + $0x510] sm:$0xff]
    %v534 = vld [vmem:[#allocation9 + $0x518] sm:$0xff]
    %v535 = vld [vmem:[#allocation9 + $0x520] sm:$0xff]
    %v536 = vld [vmem:[#allocation9 + $0x528] sm:$0xff]
    %v537 = vld [vmem:[#allocation9 + $0x530] sm:$0xff]
    %v538 = vld [vmem:[#allocation9 + $0x538] sm:$0xff]
    %v539 = vld [vmem:[#allocation9 + $0x540] sm:$0xff]
    %v540 = vld [vmem:[#allocation9 + $0x548] sm:$0xff]
    %v541 = vld [vmem:[#allocation9 + $0x550] sm:$0xff]
    %v542 = vld [vmem:[#allocation9 + $0x558] sm:$0xff]
    %v543 = vld [vmem:[#allocation9 + $0x560] sm:$0xff]
    %v544 = vld [vmem:[#allocation9 + $0x568] sm:$0xff]
    %v545 = vld [vmem:[#allocation9 + $0x570] sm:$0xff]
    %v546 = vld [vmem:[#allocation9 + $0x578] sm:$0xff]
    %v547 = vld [vmem:[#allocation9 + $0x580] sm:$0xff]
    %v548 = vld [vmem:[#allocation9 + $0x588] sm:$0xff]
    %v549 = vld [vmem:[#allocation9 + $0x590] sm:$0xff]
    %v550 = vld [vmem:[#allocation9 + $0x598] sm:$0xff]
    %v551 = vld [vmem:[#allocation9 + $0x5a0] sm:$0xff]
    %v552 = vld [vmem:[#allocation9 + $0x5a8] sm:$0xff]
    %v553 = vld [vmem:[#allocation9 + $0x5b0] sm:$0xff]
    %v554 = vld [vmem:[#allocation9 + $0x5b8] sm:$0xff]
    %v555 = vld [vmem:[#allocation9 + $0x5c0] sm:$0xff]
    %v556 = vld [vmem:[#allocation9 + $0x5c8] sm:$0xff]
    %v557 = vld [vmem:[#allocation9 + $0x5d0] sm:$0xff]
    %v558 = vld [vmem:[#allocation9 + $0x5d8] sm:$0xff]
    %v559 = vld [vmem:[#allocation9 + $0x5e0] sm:$0xff]
    %v560 = vld [vmem:[#allocation9 + $0x5e8] sm:$0xff]
    %v561 = vld [vmem:[#allocation9 + $0x5f0] sm:$0xff]
    %v562 = vld [vmem:[#allocation9 + $0x5f8] sm:$0xff]
    %v563 = vld [vmem:[#allocation9 + $0x600] sm:$0xff]
    %v564 = vld [vmem:[#allocation9 + $0x608] sm:$0xff]
    %v565 = vld [vmem:[#allocation9 + $0x610] sm:$0xff]
    %v566 = vld [vmem:[#allocation9 + $0x618] sm:$0xff]
    %v567 = vld [vmem:[#allocation9 + $0x620] sm:$0xff]
    %v568 = vld [vmem:[#allocation9 + $0x628] sm:$0xff]
    %v569 = vld [vmem:[#allocation9 + $0x630] sm:$0xff]
    %v570 = vld [vmem:[#allocation9 + $0x638] sm:$0xff]
    %v571 = vld [vmem:[#allocation9 + $0x640] sm:$0xff]
    %v572 = vld [vmem:[#allocation9 + $0x648] sm:$0xff]
    %v573 = vld [vmem:[#allocation9 + $0x650] sm:$0xff]
    %v574 = vld [vmem:[#allocation9 + $0x658] sm:$0xff]
    %v575 = vld [vmem:[#allocation9 + $0x660] sm:$0xff]
    %v576 = vld [vmem:[#allocation9 + $0x668] sm:$0xff]
    %v577 = vld [vmem:[#allocation9 + $0x670] sm:$0xff]
    %v578 = vld [vmem:[#allocation9 + $0x678] sm:$0xff]
    %v579 = vld [vmem:[#allocation9 + $0x680] sm:$0xff]
    %v580 = vld [vmem:[#allocation9 + $0x688] sm:$0xff]
    %v581 = vld [vmem:[#allocation9 + $0x690] sm:$0xff]
    %v582 = vld [vmem:[#allocation9 + $0x698] sm:$0xff]
    %v583 = vld [vmem:[#allocation9 + $0x6a0] sm:$0xff]
    %v584 = vld [vmem:[#allocation9 + $0x6a8] sm:$0xff]
    %v585 = vld [vmem:[#allocation9 + $0x6b0] sm:$0xff]
    %v586 = vld [vmem:[#allocation9 + $0x6b8] sm:$0xff]
    %v587 = vld [vmem:[#allocation9 + $0x6c0] sm:$0xff]
    %v588 = vld [vmem:[#allocation9 + $0x6c8] sm:$0xff]
    %v589 = vld [vmem:[#allocation9 + $0x6d0] sm:$0xff]
    %v590 = vld [vmem:[#allocation9 + $0x6d8] sm:$0xff]
    %v591 = vld [vmem:[#allocation9 + $0x6e0] sm:$0xff]
    %v592 = vld [vmem:[#allocation9 + $0x6e8] sm:$0xff]
    %v593 = vld [vmem:[#allocation9 + $0x6f0] sm:$0xff]
    %v594 = vld [vmem:[#allocation9 + $0x6f8] sm:$0xff]
    %v595 = vld [vmem:[#allocation9 + $0x700] sm:$0xff]
    %v596 = vld [vmem:[#allocation9 + $0x708] sm:$0xff]
    %v597 = vld [vmem:[#allocation9 + $0x710] sm:$0xff]
    %v598 = vld [vmem:[#allocation9 + $0x718] sm:$0xff]
    %v599 = vld [vmem:[#allocation9 + $0x720] sm:$0xff]
    %v600 = vld [vmem:[#allocation9 + $0x728] sm:$0xff]
    %v601 = vld [vmem:[#allocation9 + $0x730] sm:$0xff]
    %v602 = vld [vmem:[#allocation9 + $0x738] sm:$0xff]
    %v603 = vld [vmem:[#allocation9 + $0x740] sm:$0xff]
    %v604 = vld [vmem:[#allocation9 + $0x748] sm:$0xff]
    %v605 = vld [vmem:[#allocation9 + $0x750] sm:$0xff]
    %v606 = vld [vmem:[#allocation9 + $0x758] sm:$0xff]
    %v607 = vld [vmem:[#allocation9 + $0x760] sm:$0xff]
    %v608 = vld [vmem:[#allocation9 + $0x768] sm:$0xff]
    %v609 = vld [vmem:[#allocation9 + $0x770] sm:$0xff]
    %v610 = vld [vmem:[#allocation9 + $0x778] sm:$0xff]
    %v611 = vld [vmem:[#allocation9 + $0x780] sm:$0xff]
    %v612 = vld [vmem:[#allocation9 + $0x788] sm:$0xff]
    %v613 = vld [vmem:[#allocation9 + $0x790] sm:$0xff]
    %v614 = vld [vmem:[#allocation9 + $0x798] sm:$0xff]
    %v615 = vld [vmem:[#allocation9 + $0x7a0] sm:$0xff]
    %v616 = vld [vmem:[#allocation9 + $0x7a8] sm:$0xff]
    %v617 = vld [vmem:[#allocation9 + $0x7b0] sm:$0xff]
    %v618 = vld [vmem:[#allocation9 + $0x7b8] sm:$0xff]
    %v619 = vld [vmem:[#allocation9 + $0x7c0] sm:$0xff]
    %v620 = vld [vmem:[#allocation9 + $0x7c8] sm:$0xff]
    %v621 = vld [vmem:[#allocation9 + $0x7d0] sm:$0xff]
    %v622 = vld [vmem:[#allocation9 + $0x7d8] sm:$0xff]
    %v623 = vld [vmem:[#allocation9 + $0x7e0] sm:$0xff]
    %v624 = vld [vmem:[#allocation9 + $0x7e8] sm:$0xff]
    %v625 = vld [vmem:[#allocation9 + $0x7f0] sm:$0xff]
    %v626 = vld [vmem:[#allocation9 + $0x7f8] sm:$0xff]
    %v627 = vld [vmem:[#allocation9 + $0x800] sm:$0xff]
    %v628 = vld [vmem:[#allocation9 + $0x808] sm:$0xff]
    %v629 = vld [vmem:[#allocation9 + $0x810] sm:$0xff]
    %v630 = vld [vmem:[#allocation9 + $0x818] sm:$0xff]
    %v631 = vld [vmem:[#allocation9 + $0x820] sm:$0xff]
    %v632 = vld [vmem:[#allocation9 + $0x828] sm:$0xff]
    %v633 = vld [vmem:[#allocation9 + $0x830] sm:$0xff]
    %v634 = vld [vmem:[#allocation9 + $0x838] sm:$0xff]
    %v635 = vld [vmem:[#allocation9 + $0x840] sm:$0xff]
    %v636 = vld [vmem:[#allocation9 + $0x848] sm:$0xff]
    %v637 = vld [vmem:[#allocation9 + $0x850] sm:$0xff]
    %v638 = vld [vmem:[#allocation9 + $0x858] sm:$0xff]
    %v639 = vld [vmem:[#allocation9 + $0x860] sm:$0xff]
    %v640 = vld [vmem:[#allocation9 + $0x868] sm:$0xff]
    %v641 = vld [vmem:[#allocation9 + $0x870] sm:$0xff]
    %v642 = vld [vmem:[#allocation9 + $0x878] sm:$0xff]
    %v643 = vld [vmem:[#allocation9 + $0x880] sm:$0xff]
    %v644 = vld [vmem:[#allocation9 + $0x888] sm:$0xff]
    %v645 = vld [vmem:[#allocation9 + $0x890] sm:$0xff]
    %v646 = vld [vmem:[#allocation9 + $0x898] sm:$0xff]
    %v647 = vld [vmem:[#allocation9 + $0x8a0] sm:$0xff]
    %v648 = vld [vmem:[#allocation9 + $0x8a8] sm:$0xff]
    %v649 = vld [vmem:[#allocation9 + $0x8b0] sm:$0xff]
    %v650 = vld [vmem:[#allocation9 + $0x8b8] sm:$0xff]
    %v651 = vld [vmem:[#allocation9 + $0x8c0] sm:$0xff]
    %v652 = vld [vmem:[#allocation9 + $0x8c8] sm:$0xff]
    %v653 = vld [vmem:[#allocation9 + $0x8d0] sm:$0xff]
    %v654 = vld [vmem:[#allocation9 + $0x8d8] sm:$0xff]
    %v655 = vld [vmem:[#allocation9 + $0x8e0] sm:$0xff]
    %v656 = vld [vmem:[#allocation9 + $0x8e8] sm:$0xff]
    %v657 = vld [vmem:[#allocation9 + $0x8f0] sm:$0xff]
    %v658 = vld [vmem:[#allocation9 + $0x8f8] sm:$0xff]
    %v659 = vld [vmem:[#allocation9 + $0x900] sm:$0xff]
    %v660 = vld [vmem:[#allocation9 + $0x908] sm:$0xff]
    %v661 = vld [vmem:[#allocation9 + $0x910] sm:$0xff]
    %v662 = vld [vmem:[#allocation9 + $0x918] sm:$0xff]
    %v663 = vld [vmem:[#allocation9 + $0x920] sm:$0xff]
    %v664 = vld [vmem:[#allocation9 + $0x928] sm:$0xff]
    %v665 = vld [vmem:[#allocation9 + $0x930] sm:$0xff]
    %v666 = vld [vmem:[#allocation9 + $0x938] sm:$0xff]
    %v667 = vld [vmem:[#allocation9 + $0x940] sm:$0xff]
    %v668 = vld [vmem:[#allocation9 + $0x948] sm:$0xff]
    %v669 = vld [vmem:[#allocation9 + $0x950] sm:$0xff]
    %v670 = vld [vmem:[#allocation9 + $0x958] sm:$0xff]
    %v671 = vld [vmem:[#allocation9 + $0x960] sm:$0xff]
    %v672 = vld [vmem:[#allocation9 + $0x968] sm:$0xff]
    %v673 = vld [vmem:[#allocation9 + $0x970] sm:$0xff]
    %v674 = vld [vmem:[#allocation9 + $0x978] sm:$0xff]
    %v675 = vld [vmem:[#allocation9 + $0x980] sm:$0xff]
    %v676 = vld [vmem:[#allocation9 + $0x988] sm:$0xff]
    %v677 = vld [vmem:[#allocation9 + $0x990] sm:$0xff]
    %v678 = vld [vmem:[#allocation9 + $0x998] sm:$0xff]
    %v679 = vld [vmem:[#allocation9 + $0x9a0] sm:$0xff]
    %v680 = vld [vmem:[#allocation9 + $0x9a8] sm:$0xff]
    %v681 = vld [vmem:[#allocation9 + $0x9b0] sm:$0xff]
    %v682 = vld [vmem:[#allocation9 + $0x9b8] sm:$0xff]
    %v683 = vld [vmem:[#allocation9 + $0x9c0] sm:$0xff]
    %v684 = vld [vmem:[#allocation9 + $0x9c8] sm:$0xff]
    %v685 = vld [vmem:[#allocation9 + $0x9d0] sm:$0xff]
    %v686 = vld [vmem:[#allocation9 + $0x9d8] sm:$0xff]
    %v687 = vld [vmem:[#allocation9 + $0x9e0] sm:$0xff]
    %v688 = vld [vmem:[#allocation9 + $0x9e8] sm:$0xff]
    %v689 = vld [vmem:[#allocation9 + $0x9f0] sm:$0xff]
    %v690 = vld [vmem:[#allocation9 + $0x9f8] sm:$0xff]
    %v691 = vld [vmem:[#allocation9 + $0xa00] sm:$0xff]
    %v692 = vld [vmem:[#allocation9 + $0xa08] sm:$0xff]
    %v693 = vld [vmem:[#allocation9 + $0xa10] sm:$0xff]
    %v694 = vld [vmem:[#allocation9 + $0xa18] sm:$0xff]
    %v695 = vld [vmem:[#allocation9 + $0xa20] sm:$0xff]
    %v696 = vld [vmem:[#allocation9 + $0xa28] sm:$0xff]
    %v697 = vld [vmem:[#allocation9 + $0xa30] sm:$0xff]
    %v698 = vld [vmem:[#allocation9 + $0xa38] sm:$0xff]
    %v699 = vld [vmem:[#allocation9 + $0xa40] sm:$0xff]
    %v700 = vld [vmem:[#allocation9 + $0xa48] sm:$0xff]
    %v701 = vld [vmem:[#allocation9 + $0xa50] sm:$0xff]
    %v702 = vld [vmem:[#allocation9 + $0xa58] sm:$0xff]
    %v703 = vld [vmem:[#allocation9 + $0xa60] sm:$0xff]
    %v704 = vld [vmem:[#allocation9 + $0xa68] sm:$0xff]
    %v705 = vld [vmem:[#allocation9 + $0xa70] sm:$0xff]
    %v706 = vld [vmem:[#allocation9 + $0xa78] sm:$0xff]
    %v707 = vld [vmem:[#allocation9 + $0xa80] sm:$0xff]
    %v708 = vld [vmem:[#allocation9 + $0xa88] sm:$0xff]
    %v709 = vld [vmem:[#allocation9 + $0xa90] sm:$0xff]
    %v710 = vld [vmem:[#allocation9 + $0xa98] sm:$0xff]
    %v711 = vld [vmem:[#allocation9 + $0xaa0] sm:$0xff]
    %v712 = vld [vmem:[#allocation9 + $0xaa8] sm:$0xff]
    %v713 = vld [vmem:[#allocation9 + $0xab0] sm:$0xff]
    %v714 = vld [vmem:[#allocation9 + $0xab8] sm:$0xff]
    %v715 = vld [vmem:[#allocation9 + $0xac0] sm:$0xff]
    %v716 = vld [vmem:[#allocation9 + $0xac8] sm:$0xff]
    %v717 = vld [vmem:[#allocation9 + $0xad0] sm:$0xff]
    %v718 = vld [vmem:[#allocation9 + $0xad8] sm:$0xff]
    %v719 = vld [vmem:[#allocation9 + $0xae0] sm:$0xff]
    %v720 = vld [vmem:[#allocation9 + $0xae8] sm:$0xff]
    %v721 = vld [vmem:[#allocation9 + $0xaf0] sm:$0xff]
    %v722 = vld [vmem:[#allocation9 + $0xaf8] sm:$0xff]
    %v723 = vld [vmem:[#allocation9 + $0xb00] sm:$0xff]
    %v724 = vld [vmem:[#allocation9 + $0xb08] sm:$0xff]
    %v725 = vld [vmem:[#allocation9 + $0xb10] sm:$0xff]
    %v726 = vld [vmem:[#allocation9 + $0xb18] sm:$0xff]
    %v727 = vld [vmem:[#allocation9 + $0xb20] sm:$0xff]
    %v728 = vld [vmem:[#allocation9 + $0xb28] sm:$0xff]
    %v729 = vld [vmem:[#allocation9 + $0xb30] sm:$0xff]
    %v730 = vld [vmem:[#allocation9 + $0xb38] sm:$0xff]
    %v731 = vld [vmem:[#allocation9 + $0xb40] sm:$0xff]
    %v732 = vld [vmem:[#allocation9 + $0xb48] sm:$0xff]
    %v733 = vld [vmem:[#allocation9 + $0xb50] sm:$0xff]
    %v734 = vld [vmem:[#allocation9 + $0xb58] sm:$0xff]
    %v735 = vld [vmem:[#allocation9 + $0xb60] sm:$0xff]
    %v736 = vld [vmem:[#allocation9 + $0xb68] sm:$0xff]
    %v737 = vld [vmem:[#allocation9 + $0xb70] sm:$0xff]
    %v738 = vld [vmem:[#allocation9 + $0xb78] sm:$0xff]
    %v739 = vld [vmem:[#allocation9 + $0xb80] sm:$0xff]
    %v740 = vld [vmem:[#allocation9 + $0xb88] sm:$0xff]
    %v741 = vld [vmem:[#allocation9 + $0xb90] sm:$0xff]
    %v742 = vld [vmem:[#allocation9 + $0xb98] sm:$0xff]
    %v743 = vld [vmem:[#allocation9 + $0xba0] sm:$0xff]
    %v744 = vld [vmem:[#allocation9 + $0xba8] sm:$0xff]
    %v745 = vld [vmem:[#allocation9 + $0xbb0] sm:$0xff]
    %v746 = vld [vmem:[#allocation9 + $0xbb8] sm:$0xff]
    %v747 = vld [vmem:[#allocation9 + $0xbc0] sm:$0xff]
    %v748 = vld [vmem:[#allocation9 + $0xbc8] sm:$0xff]
    %v749 = vld [vmem:[#allocation9 + $0xbd0] sm:$0xff]
    %v750 = vld [vmem:[#allocation9 + $0xbd8] sm:$0xff]
    %v751 = vld [vmem:[#allocation9 + $0xbe0] sm:$0xff]
    %v752 = vld [vmem:[#allocation9 + $0xbe8] sm:$0xff]
    %v753 = vld [vmem:[#allocation9 + $0xbf0] sm:$0xff]
    %v754 = vld [vmem:[#allocation9 + $0xbf8] sm:$0xff]
    %v1139 = vunpack.c.l.b16 %v371
    %v1140 = vunpack.c.h.b16 %v371
    %v1141 = vunpack.c.l.b16 %v372
    %v1142 = vunpack.c.h.b16 %v372
    %v1143 = vunpack.c.l.b16 %v373
    %v1144 = vunpack.c.h.b16 %v373
    %v1145 = vunpack.c.l.b16 %v374
    %v1146 = vunpack.c.h.b16 %v374
    %v1147 = vunpack.c.l.b16 %v375
    %v1148 = vunpack.c.h.b16 %v375
    %v1149 = vunpack.c.l.b16 %v376
    %v1150 = vunpack.c.h.b16 %v376
    %v1151 = vunpack.c.l.b16 %v377
    %v1152 = vunpack.c.h.b16 %v377
    %v1153 = vunpack.c.l.b16 %v378
    %v1154 = vunpack.c.h.b16 %v378
    %v1155 = vunpack.c.l.b16 %v379
    %v1156 = vunpack.c.h.b16 %v379
    %v1157 = vunpack.c.l.b16 %v380
    %v1158 = vunpack.c.h.b16 %v380
    %v1159 = vunpack.c.l.b16 %v381
    %v1160 = vunpack.c.h.b16 %v381
    %v1161 = vunpack.c.l.b16 %v382
    %v1162 = vunpack.c.h.b16 %v382
    %v1163 = vunpack.c.l.b16 %v383
    %v1164 = vunpack.c.h.b16 %v383
    %v1165 = vunpack.c.l.b16 %v384
    %v1166 = vunpack.c.h.b16 %v384
    %v1167 = vunpack.c.l.b16 %v385
    %v1168 = vunpack.c.h.b16 %v385
    %v1169 = vunpack.c.l.b16 %v386
    %v1170 = vunpack.c.h.b16 %v386
    %v1171 = vunpack.c.l.b16 %v387
    %v1172 = vunpack.c.h.b16 %v387
    %v1173 = vunpack.c.l.b16 %v388
    %v1174 = vunpack.c.h.b16 %v388
    %v1175 = vunpack.c.l.b16 %v389
    %v1176 = vunpack.c.h.b16 %v389
    %v1177 = vunpack.c.l.b16 %v390
    %v1178 = vunpack.c.h.b16 %v390
    %v1179 = vunpack.c.l.b16 %v391
    %v1180 = vunpack.c.h.b16 %v391
    %v1181 = vunpack.c.l.b16 %v392
    %v1182 = vunpack.c.h.b16 %v392
    %v1183 = vunpack.c.l.b16 %v393
    %v1184 = vunpack.c.h.b16 %v393
    %v1185 = vunpack.c.l.b16 %v394
    %v1186 = vunpack.c.h.b16 %v394
    %v1187 = vunpack.c.l.b16 %v395
    %v1188 = vunpack.c.h.b16 %v395
    %v1189 = vunpack.c.l.b16 %v396
    %v1190 = vunpack.c.h.b16 %v396
    %v1191 = vunpack.c.l.b16 %v397
    %v1192 = vunpack.c.h.b16 %v397
    %v1193 = vunpack.c.l.b16 %v398
    %v1194 = vunpack.c.h.b16 %v398
    %v1195 = vunpack.c.l.b16 %v399
    %v1196 = vunpack.c.h.b16 %v399
    %v1197 = vunpack.c.l.b16 %v400
    %v1198 = vunpack.c.h.b16 %v400
    %v1199 = vunpack.c.l.b16 %v401
    %v1200 = vunpack.c.h.b16 %v401
    %v1201 = vunpack.c.l.b16 %v402
    %v1202 = vunpack.c.h.b16 %v402
    %v1203 = vunpack.c.l.b16 %v403
    %v1204 = vunpack.c.h.b16 %v403
    %v1205 = vunpack.c.l.b16 %v404
    %v1206 = vunpack.c.h.b16 %v404
    %v1207 = vunpack.c.l.b16 %v405
    %v1208 = vunpack.c.h.b16 %v405
    %v1209 = vunpack.c.l.b16 %v406
    %v1210 = vunpack.c.h.b16 %v406
    %v1211 = vunpack.c.l.b16 %v407
    %v1212 = vunpack.c.h.b16 %v407
    %v1213 = vunpack.c.l.b16 %v408
    %v1214 = vunpack.c.h.b16 %v408
    %v1215 = vunpack.c.l.b16 %v409
    %v1216 = vunpack.c.h.b16 %v409
    %v1217 = vunpack.c.l.b16 %v410
    %v1218 = vunpack.c.h.b16 %v410
    %v1219 = vunpack.c.l.b16 %v411
    %v1220 = vunpack.c.h.b16 %v411
    %v1221 = vunpack.c.l.b16 %v412
    %v1222 = vunpack.c.h.b16 %v412
    %v1223 = vunpack.c.l.b16 %v413
    %v1224 = vunpack.c.h.b16 %v413
    %v1225 = vunpack.c.l.b16 %v414
    %v1226 = vunpack.c.h.b16 %v414
    %v1227 = vunpack.c.l.b16 %v415
    %v1228 = vunpack.c.h.b16 %v415
    %v1229 = vunpack.c.l.b16 %v416
    %v1230 = vunpack.c.h.b16 %v416
    %v1231 = vunpack.c.l.b16 %v417
    %v1232 = vunpack.c.h.b16 %v417
    %v1233 = vunpack.c.l.b16 %v418
    %v1234 = vunpack.c.h.b16 %v418
    %v1235 = vunpack.c.l.b16 %v419
    %v1236 = vunpack.c.h.b16 %v419
    %v1237 = vunpack.c.l.b16 %v420
    %v1238 = vunpack.c.h.b16 %v420
    %v1239 = vunpack.c.l.b16 %v421
    %v1240 = vunpack.c.h.b16 %v421
    %v1241 = vunpack.c.l.b16 %v422
    %v1242 = vunpack.c.h.b16 %v422
    %v1243 = vunpack.c.l.b16 %v423
    %v1244 = vunpack.c.h.b16 %v423
    %v1245 = vunpack.c.l.b16 %v424
    %v1246 = vunpack.c.h.b16 %v424
    %v1247 = vunpack.c.l.b16 %v425
    %v1248 = vunpack.c.h.b16 %v425
    %v1249 = vunpack.c.l.b16 %v426
    %v1250 = vunpack.c.h.b16 %v426
    %v1251 = vunpack.c.l.b16 %v427
    %v1252 = vunpack.c.h.b16 %v427
    %v1253 = vunpack.c.l.b16 %v428
    %v1254 = vunpack.c.h.b16 %v428
    %v1255 = vunpack.c.l.b16 %v429
    %v1256 = vunpack.c.h.b16 %v429
    %v1257 = vunpack.c.l.b16 %v430
    %v1258 = vunpack.c.h.b16 %v430
    %v1259 = vunpack.c.l.b16 %v431
    %v1260 = vunpack.c.h.b16 %v431
    %v1261 = vunpack.c.l.b16 %v432
    %v1262 = vunpack.c.h.b16 %v432
    %v1263 = vunpack.c.l.b16 %v433
    %v1264 = vunpack.c.h.b16 %v433
    %v1265 = vunpack.c.l.b16 %v434
    %v1266 = vunpack.c.h.b16 %v434
    %v1267 = vunpack.c.l.b16 %v435
    %v1268 = vunpack.c.h.b16 %v435
    %v1269 = vunpack.c.l.b16 %v436
    %v1270 = vunpack.c.h.b16 %v436
    %v1271 = vunpack.c.l.b16 %v437
    %v1272 = vunpack.c.h.b16 %v437
    %v1273 = vunpack.c.l.b16 %v438
    %v1274 = vunpack.c.h.b16 %v438
    %v1275 = vunpack.c.l.b16 %v439
    %v1276 = vunpack.c.h.b16 %v439
    %v1277 = vunpack.c.l.b16 %v440
    %v1278 = vunpack.c.h.b16 %v440
    %v1279 = vunpack.c.l.b16 %v441
    %v1280 = vunpack.c.h.b16 %v441
    %v1281 = vunpack.c.l.b16 %v442
    %v1282 = vunpack.c.h.b16 %v442
    %v1283 = vunpack.c.l.b16 %v443
    %v1284 = vunpack.c.h.b16 %v443
    %v1285 = vunpack.c.l.b16 %v444
    %v1286 = vunpack.c.h.b16 %v444
    %v1287 = vunpack.c.l.b16 %v445
    %v1288 = vunpack.c.h.b16 %v445
    %v1289 = vunpack.c.l.b16 %v446
    %v1290 = vunpack.c.h.b16 %v446
    %v1291 = vunpack.c.l.b16 %v447
    %v1292 = vunpack.c.h.b16 %v447
    %v1293 = vunpack.c.l.b16 %v448
    %v1294 = vunpack.c.h.b16 %v448
    %v1295 = vunpack.c.l.b16 %v449
    %v1296 = vunpack.c.h.b16 %v449
    %v1297 = vunpack.c.l.b16 %v450
    %v1298 = vunpack.c.h.b16 %v450
    %v1299 = vunpack.c.l.b16 %v451
    %v1300 = vunpack.c.h.b16 %v451
    %v1301 = vunpack.c.l.b16 %v452
    %v1302 = vunpack.c.h.b16 %v452
    %v1303 = vunpack.c.l.b16 %v453
    %v1304 = vunpack.c.h.b16 %v453
    %v1305 = vunpack.c.l.b16 %v454
    %v1306 = vunpack.c.h.b16 %v454
    %v1307 = vunpack.c.l.b16 %v455
    %v1308 = vunpack.c.h.b16 %v455
    %v1309 = vunpack.c.l.b16 %v456
    %v1310 = vunpack.c.h.b16 %v456
    %v1311 = vunpack.c.l.b16 %v457
    %v1312 = vunpack.c.h.b16 %v457
    %v1313 = vunpack.c.l.b16 %v458
    %v1314 = vunpack.c.h.b16 %v458
    %v1315 = vunpack.c.l.b16 %v459
    %v1316 = vunpack.c.h.b16 %v459
    %v1317 = vunpack.c.l.b16 %v460
    %v1318 = vunpack.c.h.b16 %v460
    %v1319 = vunpack.c.l.b16 %v461
    %v1320 = vunpack.c.h.b16 %v461
    %v1321 = vunpack.c.l.b16 %v462
    %v1322 = vunpack.c.h.b16 %v462
    %v1323 = vunpack.c.l.b16 %v463
    %v1324 = vunpack.c.h.b16 %v463
    %v1325 = vunpack.c.l.b16 %v464
    %v1326 = vunpack.c.h.b16 %v464
    %v1327 = vunpack.c.l.b16 %v465
    %v1328 = vunpack.c.h.b16 %v465
    %v1329 = vunpack.c.l.b16 %v466
    %v1330 = vunpack.c.h.b16 %v466
    %v1331 = vunpack.c.l.b16 %v467
    %v1332 = vunpack.c.h.b16 %v467
    %v1333 = vunpack.c.l.b16 %v468
    %v1334 = vunpack.c.h.b16 %v468
    %v1335 = vunpack.c.l.b16 %v469
    %v1336 = vunpack.c.h.b16 %v469
    %v1337 = vunpack.c.l.b16 %v470
    %v1338 = vunpack.c.h.b16 %v470
    %v1339 = vunpack.c.l.b16 %v471
    %v1340 = vunpack.c.h.b16 %v471
    %v1341 = vunpack.c.l.b16 %v472
    %v1342 = vunpack.c.h.b16 %v472
    %v1343 = vunpack.c.l.b16 %v473
    %v1344 = vunpack.c.h.b16 %v473
    %v1345 = vunpack.c.l.b16 %v474
    %v1346 = vunpack.c.h.b16 %v474
    %v1347 = vunpack.c.l.b16 %v475
    %v1348 = vunpack.c.h.b16 %v475
    %v1349 = vunpack.c.l.b16 %v476
    %v1350 = vunpack.c.h.b16 %v476
    %v1351 = vunpack.c.l.b16 %v477
    %v1352 = vunpack.c.h.b16 %v477
    %v1353 = vunpack.c.l.b16 %v478
    %v1354 = vunpack.c.h.b16 %v478
    %v1355 = vunpack.c.l.b16 %v479
    %v1356 = vunpack.c.h.b16 %v479
    %v1357 = vunpack.c.l.b16 %v480
    %v1358 = vunpack.c.h.b16 %v480
    %v1359 = vunpack.c.l.b16 %v481
    %v1360 = vunpack.c.h.b16 %v481
    %v1361 = vunpack.c.l.b16 %v482
    %v1362 = vunpack.c.h.b16 %v482
    %v1363 = vunpack.c.l.b16 %v483
    %v1364 = vunpack.c.h.b16 %v483
    %v1365 = vunpack.c.l.b16 %v484
    %v1366 = vunpack.c.h.b16 %v484
    %v1367 = vunpack.c.l.b16 %v485
    %v1368 = vunpack.c.h.b16 %v485
    %v1369 = vunpack.c.l.b16 %v486
    %v1370 = vunpack.c.h.b16 %v486
    %v1371 = vunpack.c.l.b16 %v487
    %v1372 = vunpack.c.h.b16 %v487
    %v1373 = vunpack.c.l.b16 %v488
    %v1374 = vunpack.c.h.b16 %v488
    %v1375 = vunpack.c.l.b16 %v489
    %v1376 = vunpack.c.h.b16 %v489
    %v1377 = vunpack.c.l.b16 %v490
    %v1378 = vunpack.c.h.b16 %v490
    %v1379 = vunpack.c.l.b16 %v491
    %v1380 = vunpack.c.h.b16 %v491
    %v1381 = vunpack.c.l.b16 %v492
    %v1382 = vunpack.c.h.b16 %v492
    %v1383 = vunpack.c.l.b16 %v493
    %v1384 = vunpack.c.h.b16 %v493
    %v1385 = vunpack.c.l.b16 %v494
    %v1386 = vunpack.c.h.b16 %v494
    %v1387 = vunpack.c.l.b16 %v495
    %v1388 = vunpack.c.h.b16 %v495
    %v1389 = vunpack.c.l.b16 %v496
    %v1390 = vunpack.c.h.b16 %v496
    %v1391 = vunpack.c.l.b16 %v497
    %v1392 = vunpack.c.h.b16 %v497
    %v1393 = vunpack.c.l.b16 %v498
    %v1394 = vunpack.c.h.b16 %v498
    %v1395 = vunpack.c.l.b16 %v499
    %v1396 = vunpack.c.h.b16 %v499
    %v1397 = vunpack.c.l.b16 %v500
    %v1398 = vunpack.c.h.b16 %v500
    %v1399 = vunpack.c.l.b16 %v501
    %v1400 = vunpack.c.h.b16 %v501
    %v1401 = vunpack.c.l.b16 %v502
    %v1402 = vunpack.c.h.b16 %v502
    %v1403 = vunpack.c.l.b16 %v503
    %v1404 = vunpack.c.h.b16 %v503
    %v1405 = vunpack.c.l.b16 %v504
    %v1406 = vunpack.c.h.b16 %v504
    %v1407 = vunpack.c.l.b16 %v505
    %v1408 = vunpack.c.h.b16 %v505
    %v1409 = vunpack.c.l.b16 %v506
    %v1410 = vunpack.c.h.b16 %v506
    %v1411 = vunpack.c.l.b16 %v507
    %v1412 = vunpack.c.h.b16 %v507
    %v1413 = vunpack.c.l.b16 %v508
    %v1414 = vunpack.c.h.b16 %v508
    %v1415 = vunpack.c.l.b16 %v509
    %v1416 = vunpack.c.h.b16 %v509
    %v1417 = vunpack.c.l.b16 %v510
    %v1418 = vunpack.c.h.b16 %v510
    %v1419 = vunpack.c.l.b16 %v511
    %v1420 = vunpack.c.h.b16 %v511
    %v1421 = vunpack.c.l.b16 %v512
    %v1422 = vunpack.c.h.b16 %v512
    %v1423 = vunpack.c.l.b16 %v513
    %v1424 = vunpack.c.h.b16 %v513
    %v1425 = vunpack.c.l.b16 %v514
    %v1426 = vunpack.c.h.b16 %v514
    %v1427 = vunpack.c.l.b16 %v515
    %v1428 = vunpack.c.h.b16 %v515
    %v1429 = vunpack.c.l.b16 %v516
    %v1430 = vunpack.c.h.b16 %v516
    %v1431 = vunpack.c.l.b16 %v517
    %v1432 = vunpack.c.h.b16 %v517
    %v1433 = vunpack.c.l.b16 %v518
    %v1434 = vunpack.c.h.b16 %v518
    %v1435 = vunpack.c.l.b16 %v519
    %v1436 = vunpack.c.h.b16 %v519
    %v1437 = vunpack.c.l.b16 %v520
    %v1438 = vunpack.c.h.b16 %v520
    %v1439 = vunpack.c.l.b16 %v521
    %v1440 = vunpack.c.h.b16 %v521
    %v1441 = vunpack.c.l.b16 %v522
    %v1442 = vunpack.c.h.b16 %v522
    %v1443 = vunpack.c.l.b16 %v523
    %v1444 = vunpack.c.h.b16 %v523
    %v1445 = vunpack.c.l.b16 %v524
    %v1446 = vunpack.c.h.b16 %v524
    %v1447 = vunpack.c.l.b16 %v525
    %v1448 = vunpack.c.h.b16 %v525
    %v1449 = vunpack.c.l.b16 %v526
    %v1450 = vunpack.c.h.b16 %v526
    %v1451 = vunpack.c.l.b16 %v527
    %v1452 = vunpack.c.h.b16 %v527
    %v1453 = vunpack.c.l.b16 %v528
    %v1454 = vunpack.c.h.b16 %v528
    %v1455 = vunpack.c.l.b16 %v529
    %v1456 = vunpack.c.h.b16 %v529
    %v1457 = vunpack.c.l.b16 %v530
    %v1458 = vunpack.c.h.b16 %v530
    %v1459 = vunpack.c.l.b16 %v531
    %v1460 = vunpack.c.h.b16 %v531
    %v1461 = vunpack.c.l.b16 %v532
    %v1462 = vunpack.c.h.b16 %v532
    %v1463 = vunpack.c.l.b16 %v533
    %v1464 = vunpack.c.h.b16 %v533
    %v1465 = vunpack.c.l.b16 %v534
    %v1466 = vunpack.c.h.b16 %v534
    %v1467 = vunpack.c.l.b16 %v535
    %v1468 = vunpack.c.h.b16 %v535
    %v1469 = vunpack.c.l.b16 %v536
    %v1470 = vunpack.c.h.b16 %v536
    %v1471 = vunpack.c.l.b16 %v537
    %v1472 = vunpack.c.h.b16 %v537
    %v1473 = vunpack.c.l.b16 %v538
    %v1474 = vunpack.c.h.b16 %v538
    %v1475 = vunpack.c.l.b16 %v539
    %v1476 = vunpack.c.h.b16 %v539
    %v1477 = vunpack.c.l.b16 %v540
    %v1478 = vunpack.c.h.b16 %v540
    %v1479 = vunpack.c.l.b16 %v541
    %v1480 = vunpack.c.h.b16 %v541
    %v1481 = vunpack.c.l.b16 %v542
    %v1482 = vunpack.c.h.b16 %v542
    %v1483 = vunpack.c.l.b16 %v543
    %v1484 = vunpack.c.h.b16 %v543
    %v1485 = vunpack.c.l.b16 %v544
    %v1486 = vunpack.c.h.b16 %v544
    %v1487 = vunpack.c.l.b16 %v545
    %v1488 = vunpack.c.h.b16 %v545
    %v1489 = vunpack.c.l.b16 %v546
    %v1490 = vunpack.c.h.b16 %v546
    %v1491 = vunpack.c.l.b16 %v547
    %v1492 = vunpack.c.h.b16 %v547
    %v1493 = vunpack.c.l.b16 %v548
    %v1494 = vunpack.c.h.b16 %v548
    %v1495 = vunpack.c.l.b16 %v549
    %v1496 = vunpack.c.h.b16 %v549
    %v1497 = vunpack.c.l.b16 %v550
    %v1498 = vunpack.c.h.b16 %v550
    %v1499 = vunpack.c.l.b16 %v551
    %v1500 = vunpack.c.h.b16 %v551
    %v1501 = vunpack.c.l.b16 %v552
    %v1502 = vunpack.c.h.b16 %v552
    %v1503 = vunpack.c.l.b16 %v553
    %v1504 = vunpack.c.h.b16 %v553
    %v1505 = vunpack.c.l.b16 %v554
    %v1506 = vunpack.c.h.b16 %v554
    %v1507 = vunpack.c.l.b16 %v555
    %v1508 = vunpack.c.h.b16 %v555
    %v1509 = vunpack.c.l.b16 %v556
    %v1510 = vunpack.c.h.b16 %v556
    %v1511 = vunpack.c.l.b16 %v557
    %v1512 = vunpack.c.h.b16 %v557
    %v1513 = vunpack.c.l.b16 %v558
    %v1514 = vunpack.c.h.b16 %v558
    %v1515 = vunpack.c.l.b16 %v559
    %v1516 = vunpack.c.h.b16 %v559
    %v1517 = vunpack.c.l.b16 %v560
    %v1518 = vunpack.c.h.b16 %v560
    %v1519 = vunpack.c.l.b16 %v561
    %v1520 = vunpack.c.h.b16 %v561
    %v1521 = vunpack.c.l.b16 %v562
    %v1522 = vunpack.c.h.b16 %v562
    %v1523 = vunpack.c.l.b16 %v563
    %v1524 = vunpack.c.h.b16 %v563
    %v1525 = vunpack.c.l.b16 %v564
    %v1526 = vunpack.c.h.b16 %v564
    %v1527 = vunpack.c.l.b16 %v565
    %v1528 = vunpack.c.h.b16 %v565
    %v1529 = vunpack.c.l.b16 %v566
    %v1530 = vunpack.c.h.b16 %v566
    %v1531 = vunpack.c.l.b16 %v567
    %v1532 = vunpack.c.h.b16 %v567
    %v1533 = vunpack.c.l.b16 %v568
    %v1534 = vunpack.c.h.b16 %v568
    %v1535 = vunpack.c.l.b16 %v569
    %v1536 = vunpack.c.h.b16 %v569
    %v1537 = vunpack.c.l.b16 %v570
    %v1538 = vunpack.c.h.b16 %v570
    %v1539 = vunpack.c.l.b16 %v571
    %v1540 = vunpack.c.h.b16 %v571
    %v1541 = vunpack.c.l.b16 %v572
    %v1542 = vunpack.c.h.b16 %v572
    %v1543 = vunpack.c.l.b16 %v573
    %v1544 = vunpack.c.h.b16 %v573
    %v1545 = vunpack.c.l.b16 %v574
    %v1546 = vunpack.c.h.b16 %v574
    %v1547 = vunpack.c.l.b16 %v575
    %v1548 = vunpack.c.h.b16 %v575
    %v1549 = vunpack.c.l.b16 %v576
    %v1550 = vunpack.c.h.b16 %v576
    %v1551 = vunpack.c.l.b16 %v577
    %v1552 = vunpack.c.h.b16 %v577
    %v1553 = vunpack.c.l.b16 %v578
    %v1554 = vunpack.c.h.b16 %v578
    %v1555 = vunpack.c.l.b16 %v579
    %v1556 = vunpack.c.h.b16 %v579
    %v1557 = vunpack.c.l.b16 %v580
    %v1558 = vunpack.c.h.b16 %v580
    %v1559 = vunpack.c.l.b16 %v581
    %v1560 = vunpack.c.h.b16 %v581
    %v1561 = vunpack.c.l.b16 %v582
    %v1562 = vunpack.c.h.b16 %v582
    %v1563 = vunpack.c.l.b16 %v583
    %v1564 = vunpack.c.h.b16 %v583
    %v1565 = vunpack.c.l.b16 %v584
    %v1566 = vunpack.c.h.b16 %v584
    %v1567 = vunpack.c.l.b16 %v585
    %v1568 = vunpack.c.h.b16 %v585
    %v1569 = vunpack.c.l.b16 %v586
    %v1570 = vunpack.c.h.b16 %v586
    %v1571 = vunpack.c.l.b16 %v587
    %v1572 = vunpack.c.h.b16 %v587
    %v1573 = vunpack.c.l.b16 %v588
    %v1574 = vunpack.c.h.b16 %v588
    %v1575 = vunpack.c.l.b16 %v589
    %v1576 = vunpack.c.h.b16 %v589
    %v1577 = vunpack.c.l.b16 %v590
    %v1578 = vunpack.c.h.b16 %v590
    %v1579 = vunpack.c.l.b16 %v591
    %v1580 = vunpack.c.h.b16 %v591
    %v1581 = vunpack.c.l.b16 %v592
    %v1582 = vunpack.c.h.b16 %v592
    %v1583 = vunpack.c.l.b16 %v593
    %v1584 = vunpack.c.h.b16 %v593
    %v1585 = vunpack.c.l.b16 %v594
    %v1586 = vunpack.c.h.b16 %v594
    %v1587 = vunpack.c.l.b16 %v595
    %v1588 = vunpack.c.h.b16 %v595
    %v1589 = vunpack.c.l.b16 %v596
    %v1590 = vunpack.c.h.b16 %v596
    %v1591 = vunpack.c.l.b16 %v597
    %v1592 = vunpack.c.h.b16 %v597
    %v1593 = vunpack.c.l.b16 %v598
    %v1594 = vunpack.c.h.b16 %v598
    %v1595 = vunpack.c.l.b16 %v599
    %v1596 = vunpack.c.h.b16 %v599
    %v1597 = vunpack.c.l.b16 %v600
    %v1598 = vunpack.c.h.b16 %v600
    %v1599 = vunpack.c.l.b16 %v601
    %v1600 = vunpack.c.h.b16 %v601
    %v1601 = vunpack.c.l.b16 %v602
    %v1602 = vunpack.c.h.b16 %v602
    %v1603 = vunpack.c.l.b16 %v603
    %v1604 = vunpack.c.h.b16 %v603
    %v1605 = vunpack.c.l.b16 %v604
    %v1606 = vunpack.c.h.b16 %v604
    %v1607 = vunpack.c.l.b16 %v605
    %v1608 = vunpack.c.h.b16 %v605
    %v1609 = vunpack.c.l.b16 %v606
    %v1610 = vunpack.c.h.b16 %v606
    %v1611 = vunpack.c.l.b16 %v607
    %v1612 = vunpack.c.h.b16 %v607
    %v1613 = vunpack.c.l.b16 %v608
    %v1614 = vunpack.c.h.b16 %v608
    %v1615 = vunpack.c.l.b16 %v609
    %v1616 = vunpack.c.h.b16 %v609
    %v1617 = vunpack.c.l.b16 %v610
    %v1618 = vunpack.c.h.b16 %v610
    %v1619 = vunpack.c.l.b16 %v611
    %v1620 = vunpack.c.h.b16 %v611
    %v1621 = vunpack.c.l.b16 %v612
    %v1622 = vunpack.c.h.b16 %v612
    %v1623 = vunpack.c.l.b16 %v613
    %v1624 = vunpack.c.h.b16 %v613
    %v1625 = vunpack.c.l.b16 %v614
    %v1626 = vunpack.c.h.b16 %v614
    %v1627 = vunpack.c.l.b16 %v615
    %v1628 = vunpack.c.h.b16 %v615
    %v1629 = vunpack.c.l.b16 %v616
    %v1630 = vunpack.c.h.b16 %v616
    %v1631 = vunpack.c.l.b16 %v617
    %v1632 = vunpack.c.h.b16 %v617
    %v1633 = vunpack.c.l.b16 %v618
    %v1634 = vunpack.c.h.b16 %v618
    %v1635 = vunpack.c.l.b16 %v619
    %v1636 = vunpack.c.h.b16 %v619
    %v1637 = vunpack.c.l.b16 %v620
    %v1638 = vunpack.c.h.b16 %v620
    %v1639 = vunpack.c.l.b16 %v621
    %v1640 = vunpack.c.h.b16 %v621
    %v1641 = vunpack.c.l.b16 %v622
    %v1642 = vunpack.c.h.b16 %v622
    %v1643 = vunpack.c.l.b16 %v623
    %v1644 = vunpack.c.h.b16 %v623
    %v1645 = vunpack.c.l.b16 %v624
    %v1646 = vunpack.c.h.b16 %v624
    %v1647 = vunpack.c.l.b16 %v625
    %v1648 = vunpack.c.h.b16 %v625
    %v1649 = vunpack.c.l.b16 %v626
    %v1650 = vunpack.c.h.b16 %v626
    %v1651 = vunpack.c.l.b16 %v627
    %v1652 = vunpack.c.h.b16 %v627
    %v1653 = vunpack.c.l.b16 %v628
    %v1654 = vunpack.c.h.b16 %v628
    %v1655 = vunpack.c.l.b16 %v629
    %v1656 = vunpack.c.h.b16 %v629
    %v1657 = vunpack.c.l.b16 %v630
    %v1658 = vunpack.c.h.b16 %v630
    %v1659 = vunpack.c.l.b16 %v631
    %v1660 = vunpack.c.h.b16 %v631
    %v1661 = vunpack.c.l.b16 %v632
    %v1662 = vunpack.c.h.b16 %v632
    %v1663 = vunpack.c.l.b16 %v633
    %v1664 = vunpack.c.h.b16 %v633
    %v1665 = vunpack.c.l.b16 %v634
    %v1666 = vunpack.c.h.b16 %v634
    %v1667 = vunpack.c.l.b16 %v635
    %v1668 = vunpack.c.h.b16 %v635
    %v1669 = vunpack.c.l.b16 %v636
    %v1670 = vunpack.c.h.b16 %v636
    %v1671 = vunpack.c.l.b16 %v637
    %v1672 = vunpack.c.h.b16 %v637
    %v1673 = vunpack.c.l.b16 %v638
    %v1674 = vunpack.c.h.b16 %v638
    %v1675 = vunpack.c.l.b16 %v639
    %v1676 = vunpack.c.h.b16 %v639
    %v1677 = vunpack.c.l.b16 %v640
    %v1678 = vunpack.c.h.b16 %v640
    %v1679 = vunpack.c.l.b16 %v641
    %v1680 = vunpack.c.h.b16 %v641
    %v1681 = vunpack.c.l.b16 %v642
    %v1682 = vunpack.c.h.b16 %v642
    %v1683 = vunpack.c.l.b16 %v643
    %v1684 = vunpack.c.h.b16 %v643
    %v1685 = vunpack.c.l.b16 %v644
    %v1686 = vunpack.c.h.b16 %v644
    %v1687 = vunpack.c.l.b16 %v645
    %v1688 = vunpack.c.h.b16 %v645
    %v1689 = vunpack.c.l.b16 %v646
    %v1690 = vunpack.c.h.b16 %v646
    %v1691 = vunpack.c.l.b16 %v647
    %v1692 = vunpack.c.h.b16 %v647
    %v1693 = vunpack.c.l.b16 %v648
    %v1694 = vunpack.c.h.b16 %v648
    %v1695 = vunpack.c.l.b16 %v649
    %v1696 = vunpack.c.h.b16 %v649
    %v1697 = vunpack.c.l.b16 %v650
    %v1698 = vunpack.c.h.b16 %v650
    %v1699 = vunpack.c.l.b16 %v651
    %v1700 = vunpack.c.h.b16 %v651
    %v1701 = vunpack.c.l.b16 %v652
    %v1702 = vunpack.c.h.b16 %v652
    %v1703 = vunpack.c.l.b16 %v653
    %v1704 = vunpack.c.h.b16 %v653
    %v1705 = vunpack.c.l.b16 %v654
    %v1706 = vunpack.c.h.b16 %v654
    %v1707 = vunpack.c.l.b16 %v655
    %v1708 = vunpack.c.h.b16 %v655
    %v1709 = vunpack.c.l.b16 %v656
    %v1710 = vunpack.c.h.b16 %v656
    %v1711 = vunpack.c.l.b16 %v657
    %v1712 = vunpack.c.h.b16 %v657
    %v1713 = vunpack.c.l.b16 %v658
    %v1714 = vunpack.c.h.b16 %v658
    %v1715 = vunpack.c.l.b16 %v659
    %v1716 = vunpack.c.h.b16 %v659
    %v1717 = vunpack.c.l.b16 %v660
    %v1718 = vunpack.c.h.b16 %v660
    %v1719 = vunpack.c.l.b16 %v661
    %v1720 = vunpack.c.h.b16 %v661
    %v1721 = vunpack.c.l.b16 %v662
    %v1722 = vunpack.c.h.b16 %v662
    %v1723 = vunpack.c.l.b16 %v663
    %v1724 = vunpack.c.h.b16 %v663
    %v1725 = vunpack.c.l.b16 %v664
    %v1726 = vunpack.c.h.b16 %v664
    %v1727 = vunpack.c.l.b16 %v665
    %v1728 = vunpack.c.h.b16 %v665
    %v1729 = vunpack.c.l.b16 %v666
    %v1730 = vunpack.c.h.b16 %v666
    %v1731 = vunpack.c.l.b16 %v667
    %v1732 = vunpack.c.h.b16 %v667
    %v1733 = vunpack.c.l.b16 %v668
    %v1734 = vunpack.c.h.b16 %v668
    %v1735 = vunpack.c.l.b16 %v669
    %v1736 = vunpack.c.h.b16 %v669
    %v1737 = vunpack.c.l.b16 %v670
    %v1738 = vunpack.c.h.b16 %v670
    %v1739 = vunpack.c.l.b16 %v671
    %v1740 = vunpack.c.h.b16 %v671
    %v1741 = vunpack.c.l.b16 %v672
    %v1742 = vunpack.c.h.b16 %v672
    %v1743 = vunpack.c.l.b16 %v673
    %v1744 = vunpack.c.h.b16 %v673
    %v1745 = vunpack.c.l.b16 %v674
    %v1746 = vunpack.c.h.b16 %v674
    %v1747 = vunpack.c.l.b16 %v675
    %v1748 = vunpack.c.h.b16 %v675
    %v1749 = vunpack.c.l.b16 %v676
    %v1750 = vunpack.c.h.b16 %v676
    %v1751 = vunpack.c.l.b16 %v677
    %v1752 = vunpack.c.h.b16 %v677
    %v1753 = vunpack.c.l.b16 %v678
    %v1754 = vunpack.c.h.b16 %v678
    %v1755 = vunpack.c.l.b16 %v679
    %v1756 = vunpack.c.h.b16 %v679
    %v1757 = vunpack.c.l.b16 %v680
    %v1758 = vunpack.c.h.b16 %v680
    %v1759 = vunpack.c.l.b16 %v681
    %v1760 = vunpack.c.h.b16 %v681
    %v1761 = vunpack.c.l.b16 %v682
    %v1762 = vunpack.c.h.b16 %v682
    %v1763 = vunpack.c.l.b16 %v683
    %v1764 = vunpack.c.h.b16 %v683
    %v1765 = vunpack.c.l.b16 %v684
    %v1766 = vunpack.c.h.b16 %v684
    %v1767 = vunpack.c.l.b16 %v685
    %v1768 = vunpack.c.h.b16 %v685
    %v1769 = vunpack.c.l.b16 %v686
    %v1770 = vunpack.c.h.b16 %v686
    %v1771 = vunpack.c.l.b16 %v687
    %v1772 = vunpack.c.h.b16 %v687
    %v1773 = vunpack.c.l.b16 %v688
    %v1774 = vunpack.c.h.b16 %v688
    %v1775 = vunpack.c.l.b16 %v689
    %v1776 = vunpack.c.h.b16 %v689
    %v1777 = vunpack.c.l.b16 %v690
    %v1778 = vunpack.c.h.b16 %v690
    %v1779 = vunpack.c.l.b16 %v691
    %v1780 = vunpack.c.h.b16 %v691
    %v1781 = vunpack.c.l.b16 %v692
    %v1782 = vunpack.c.h.b16 %v692
    %v1783 = vunpack.c.l.b16 %v693
    %v1784 = vunpack.c.h.b16 %v693
    %v1785 = vunpack.c.l.b16 %v694
    %v1786 = vunpack.c.h.b16 %v694
    %v1787 = vunpack.c.l.b16 %v695
    %v1788 = vunpack.c.h.b16 %v695
    %v1789 = vunpack.c.l.b16 %v696
    %v1790 = vunpack.c.h.b16 %v696
    %v1791 = vunpack.c.l.b16 %v697
    %v1792 = vunpack.c.h.b16 %v697
    %v1793 = vunpack.c.l.b16 %v698
    %v1794 = vunpack.c.h.b16 %v698
    %v1795 = vunpack.c.l.b16 %v699
    %v1796 = vunpack.c.h.b16 %v699
    %v1797 = vunpack.c.l.b16 %v700
    %v1798 = vunpack.c.h.b16 %v700
    %v1799 = vunpack.c.l.b16 %v701
    %v1800 = vunpack.c.h.b16 %v701
    %v1801 = vunpack.c.l.b16 %v702
    %v1802 = vunpack.c.h.b16 %v702
    %v1803 = vunpack.c.l.b16 %v703
    %v1804 = vunpack.c.h.b16 %v703
    %v1805 = vunpack.c.l.b16 %v704
    %v1806 = vunpack.c.h.b16 %v704
    %v1807 = vunpack.c.l.b16 %v705
    %v1808 = vunpack.c.h.b16 %v705
    %v1809 = vunpack.c.l.b16 %v706
    %v1810 = vunpack.c.h.b16 %v706
    %v1811 = vunpack.c.l.b16 %v707
    %v1812 = vunpack.c.h.b16 %v707
    %v1813 = vunpack.c.l.b16 %v708
    %v1814 = vunpack.c.h.b16 %v708
    %v1815 = vunpack.c.l.b16 %v709
    %v1816 = vunpack.c.h.b16 %v709
    %v1817 = vunpack.c.l.b16 %v710
    %v1818 = vunpack.c.h.b16 %v710
    %v1819 = vunpack.c.l.b16 %v711
    %v1820 = vunpack.c.h.b16 %v711
    %v1821 = vunpack.c.l.b16 %v712
    %v1822 = vunpack.c.h.b16 %v712
    %v1823 = vunpack.c.l.b16 %v713
    %v1824 = vunpack.c.h.b16 %v713
    %v1825 = vunpack.c.l.b16 %v714
    %v1826 = vunpack.c.h.b16 %v714
    %v1827 = vunpack.c.l.b16 %v715
    %v1828 = vunpack.c.h.b16 %v715
    %v1829 = vunpack.c.l.b16 %v716
    %v1830 = vunpack.c.h.b16 %v716
    %v1831 = vunpack.c.l.b16 %v717
    %v1832 = vunpack.c.h.b16 %v717
    %v1833 = vunpack.c.l.b16 %v718
    %v1834 = vunpack.c.h.b16 %v718
    %v1835 = vunpack.c.l.b16 %v719
    %v1836 = vunpack.c.h.b16 %v719
    %v1837 = vunpack.c.l.b16 %v720
    %v1838 = vunpack.c.h.b16 %v720
    %v1839 = vunpack.c.l.b16 %v721
    %v1840 = vunpack.c.h.b16 %v721
    %v1841 = vunpack.c.l.b16 %v722
    %v1842 = vunpack.c.h.b16 %v722
    %v1843 = vunpack.c.l.b16 %v723
    %v1844 = vunpack.c.h.b16 %v723
    %v1845 = vunpack.c.l.b16 %v724
    %v1846 = vunpack.c.h.b16 %v724
    %v1847 = vunpack.c.l.b16 %v725
    %v1848 = vunpack.c.h.b16 %v725
    %v1849 = vunpack.c.l.b16 %v726
    %v1850 = vunpack.c.h.b16 %v726
    %v1851 = vunpack.c.l.b16 %v727
    %v1852 = vunpack.c.h.b16 %v727
    %v1853 = vunpack.c.l.b16 %v728
    %v1854 = vunpack.c.h.b16 %v728
    %v1855 = vunpack.c.l.b16 %v729
    %v1856 = vunpack.c.h.b16 %v729
    %v1857 = vunpack.c.l.b16 %v730
    %v1858 = vunpack.c.h.b16 %v730
    %v1859 = vunpack.c.l.b16 %v731
    %v1860 = vunpack.c.h.b16 %v731
    %v1861 = vunpack.c.l.b16 %v732
    %v1862 = vunpack.c.h.b16 %v732
    %v1863 = vunpack.c.l.b16 %v733
    %v1864 = vunpack.c.h.b16 %v733
    %v1865 = vunpack.c.l.b16 %v734
    %v1866 = vunpack.c.h.b16 %v734
    %v1867 = vunpack.c.l.b16 %v735
    %v1868 = vunpack.c.h.b16 %v735
    %v1869 = vunpack.c.l.b16 %v736
    %v1870 = vunpack.c.h.b16 %v736
    %v1871 = vunpack.c.l.b16 %v737
    %v1872 = vunpack.c.h.b16 %v737
    %v1873 = vunpack.c.l.b16 %v738
    %v1874 = vunpack.c.h.b16 %v738
    %v1875 = vunpack.c.l.b16 %v739
    %v1876 = vunpack.c.h.b16 %v739
    %v1877 = vunpack.c.l.b16 %v740
    %v1878 = vunpack.c.h.b16 %v740
    %v1879 = vunpack.c.l.b16 %v741
    %v1880 = vunpack.c.h.b16 %v741
    %v1881 = vunpack.c.l.b16 %v742
    %v1882 = vunpack.c.h.b16 %v742
    %v1883 = vunpack.c.l.b16 %v743
    %v1884 = vunpack.c.h.b16 %v743
    %v1885 = vunpack.c.l.b16 %v744
    %v1886 = vunpack.c.h.b16 %v744
    %v1887 = vunpack.c.l.b16 %v745
    %v1888 = vunpack.c.h.b16 %v745
    %v1889 = vunpack.c.l.b16 %v746
    %v1890 = vunpack.c.h.b16 %v746
    %v1891 = vunpack.c.l.b16 %v747
    %v1892 = vunpack.c.h.b16 %v747
    %v1893 = vunpack.c.l.b16 %v748
    %v1894 = vunpack.c.h.b16 %v748
    %v1895 = vunpack.c.l.b16 %v749
    %v1896 = vunpack.c.h.b16 %v749
    %v1897 = vunpack.c.l.b16 %v750
    %v1898 = vunpack.c.h.b16 %v750
    %v1899 = vunpack.c.l.b16 %v751
    %v1900 = vunpack.c.h.b16 %v751
    %v1901 = vunpack.c.l.b16 %v752
    %v1902 = vunpack.c.h.b16 %v752
    %v1903 = vunpack.c.l.b16 %v753
    %v1904 = vunpack.c.h.b16 %v753
    %v1905 = vunpack.c.l.b16 %v754
    %v1906 = vunpack.c.h.b16 %v754
    %v1907 = vpack.c.b16 %v1151, %v1139
    %v1908 = vpack.c.b16 %v1152, %v1140
    %v1909 = vpack.c.b16 %v1153, %v1141
    %v1910 = vpack.c.b16 %v1154, %v1142
    %v1911 = vpack.c.b16 %v1155, %v1143
    %v1912 = vpack.c.b16 %v1156, %v1144
    %v1913 = vpack.c.b16 %v1157, %v1145
    %v1914 = vpack.c.b16 %v1158, %v1146
    %v1915 = vpack.c.b16 %v1159, %v1147
    %v1916 = vpack.c.b16 %v1160, %v1148
    %v1917 = vpack.c.b16 %v1161, %v1149
    %v1918 = vpack.c.b16 %v1162, %v1150
    %v1919 = vpack.c.b16 %v1175, %v1163
    %v1920 = vpack.c.b16 %v1176, %v1164
    %v1921 = vpack.c.b16 %v1177, %v1165
    %v1922 = vpack.c.b16 %v1178, %v1166
    %v1923 = vpack.c.b16 %v1179, %v1167
    %v1924 = vpack.c.b16 %v1180, %v1168
    %v1925 = vpack.c.b16 %v1181, %v1169
    %v1926 = vpack.c.b16 %v1182, %v1170
    %v1927 = vpack.c.b16 %v1183, %v1171
    %v1928 = vpack.c.b16 %v1184, %v1172
    %v1929 = vpack.c.b16 %v1185, %v1173
    %v1930 = vpack.c.b16 %v1186, %v1174
    %v1931 = vpack.c.b16 %v1199, %v1187
    %v1932 = vpack.c.b16 %v1200, %v1188
    %v1933 = vpack.c.b16 %v1201, %v1189
    %v1934 = vpack.c.b16 %v1202, %v1190
    %v1935 = vpack.c.b16 %v1203, %v1191
    %v1936 = vpack.c.b16 %v1204, %v1192
    %v1937 = vpack.c.b16 %v1205, %v1193
    %v1938 = vpack.c.b16 %v1206, %v1194
    %v1939 = vpack.c.b16 %v1207, %v1195
    %v1940 = vpack.c.b16 %v1208, %v1196
    %v1941 = vpack.c.b16 %v1209, %v1197
    %v1942 = vpack.c.b16 %v1210, %v1198
    %v1943 = vpack.c.b16 %v1223, %v1211
    %v1944 = vpack.c.b16 %v1224, %v1212
    %v1945 = vpack.c.b16 %v1225, %v1213
    %v1946 = vpack.c.b16 %v1226, %v1214
    %v1947 = vpack.c.b16 %v1227, %v1215
    %v1948 = vpack.c.b16 %v1228, %v1216
    %v1949 = vpack.c.b16 %v1229, %v1217
    %v1950 = vpack.c.b16 %v1230, %v1218
    %v1951 = vpack.c.b16 %v1231, %v1219
    %v1952 = vpack.c.b16 %v1232, %v1220
    %v1953 = vpack.c.b16 %v1233, %v1221
    %v1954 = vpack.c.b16 %v1234, %v1222
    %v1955 = vpack.c.b16 %v1247, %v1235
    %v1956 = vpack.c.b16 %v1248, %v1236
    %v1957 = vpack.c.b16 %v1249, %v1237
    %v1958 = vpack.c.b16 %v1250, %v1238
    %v1959 = vpack.c.b16 %v1251, %v1239
    %v1960 = vpack.c.b16 %v1252, %v1240
    %v1961 = vpack.c.b16 %v1253, %v1241
    %v1962 = vpack.c.b16 %v1254, %v1242
    %v1963 = vpack.c.b16 %v1255, %v1243
    %v1964 = vpack.c.b16 %v1256, %v1244
    %v1965 = vpack.c.b16 %v1257, %v1245
    %v1966 = vpack.c.b16 %v1258, %v1246
    %v1967 = vpack.c.b16 %v1271, %v1259
    %v1968 = vpack.c.b16 %v1272, %v1260
    %v1969 = vpack.c.b16 %v1273, %v1261
    %v1970 = vpack.c.b16 %v1274, %v1262
    %v1971 = vpack.c.b16 %v1275, %v1263
    %v1972 = vpack.c.b16 %v1276, %v1264
    %v1973 = vpack.c.b16 %v1277, %v1265
    %v1974 = vpack.c.b16 %v1278, %v1266
    %v1975 = vpack.c.b16 %v1279, %v1267
    %v1976 = vpack.c.b16 %v1280, %v1268
    %v1977 = vpack.c.b16 %v1281, %v1269
    %v1978 = vpack.c.b16 %v1282, %v1270
    %v1979 = vpack.c.b16 %v1295, %v1283
    %v1980 = vpack.c.b16 %v1296, %v1284
    %v1981 = vpack.c.b16 %v1297, %v1285
    %v1982 = vpack.c.b16 %v1298, %v1286
    %v1983 = vpack.c.b16 %v1299, %v1287
    %v1984 = vpack.c.b16 %v1300, %v1288
    %v1985 = vpack.c.b16 %v1301, %v1289
    %v1986 = vpack.c.b16 %v1302, %v1290
    %v1987 = vpack.c.b16 %v1303, %v1291
    %v1988 = vpack.c.b16 %v1304, %v1292
    %v1989 = vpack.c.b16 %v1305, %v1293
    %v1990 = vpack.c.b16 %v1306, %v1294
    %v1991 = vpack.c.b16 %v1319, %v1307
    %v1992 = vpack.c.b16 %v1320, %v1308
    %v1993 = vpack.c.b16 %v1321, %v1309
    %v1994 = vpack.c.b16 %v1322, %v1310
    %v1995 = vpack.c.b16 %v1323, %v1311
    %v1996 = vpack.c.b16 %v1324, %v1312
    %v1997 = vpack.c.b16 %v1325, %v1313
    %v1998 = vpack.c.b16 %v1326, %v1314
    %v1999 = vpack.c.b16 %v1327, %v1315
    %v2000 = vpack.c.b16 %v1328, %v1316
    %v2001 = vpack.c.b16 %v1329, %v1317
    %v2002 = vpack.c.b16 %v1330, %v1318
    %v2003 = vpack.c.b16 %v1343, %v1331
    %v2004 = vpack.c.b16 %v1344, %v1332
    %v2005 = vpack.c.b16 %v1345, %v1333
    %v2006 = vpack.c.b16 %v1346, %v1334
    %v2007 = vpack.c.b16 %v1347, %v1335
    %v2008 = vpack.c.b16 %v1348, %v1336
    %v2009 = vpack.c.b16 %v1349, %v1337
    %v2010 = vpack.c.b16 %v1350, %v1338
    %v2011 = vpack.c.b16 %v1351, %v1339
    %v2012 = vpack.c.b16 %v1352, %v1340
    %v2013 = vpack.c.b16 %v1353, %v1341
    %v2014 = vpack.c.b16 %v1354, %v1342
    %v2015 = vpack.c.b16 %v1367, %v1355
    %v2016 = vpack.c.b16 %v1368, %v1356
    %v2017 = vpack.c.b16 %v1369, %v1357
    %v2018 = vpack.c.b16 %v1370, %v1358
    %v2019 = vpack.c.b16 %v1371, %v1359
    %v2020 = vpack.c.b16 %v1372, %v1360
    %v2021 = vpack.c.b16 %v1373, %v1361
    %v2022 = vpack.c.b16 %v1374, %v1362
    %v2023 = vpack.c.b16 %v1375, %v1363
    %v2024 = vpack.c.b16 %v1376, %v1364
    %v2025 = vpack.c.b16 %v1377, %v1365
    %v2026 = vpack.c.b16 %v1378, %v1366
    %v2027 = vpack.c.b16 %v1391, %v1379
    %v2028 = vpack.c.b16 %v1392, %v1380
    %v2029 = vpack.c.b16 %v1393, %v1381
    %v2030 = vpack.c.b16 %v1394, %v1382
    %v2031 = vpack.c.b16 %v1395, %v1383
    %v2032 = vpack.c.b16 %v1396, %v1384
    %v2033 = vpack.c.b16 %v1397, %v1385
    %v2034 = vpack.c.b16 %v1398, %v1386
    %v2035 = vpack.c.b16 %v1399, %v1387
    %v2036 = vpack.c.b16 %v1400, %v1388
    %v2037 = vpack.c.b16 %v1401, %v1389
    %v2038 = vpack.c.b16 %v1402, %v1390
    %v2039 = vpack.c.b16 %v1415, %v1403
    %v2040 = vpack.c.b16 %v1416, %v1404
    %v2041 = vpack.c.b16 %v1417, %v1405
    %v2042 = vpack.c.b16 %v1418, %v1406
    %v2043 = vpack.c.b16 %v1419, %v1407
    %v2044 = vpack.c.b16 %v1420, %v1408
    %v2045 = vpack.c.b16 %v1421, %v1409
    %v2046 = vpack.c.b16 %v1422, %v1410
    %v2047 = vpack.c.b16 %v1423, %v1411
    %v2048 = vpack.c.b16 %v1424, %v1412
    %v2049 = vpack.c.b16 %v1425, %v1413
    %v2050 = vpack.c.b16 %v1426, %v1414
    %v2051 = vpack.c.b16 %v1439, %v1427
    %v2052 = vpack.c.b16 %v1440, %v1428
    %v2053 = vpack.c.b16 %v1441, %v1429
    %v2054 = vpack.c.b16 %v1442, %v1430
    %v2055 = vpack.c.b16 %v1443, %v1431
    %v2056 = vpack.c.b16 %v1444, %v1432
    %v2057 = vpack.c.b16 %v1445, %v1433
    %v2058 = vpack.c.b16 %v1446, %v1434
    %v2059 = vpack.c.b16 %v1447, %v1435
    %v2060 = vpack.c.b16 %v1448, %v1436
    %v2061 = vpack.c.b16 %v1449, %v1437
    %v2062 = vpack.c.b16 %v1450, %v1438
    %v2063 = vpack.c.b16 %v1463, %v1451
    %v2064 = vpack.c.b16 %v1464, %v1452
    %v2065 = vpack.c.b16 %v1465, %v1453
    %v2066 = vpack.c.b16 %v1466, %v1454
    %v2067 = vpack.c.b16 %v1467, %v1455
    %v2068 = vpack.c.b16 %v1468, %v1456
    %v2069 = vpack.c.b16 %v1469, %v1457
    %v2070 = vpack.c.b16 %v1470, %v1458
    %v2071 = vpack.c.b16 %v1471, %v1459
    %v2072 = vpack.c.b16 %v1472, %v1460
    %v2073 = vpack.c.b16 %v1473, %v1461
    %v2074 = vpack.c.b16 %v1474, %v1462
    %v2075 = vpack.c.b16 %v1487, %v1475
    %v2076 = vpack.c.b16 %v1488, %v1476
    %v2077 = vpack.c.b16 %v1489, %v1477
    %v2078 = vpack.c.b16 %v1490, %v1478
    %v2079 = vpack.c.b16 %v1491, %v1479
    %v2080 = vpack.c.b16 %v1492, %v1480
    %v2081 = vpack.c.b16 %v1493, %v1481
    %v2082 = vpack.c.b16 %v1494, %v1482
    %v2083 = vpack.c.b16 %v1495, %v1483
    %v2084 = vpack.c.b16 %v1496, %v1484
    %v2085 = vpack.c.b16 %v1497, %v1485
    %v2086 = vpack.c.b16 %v1498, %v1486
    %v2087 = vpack.c.b16 %v1511, %v1499
    %v2088 = vpack.c.b16 %v1512, %v1500
    %v2089 = vpack.c.b16 %v1513, %v1501
    %v2090 = vpack.c.b16 %v1514, %v1502
    %v2091 = vpack.c.b16 %v1515, %v1503
    %v2092 = vpack.c.b16 %v1516, %v1504
    %v2093 = vpack.c.b16 %v1517, %v1505
    %v2094 = vpack.c.b16 %v1518, %v1506
    %v2095 = vpack.c.b16 %v1519, %v1507
    %v2096 = vpack.c.b16 %v1520, %v1508
    %v2097 = vpack.c.b16 %v1521, %v1509
    %v2098 = vpack.c.b16 %v1522, %v1510
    %v2099 = vpack.c.b16 %v1535, %v1523
    %v2100 = vpack.c.b16 %v1536, %v1524
    %v2101 = vpack.c.b16 %v1537, %v1525
    %v2102 = vpack.c.b16 %v1538, %v1526
    %v2103 = vpack.c.b16 %v1539, %v1527
    %v2104 = vpack.c.b16 %v1540, %v1528
    %v2105 = vpack.c.b16 %v1541, %v1529
    %v2106 = vpack.c.b16 %v1542, %v1530
    %v2107 = vpack.c.b16 %v1543, %v1531
    %v2108 = vpack.c.b16 %v1544, %v1532
    %v2109 = vpack.c.b16 %v1545, %v1533
    %v2110 = vpack.c.b16 %v1546, %v1534
    %v2111 = vpack.c.b16 %v1559, %v1547
    %v2112 = vpack.c.b16 %v1560, %v1548
    %v2113 = vpack.c.b16 %v1561, %v1549
    %v2114 = vpack.c.b16 %v1562, %v1550
    %v2115 = vpack.c.b16 %v1563, %v1551
    %v2116 = vpack.c.b16 %v1564, %v1552
    %v2117 = vpack.c.b16 %v1565, %v1553
    %v2118 = vpack.c.b16 %v1566, %v1554
    %v2119 = vpack.c.b16 %v1567, %v1555
    %v2120 = vpack.c.b16 %v1568, %v1556
    %v2121 = vpack.c.b16 %v1569, %v1557
    %v2122 = vpack.c.b16 %v1570, %v1558
    %v2123 = vpack.c.b16 %v1583, %v1571
    %v2124 = vpack.c.b16 %v1584, %v1572
    %v2125 = vpack.c.b16 %v1585, %v1573
    %v2126 = vpack.c.b16 %v1586, %v1574
    %v2127 = vpack.c.b16 %v1587, %v1575
    %v2128 = vpack.c.b16 %v1588, %v1576
    %v2129 = vpack.c.b16 %v1589, %v1577
    %v2130 = vpack.c.b16 %v1590, %v1578
    %v2131 = vpack.c.b16 %v1591, %v1579
    %v2132 = vpack.c.b16 %v1592, %v1580
    %v2133 = vpack.c.b16 %v1593, %v1581
    %v2134 = vpack.c.b16 %v1594, %v1582
    %v2135 = vpack.c.b16 %v1607, %v1595
    %v2136 = vpack.c.b16 %v1608, %v1596
    %v2137 = vpack.c.b16 %v1609, %v1597
    %v2138 = vpack.c.b16 %v1610, %v1598
    %v2139 = vpack.c.b16 %v1611, %v1599
    %v2140 = vpack.c.b16 %v1612, %v1600
    %v2141 = vpack.c.b16 %v1613, %v1601
    %v2142 = vpack.c.b16 %v1614, %v1602
    %v2143 = vpack.c.b16 %v1615, %v1603
    %v2144 = vpack.c.b16 %v1616, %v1604
    %v2145 = vpack.c.b16 %v1617, %v1605
    %v2146 = vpack.c.b16 %v1618, %v1606
    %v2147 = vpack.c.b16 %v1631, %v1619
    %v2148 = vpack.c.b16 %v1632, %v1620
    %v2149 = vpack.c.b16 %v1633, %v1621
    %v2150 = vpack.c.b16 %v1634, %v1622
    %v2151 = vpack.c.b16 %v1635, %v1623
    %v2152 = vpack.c.b16 %v1636, %v1624
    %v2153 = vpack.c.b16 %v1637, %v1625
    %v2154 = vpack.c.b16 %v1638, %v1626
    %v2155 = vpack.c.b16 %v1639, %v1627
    %v2156 = vpack.c.b16 %v1640, %v1628
    %v2157 = vpack.c.b16 %v1641, %v1629
    %v2158 = vpack.c.b16 %v1642, %v1630
    %v2159 = vpack.c.b16 %v1655, %v1643
    %v2160 = vpack.c.b16 %v1656, %v1644
    %v2161 = vpack.c.b16 %v1657, %v1645
    %v2162 = vpack.c.b16 %v1658, %v1646
    %v2163 = vpack.c.b16 %v1659, %v1647
    %v2164 = vpack.c.b16 %v1660, %v1648
    %v2165 = vpack.c.b16 %v1661, %v1649
    %v2166 = vpack.c.b16 %v1662, %v1650
    %v2167 = vpack.c.b16 %v1663, %v1651
    %v2168 = vpack.c.b16 %v1664, %v1652
    %v2169 = vpack.c.b16 %v1665, %v1653
    %v2170 = vpack.c.b16 %v1666, %v1654
    %v2171 = vpack.c.b16 %v1679, %v1667
    %v2172 = vpack.c.b16 %v1680, %v1668
    %v2173 = vpack.c.b16 %v1681, %v1669
    %v2174 = vpack.c.b16 %v1682, %v1670
    %v2175 = vpack.c.b16 %v1683, %v1671
    %v2176 = vpack.c.b16 %v1684, %v1672
    %v2177 = vpack.c.b16 %v1685, %v1673
    %v2178 = vpack.c.b16 %v1686, %v1674
    %v2179 = vpack.c.b16 %v1687, %v1675
    %v2180 = vpack.c.b16 %v1688, %v1676
    %v2181 = vpack.c.b16 %v1689, %v1677
    %v2182 = vpack.c.b16 %v1690, %v1678
    %v2183 = vpack.c.b16 %v1703, %v1691
    %v2184 = vpack.c.b16 %v1704, %v1692
    %v2185 = vpack.c.b16 %v1705, %v1693
    %v2186 = vpack.c.b16 %v1706, %v1694
    %v2187 = vpack.c.b16 %v1707, %v1695
    %v2188 = vpack.c.b16 %v1708, %v1696
    %v2189 = vpack.c.b16 %v1709, %v1697
    %v2190 = vpack.c.b16 %v1710, %v1698
    %v2191 = vpack.c.b16 %v1711, %v1699
    %v2192 = vpack.c.b16 %v1712, %v1700
    %v2193 = vpack.c.b16 %v1713, %v1701
    %v2194 = vpack.c.b16 %v1714, %v1702
    %v2195 = vpack.c.b16 %v1727, %v1715
    %v2196 = vpack.c.b16 %v1728, %v1716
    %v2197 = vpack.c.b16 %v1729, %v1717
    %v2198 = vpack.c.b16 %v1730, %v1718
    %v2199 = vpack.c.b16 %v1731, %v1719
    %v2200 = vpack.c.b16 %v1732, %v1720
    %v2201 = vpack.c.b16 %v1733, %v1721
    %v2202 = vpack.c.b16 %v1734, %v1722
    %v2203 = vpack.c.b16 %v1735, %v1723
    %v2204 = vpack.c.b16 %v1736, %v1724
    %v2205 = vpack.c.b16 %v1737, %v1725
    %v2206 = vpack.c.b16 %v1738, %v1726
    %v2207 = vpack.c.b16 %v1751, %v1739
    %v2208 = vpack.c.b16 %v1752, %v1740
    %v2209 = vpack.c.b16 %v1753, %v1741
    %v2210 = vpack.c.b16 %v1754, %v1742
    %v2211 = vpack.c.b16 %v1755, %v1743
    %v2212 = vpack.c.b16 %v1756, %v1744
    %v2213 = vpack.c.b16 %v1757, %v1745
    %v2214 = vpack.c.b16 %v1758, %v1746
    %v2215 = vpack.c.b16 %v1759, %v1747
    %v2216 = vpack.c.b16 %v1760, %v1748
    %v2217 = vpack.c.b16 %v1761, %v1749
    %v2218 = vpack.c.b16 %v1762, %v1750
    %v2219 = vpack.c.b16 %v1775, %v1763
    %v2220 = vpack.c.b16 %v1776, %v1764
    %v2221 = vpack.c.b16 %v1777, %v1765
    %v2222 = vpack.c.b16 %v1778, %v1766
    %v2223 = vpack.c.b16 %v1779, %v1767
    %v2224 = vpack.c.b16 %v1780, %v1768
    %v2225 = vpack.c.b16 %v1781, %v1769
    %v2226 = vpack.c.b16 %v1782, %v1770
    %v2227 = vpack.c.b16 %v1783, %v1771
    %v2228 = vpack.c.b16 %v1784, %v1772
    %v2229 = vpack.c.b16 %v1785, %v1773
    %v2230 = vpack.c.b16 %v1786, %v1774
    %v2231 = vpack.c.b16 %v1799, %v1787
    %v2232 = vpack.c.b16 %v1800, %v1788
    %v2233 = vpack.c.b16 %v1801, %v1789
    %v2234 = vpack.c.b16 %v1802, %v1790
    %v2235 = vpack.c.b16 %v1803, %v1791
    %v2236 = vpack.c.b16 %v1804, %v1792
    %v2237 = vpack.c.b16 %v1805, %v1793
    %v2238 = vpack.c.b16 %v1806, %v1794
    %v2239 = vpack.c.b16 %v1807, %v1795
    %v2240 = vpack.c.b16 %v1808, %v1796
    %v2241 = vpack.c.b16 %v1809, %v1797
    %v2242 = vpack.c.b16 %v1810, %v1798
    %v2243 = vpack.c.b16 %v1823, %v1811
    %v2244 = vpack.c.b16 %v1824, %v1812
    %v2245 = vpack.c.b16 %v1825, %v1813
    %v2246 = vpack.c.b16 %v1826, %v1814
    %v2247 = vpack.c.b16 %v1827, %v1815
    %v2248 = vpack.c.b16 %v1828, %v1816
    %v2249 = vpack.c.b16 %v1829, %v1817
    %v2250 = vpack.c.b16 %v1830, %v1818
    %v2251 = vpack.c.b16 %v1831, %v1819
    %v2252 = vpack.c.b16 %v1832, %v1820
    %v2253 = vpack.c.b16 %v1833, %v1821
    %v2254 = vpack.c.b16 %v1834, %v1822
    %v2255 = vpack.c.b16 %v1847, %v1835
    %v2256 = vpack.c.b16 %v1848, %v1836
    %v2257 = vpack.c.b16 %v1849, %v1837
    %v2258 = vpack.c.b16 %v1850, %v1838
    %v2259 = vpack.c.b16 %v1851, %v1839
    %v2260 = vpack.c.b16 %v1852, %v1840
    %v2261 = vpack.c.b16 %v1853, %v1841
    %v2262 = vpack.c.b16 %v1854, %v1842
    %v2263 = vpack.c.b16 %v1855, %v1843
    %v2264 = vpack.c.b16 %v1856, %v1844
    %v2265 = vpack.c.b16 %v1857, %v1845
    %v2266 = vpack.c.b16 %v1858, %v1846
    %v2267 = vpack.c.b16 %v1871, %v1859
    %v2268 = vpack.c.b16 %v1872, %v1860
    %v2269 = vpack.c.b16 %v1873, %v1861
    %v2270 = vpack.c.b16 %v1874, %v1862
    %v2271 = vpack.c.b16 %v1875, %v1863
    %v2272 = vpack.c.b16 %v1876, %v1864
    %v2273 = vpack.c.b16 %v1877, %v1865
    %v2274 = vpack.c.b16 %v1878, %v1866
    %v2275 = vpack.c.b16 %v1879, %v1867
    %v2276 = vpack.c.b16 %v1880, %v1868
    %v2277 = vpack.c.b16 %v1881, %v1869
    %v2278 = vpack.c.b16 %v1882, %v1870
    %v2279 = vpack.c.b16 %v1895, %v1883
    %v2280 = vpack.c.b16 %v1896, %v1884
    %v2281 = vpack.c.b16 %v1897, %v1885
    %v2282 = vpack.c.b16 %v1898, %v1886
    %v2283 = vpack.c.b16 %v1899, %v1887
    %v2284 = vpack.c.b16 %v1900, %v1888
    %v2285 = vpack.c.b16 %v1901, %v1889
    %v2286 = vpack.c.b16 %v1902, %v1890
    %v2287 = vpack.c.b16 %v1903, %v1891
    %v2288 = vpack.c.b16 %v1904, %v1892
    %v2289 = vpack.c.b16 %v1905, %v1893
    %v2290 = vpack.c.b16 %v1906, %v1894
    %2675 = vmatprep.subr.bf16.mxu0 %v1908
    %2676 = vmatpush1.bf16.msra.mxu0 %v1907
    %2677 = vmatprep.subr.bf16.mxu0 %v1920
    %2678 = vmatpush1.bf16.msra.mxu0 %v1919
    %2679 = vmatprep.subr.bf16.mxu0 %v1932
    %2680 = vmatpush1.bf16.msra.mxu0 %v1931
    %2681 = vmatprep.subr.bf16.mxu0 %v1944
    %2682 = vmatpush1.bf16.msra.mxu0 %v1943
    %2683 = vmatprep.subr.bf16.mxu0 %v1956
    %2684 = vmatpush1.bf16.msra.mxu0 %v1955
    %2685 = vmatprep.subr.bf16.mxu0 %v1968
    %2686 = vmatpush1.bf16.msra.mxu0 %v1967
    %2687 = vmatprep.subr.bf16.mxu0 %v1980
    %2688 = vmatpush1.bf16.msra.mxu0 %v1979
    %2689 = vmatprep.subr.bf16.mxu0 %v1992
    %2690 = vmatpush1.bf16.msra.mxu0 %v1991
    %2691 = vmatprep.subr.bf16.mxu0 %v2004
    %2692 = vmatpush1.bf16.msra.mxu0 %v2003
    %2693 = vmatprep.subr.bf16.mxu0 %v2016
    %2694 = vmatpush1.bf16.msra.mxu0 %v2015
    %2695 = vmatprep.subr.bf16.mxu0 %v2028
    %2696 = vmatpush1.bf16.msra.mxu0 %v2027
    %2697 = vmatprep.subr.bf16.mxu0 %v2040
    %2698 = vmatpush1.bf16.msra.mxu0 %v2039
    %2699 = vmatprep.subr.bf16.mxu0 %v2052
    %2700 = vmatpush1.bf16.msra.mxu0 %v2051
    %2701 = vmatprep.subr.bf16.mxu0 %v2064
    %2702 = vmatpush1.bf16.msra.mxu0 %v2063
    %2703 = vmatprep.subr.bf16.mxu0 %v2076
    %2704 = vmatpush1.bf16.msra.mxu0 %v2075
    %2705 = vmatprep.subr.bf16.mxu0 %v2088
    %2706 = vmatpush1.bf16.msra.mxu0 %v2087
    %2707 = vmatprep.mubr.bf16.mxu0 %v368
    %2708 = vmatmul.mubr.bf16.gmra.mrb[0].mxu0 %v367
    %v2709 = vpop.f32.mrb[0].mxu0
    %v2710 = vadd.f32 0.0, %v2709
    %v2711 = vpop.f32.mrb[0].mxu0
    %v2712 = vadd.f32 0.0, %v2711
    %v2713 = vpop.f32.mrb[0].mxu0
    %v2714 = vpop.f32.mrb[0].mxu0
    %2715 = vdwg.mxu0
    %2716 = vmatprep.subr.bf16.mxu0 %v2100
    %2717 = vmatpush1.bf16.msra.mxu0 %v2099
    %2718 = vmatprep.subr.bf16.mxu0 %v2112
    %2719 = vmatpush1.bf16.msra.mxu0 %v2111
    %2720 = vmatprep.subr.bf16.mxu0 %v2124
    %2721 = vmatpush1.bf16.msra.mxu0 %v2123
    %2722 = vmatprep.subr.bf16.mxu0 %v2136
    %2723 = vmatpush1.bf16.msra.mxu0 %v2135
    %2724 = vmatprep.subr.bf16.mxu0 %v2148
    %2725 = vmatpush1.bf16.msra.mxu0 %v2147
    %2726 = vmatprep.subr.bf16.mxu0 %v2160
    %2727 = vmatpush1.bf16.msra.mxu0 %v2159
    %2728 = vmatprep.subr.bf16.mxu0 %v2172
    %2729 = vmatpush1.bf16.msra.mxu0 %v2171
    %2730 = vmatprep.subr.bf16.mxu0 %v2184
    %2731 = vmatpush1.bf16.msra.mxu0 %v2183
    %2732 = vmatprep.subr.bf16.mxu0 %v2196
    %2733 = vmatpush1.bf16.msra.mxu0 %v2195
    %2734 = vmatprep.subr.bf16.mxu0 %v2208
    %2735 = vmatpush1.bf16.msra.mxu0 %v2207
    %2736 = vmatprep.subr.bf16.mxu0 %v2220
    %2737 = vmatpush1.bf16.msra.mxu0 %v2219
    %2738 = vmatprep.subr.bf16.mxu0 %v2232
    %2739 = vmatpush1.bf16.msra.mxu0 %v2231
    %2740 = vmatprep.subr.bf16.mxu0 %v2244
    %2741 = vmatpush1.bf16.msra.mxu0 %v2243
    %2742 = vmatprep.subr.bf16.mxu0 %v2256
    %2743 = vmatpush1.bf16.msra.mxu0 %v2255
    %2744 = vmatprep.subr.bf16.mxu0 %v2268
    %2745 = vmatpush1.bf16.msra.mxu0 %v2267
    %2746 = vmatprep.subr.bf16.mxu0 %v2280
    %2747 = vmatpush1.bf16.msra.mxu0 %v2279
    %2748 = vmatprep.mubr.bf16.mxu0 %v370
    %2749 = vmatmul.mubr.bf16.gmra.mrb[0].mxu0 %v369
    %v2750 = vpop.f32.mrb[0].mxu0
    %v2751 = vadd.f32 %v2710, %v2750
    %v2752 = vpop.f32.mrb[0].mxu0
    %v2753 = vadd.f32 %v2712, %v2752
    %v2754 = vpop.f32.mrb[0].mxu0
    %v2755 = vpop.f32.mrb[0].mxu0
    %2756 = vdwg.mxu0
    %2757 = vmatprep.subr.bf16.mxu0 %v1910
    %2758 = vmatpush1.bf16.msra.mxu0 %v1909
    %2759 = vmatprep.subr.bf16.mxu0 %v1922
    %2760 = vmatpush1.bf16.msra.mxu0 %v1921
    %2761 = vmatprep.subr.bf16.mxu0 %v1934
    %2762 = vmatpush1.bf16.msra.mxu0 %v1933
    %2763 = vmatprep.subr.bf16.mxu0 %v1946
    %2764 = vmatpush1.bf16.msra.mxu0 %v1945
    %2765 = vmatprep.subr.bf16.mxu0 %v1958
    %2766 = vmatpush1.bf16.msra.mxu0 %v1957
    %2767 = vmatprep.subr.bf16.mxu0 %v1970
    %2768 = vmatpush1.bf16.msra.mxu0 %v1969
    %2769 = vmatprep.subr.bf16.mxu0 %v1982
    %2770 = vmatpush1.bf16.msra.mxu0 %v1981
    %2771 = vmatprep.subr.bf16.mxu0 %v1994
    %2772 = vmatpush1.bf16.msra.mxu0 %v1993
    %2773 = vmatprep.subr.bf16.mxu0 %v2006
    %2774 = vmatpush1.bf16.msra.mxu0 %v2005
    %2775 = vmatprep.subr.bf16.mxu0 %v2018
    %2776 = vmatpush1.bf16.msra.mxu0 %v2017
    %2777 = vmatprep.subr.bf16.mxu0 %v2030
    %2778 = vmatpush1.bf16.msra.mxu0 %v2029
    %2779 = vmatprep.subr.bf16.mxu0 %v2042
    %2780 = vmatpush1.bf16.msra.mxu0 %v2041
    %2781 = vmatprep.subr.bf16.mxu0 %v2054
    %2782 = vmatpush1.bf16.msra.mxu0 %v2053
    %2783 = vmatprep.subr.bf16.mxu0 %v2066
    %2784 = vmatpush1.bf16.msra.mxu0 %v2065
    %2785 = vmatprep.subr.bf16.mxu0 %v2078
    %2786 = vmatpush1.bf16.msra.mxu0 %v2077
    %2787 = vmatprep.subr.bf16.mxu0 %v2090
    %2788 = vmatpush1.bf16.msra.mxu0 %v2089
    %2789 = vmatprep.mubr.bf16.mxu0 %v368
    %2790 = vmatmul.mubr.bf16.gmra.mrb[0].mxu0 %v367
    %v2791 = vpop.f32.mrb[0].mxu0
    %v2792 = vadd.f32 0.0, %v2791
    %v2793 = vpop.f32.mrb[0].mxu0
    %v2794 = vadd.f32 0.0, %v2793
    %v2795 = vpop.f32.mrb[0].mxu0
    %v2796 = vpop.f32.mrb[0].mxu0
    %2797 = vdwg.mxu0
    %2798 = vmatprep.subr.bf16.mxu0 %v2102
    %2799 = vmatpush1.bf16.msra.mxu0 %v2101
    %2800 = vmatprep.subr.bf16.mxu0 %v2114
    %2801 = vmatpush1.bf16.msra.mxu0 %v2113
    %2802 = vmatprep.subr.bf16.mxu0 %v2126
    %2803 = vmatpush1.bf16.msra.mxu0 %v2125
    %2804 = vmatprep.subr.bf16.mxu0 %v2138
    %2805 = vmatpush1.bf16.msra.mxu0 %v2137
    %2806 = vmatprep.subr.bf16.mxu0 %v2150
    %2807 = vmatpush1.bf16.msra.mxu0 %v2149
    %2808 = vmatprep.subr.bf16.mxu0 %v2162
    %2809 = vmatpush1.bf16.msra.mxu0 %v2161
    %2810 = vmatprep.subr.bf16.mxu0 %v2174
    %2811 = vmatpush1.bf16.msra.mxu0 %v2173
    %2812 = vmatprep.subr.bf16.mxu0 %v2186
    %2813 = vmatpush1.bf16.msra.mxu0 %v2185
    %2814 = vmatprep.subr.bf16.mxu0 %v2198
    %2815 = vmatpush1.bf16.msra.mxu0 %v2197
    %2816 = vmatprep.subr.bf16.mxu0 %v2210
    %2817 = vmatpush1.bf16.msra.mxu0 %v2209
    %2818 = vmatprep.subr.bf16.mxu0 %v2222
    %2819 = vmatpush1.bf16.msra.mxu0 %v2221
    %2820 = vmatprep.subr.bf16.mxu0 %v2234
    %2821 = vmatpush1.bf16.msra.mxu0 %v2233
    %2822 = vmatprep.subr.bf16.mxu0 %v2246
    %2823 = vmatpush1.bf16.msra.mxu0 %v2245
    %2824 = vmatprep.subr.bf16.mxu0 %v2258
    %2825 = vmatpush1.bf16.msra.mxu0 %v2257
    %2826 = vmatprep.subr.bf16.mxu0 %v2270
    %2827 = vmatpush1.bf16.msra.mxu0 %v2269
    %2828 = vmatprep.subr.bf16.mxu0 %v2282
    %2829 = vmatpush1.bf16.msra.mxu0 %v2281
    %2830 = vmatprep.mubr.bf16.mxu0 %v370
    %2831 = vmatmul.mubr.bf16.gmra.mrb[0].mxu0 %v369
    %v2832 = vpop.f32.mrb[0].mxu0
    %v2833 = vadd.f32 %v2792, %v2832
    %v2834 = vpop.f32.mrb[0].mxu0
    %v2835 = vadd.f32 %v2794, %v2834
    %v2836 = vpop.f32.mrb[0].mxu0
    %v2837 = vpop.f32.mrb[0].mxu0
    %2838 = vdwg.mxu0
    %2839 = vmatprep.subr.bf16.mxu0 %v1912
    %2840 = vmatpush1.bf16.msra.mxu0 %v1911
    %2841 = vmatprep.subr.bf16.mxu0 %v1924
    %2842 = vmatpush1.bf16.msra.mxu0 %v1923
    %2843 = vmatprep.subr.bf16.mxu0 %v1936
    %2844 = vmatpush1.bf16.msra.mxu0 %v1935
    %2845 = vmatprep.subr.bf16.mxu0 %v1948
    %2846 = vmatpush1.bf16.msra.mxu0 %v1947
    %2847 = vmatprep.subr.bf16.mxu0 %v1960
    %2848 = vmatpush1.bf16.msra.mxu0 %v1959
    %2849 = vmatprep.subr.bf16.mxu0 %v1972
    %2850 = vmatpush1.bf16.msra.mxu0 %v1971
    %2851 = vmatprep.subr.bf16.mxu0 %v1984
    %2852 = vmatpush1.bf16.msra.mxu0 %v1983
    %2853 = vmatprep.subr.bf16.mxu0 %v1996
    %2854 = vmatpush1.bf16.msra.mxu0 %v1995
    %2855 = vmatprep.subr.bf16.mxu0 %v2008
    %2856 = vmatpush1.bf16.msra.mxu0 %v2007
    %2857 = vmatprep.subr.bf16.mxu0 %v2020
    %2858 = vmatpush1.bf16.msra.mxu0 %v2019
    %2859 = vmatprep.subr.bf16.mxu0 %v2032
    %2860 = vmatpush1.bf16.msra.mxu0 %v2031
    %2861 = vmatprep.subr.bf16.mxu0 %v2044
    %2862 = vmatpush1.bf16.msra.mxu0 %v2043
    %2863 = vmatprep.subr.bf16.mxu0 %v2056
    %2864 = vmatpush1.bf16.msra.mxu0 %v2055
    %2865 = vmatprep.subr.bf16.mxu0 %v2068
    %2866 = vmatpush1.bf16.msra.mxu0 %v2067
    %2867 = vmatprep.subr.bf16.mxu0 %v2080
    %2868 = vmatpush1.bf16.msra.mxu0 %v2079
    %2869 = vmatprep.subr.bf16.mxu0 %v2092
    %2870 = vmatpush1.bf16.msra.mxu0 %v2091
    %2871 = vmatprep.mubr.bf16.mxu0 %v368
    %2872 = vmatmul.mubr.bf16.gmra.mrb[0].mxu0 %v367
    %v2873 = vpop.f32.mrb[0].mxu0
    %v2874 = vadd.f32 0.0, %v2873
    %v2875 = vpop.f32.mrb[0].mxu0
    %v2876 = vadd.f32 0.0, %v2875
    %v2877 = vpop.f32.mrb[0].mxu0
    %v2878 = vpop.f32.mrb[0].mxu0
    %2879 = vdwg.mxu0
    %2880 = vmatprep.subr.bf16.mxu0 %v2104
    %2881 = vmatpush1.bf16.msra.mxu0 %v2103
    %2882 = vmatprep.subr.bf16.mxu0 %v2116
    %2883 = vmatpush1.bf16.msra.mxu0 %v2115
    %2884 = vmatprep.subr.bf16.mxu0 %v2128
    %2885 = vmatpush1.bf16.msra.mxu0 %v2127
    %2886 = vmatprep.subr.bf16.mxu0 %v2140
    %2887 = vmatpush1.bf16.msra.mxu0 %v2139
    %2888 = vmatprep.subr.bf16.mxu0 %v2152
    %2889 = vmatpush1.bf16.msra.mxu0 %v2151
    %2890 = vmatprep.subr.bf16.mxu0 %v2164
    %2891 = vmatpush1.bf16.msra.mxu0 %v2163
    %2892 = vmatprep.subr.bf16.mxu0 %v2176
    %2893 = vmatpush1.bf16.msra.mxu0 %v2175
    %2894 = vmatprep.subr.bf16.mxu0 %v2188
    %2895 = vmatpush1.bf16.msra.mxu0 %v2187
    %2896 = vmatprep.subr.bf16.mxu0 %v2200
    %2897 = vmatpush1.bf16.msra.mxu0 %v2199
    %2898 = vmatprep.subr.bf16.mxu0 %v2212
    %2899 = vmatpush1.bf16.msra.mxu0 %v2211
    %2900 = vmatprep.subr.bf16.mxu0 %v2224
    %2901 = vmatpush1.bf16.msra.mxu0 %v2223
    %2902 = vmatprep.subr.bf16.mxu0 %v2236
    %2903 = vmatpush1.bf16.msra.mxu0 %v2235
    %2904 = vmatprep.subr.bf16.mxu0 %v2248
    %2905 = vmatpush1.bf16.msra.mxu0 %v2247
    %2906 = vmatprep.subr.bf16.mxu0 %v2260
    %2907 = vmatpush1.bf16.msra.mxu0 %v2259
    %2908 = vmatprep.subr.bf16.mxu0 %v2272
    %2909 = vmatpush1.bf16.msra.mxu0 %v2271
    %2910 = vmatprep.subr.bf16.mxu0 %v2284
    %2911 = vmatpush1.bf16.msra.mxu0 %v2283
    %2912 = vmatprep.mubr.bf16.mxu0 %v370
    %2913 = vmatmul.mubr.bf16.gmra.mrb[0].mxu0 %v369
    %v2914 = vpop.f32.mrb[0].mxu0
    %v2915 = vadd.f32 %v2874, %v2914
    %v2916 = vpop.f32.mrb[0].mxu0
    %v2917 = vadd.f32 %v2876, %v2916
    %v2918 = vpop.f32.mrb[0].mxu0
    %v2919 = vpop.f32.mrb[0].mxu0
    %2920 = vdwg.mxu0
    %2921 = vmatprep.subr.bf16.mxu0 %v1914
    %2922 = vmatpush1.bf16.msra.mxu0 %v1913
    %2923 = vmatprep.subr.bf16.mxu0 %v1926
    %2924 = vmatpush1.bf16.msra.mxu0 %v1925
    %2925 = vmatprep.subr.bf16.mxu0 %v1938
    %2926 = vmatpush1.bf16.msra.mxu0 %v1937
    %2927 = vmatprep.subr.bf16.mxu0 %v1950
    %2928 = vmatpush1.bf16.msra.mxu0 %v1949
    %2929 = vmatprep.subr.bf16.mxu0 %v1962
    %2930 = vmatpush1.bf16.msra.mxu0 %v1961
    %2931 = vmatprep.subr.bf16.mxu0 %v1974
    %2932 = vmatpush1.bf16.msra.mxu0 %v1973
    %2933 = vmatprep.subr.bf16.mxu0 %v1986
    %2934 = vmatpush1.bf16.msra.mxu0 %v1985
    %2935 = vmatprep.subr.bf16.mxu0 %v1998
    %2936 = vmatpush1.bf16.msra.mxu0 %v1997
    %2937 = vmatprep.subr.bf16.mxu0 %v2010
    %2938 = vmatpush1.bf16.msra.mxu0 %v2009
    %2939 = vmatprep.subr.bf16.mxu0 %v2022
    %2940 = vmatpush1.bf16.msra.mxu0 %v2021
    %2941 = vmatprep.subr.bf16.mxu0 %v2034
    %2942 = vmatpush1.bf16.msra.mxu0 %v2033
    %2943 = vmatprep.subr.bf16.mxu0 %v2046
    %2944 = vmatpush1.bf16.msra.mxu0 %v2045
    %2945 = vmatprep.subr.bf16.mxu0 %v2058
    %2946 = vmatpush1.bf16.msra.mxu0 %v2057
    %2947 = vmatprep.subr.bf16.mxu0 %v2070
    %2948 = vmatpush1.bf16.msra.mxu0 %v2069
    %2949 = vmatprep.subr.bf16.mxu0 %v2082
    %2950 = vmatpush1.bf16.msra.mxu0 %v2081
    %2951 = vmatprep.subr.bf16.mxu0 %v2094
    %2952 = vmatpush1.bf16.msra.mxu0 %v2093
    %2953 = vmatprep.mubr.bf16.mxu0 %v368
    %2954 = vmatmul.mubr.bf16.gmra.mrb[0].mxu0 %v367
    %v2955 = vpop.f32.mrb[0].mxu0
    %v2956 = vadd.f32 0.0, %v2955
    %v2957 = vpop.f32.mrb[0].mxu0
    %v2958 = vadd.f32 0.0, %v2957
    %v2959 = vpop.f32.mrb[0].mxu0
    %v2960 = vpop.f32.mrb[0].mxu0
    %2961 = vdwg.mxu0
    %2962 = vmatprep.subr.bf16.mxu0 %v2106
    %2963 = vmatpush1.bf16.msra.mxu0 %v2105
    %2964 = vmatprep.subr.bf16.mxu0 %v2118
    %2965 = vmatpush1.bf16.msra.mxu0 %v2117
    %2966 = vmatprep.subr.bf16.mxu0 %v2130
    %2967 = vmatpush1.bf16.msra.mxu0 %v2129
    %2968 = vmatprep.subr.bf16.mxu0 %v2142
    %2969 = vmatpush1.bf16.msra.mxu0 %v2141
    %2970 = vmatprep.subr.bf16.mxu0 %v2154
    %2971 = vmatpush1.bf16.msra.mxu0 %v2153
    %2972 = vmatprep.subr.bf16.mxu0 %v2166
    %2973 = vmatpush1.bf16.msra.mxu0 %v2165
    %2974 = vmatprep.subr.bf16.mxu0 %v2178
    %2975 = vmatpush1.bf16.msra.mxu0 %v2177
    %2976 = vmatprep.subr.bf16.mxu0 %v2190
    %2977 = vmatpush1.bf16.msra.mxu0 %v2189
    %2978 = vmatprep.subr.bf16.mxu0 %v2202
    %2979 = vmatpush1.bf16.msra.mxu0 %v2201
    %2980 = vmatprep.subr.bf16.mxu0 %v2214
    %2981 = vmatpush1.bf16.msra.mxu0 %v2213
    %2982 = vmatprep.subr.bf16.mxu0 %v2226
    %2983 = vmatpush1.bf16.msra.mxu0 %v2225
    %2984 = vmatprep.subr.bf16.mxu0 %v2238
    %2985 = vmatpush1.bf16.msra.mxu0 %v2237
    %2986 = vmatprep.subr.bf16.mxu0 %v2250
    %2987 = vmatpush1.bf16.msra.mxu0 %v2249
    %2988 = vmatprep.subr.bf16.mxu0 %v2262
    %2989 = vmatpush1.bf16.msra.mxu0 %v2261
    %2990 = vmatprep.subr.bf16.mxu0 %v2274
    %2991 = vmatpush1.bf16.msra.mxu0 %v2273
    %2992 = vmatprep.subr.bf16.mxu0 %v2286
    %2993 = vmatpush1.bf16.msra.mxu0 %v2285
    %2994 = vmatprep.mubr.bf16.mxu0 %v370
    %2995 = vmatmul.mubr.bf16.gmra.mrb[0].mxu0 %v369
    %v2996 = vpop.f32.mrb[0].mxu0
    %v2997 = vadd.f32 %v2956, %v2996
    %v2998 = vpop.f32.mrb[0].mxu0
    %v2999 = vadd.f32 %v2958, %v2998
    %v3000 = vpop.f32.mrb[0].mxu0
    %v3001 = vpop.f32.mrb[0].mxu0
    %3002 = vdwg.mxu0
    %3003 = vmatprep.subr.bf16.mxu0 %v1916
    %3004 = vmatpush1.bf16.msra.mxu0 %v1915
    %3005 = vmatprep.subr.bf16.mxu0 %v1928
    %3006 = vmatpush1.bf16.msra.mxu0 %v1927
    %3007 = vmatprep.subr.bf16.mxu0 %v1940
    %3008 = vmatpush1.bf16.msra.mxu0 %v1939
    %3009 = vmatprep.subr.bf16.mxu0 %v1952
    %3010 = vmatpush1.bf16.msra.mxu0 %v1951
    %3011 = vmatprep.subr.bf16.mxu0 %v1964
    %3012 = vmatpush1.bf16.msra.mxu0 %v1963
    %3013 = vmatprep.subr.bf16.mxu0 %v1976
    %3014 = vmatpush1.bf16.msra.mxu0 %v1975
    %3015 = vmatprep.subr.bf16.mxu0 %v1988
    %3016 = vmatpush1.bf16.msra.mxu0 %v1987
    %3017 = vmatprep.subr.bf16.mxu0 %v2000
    %3018 = vmatpush1.bf16.msra.mxu0 %v1999
    %3019 = vmatprep.subr.bf16.mxu0 %v2012
    %3020 = vmatpush1.bf16.msra.mxu0 %v2011
    %3021 = vmatprep.subr.bf16.mxu0 %v2024
    %3022 = vmatpush1.bf16.msra.mxu0 %v2023
    %3023 = vmatprep.subr.bf16.mxu0 %v2036
    %3024 = vmatpush1.bf16.msra.mxu0 %v2035
    %3025 = vmatprep.subr.bf16.mxu0 %v2048
    %3026 = vmatpush1.bf16.msra.mxu0 %v2047
    %3027 = vmatprep.subr.bf16.mxu0 %v2060
    %3028 = vmatpush1.bf16.msra.mxu0 %v2059
    %3029 = vmatprep.subr.bf16.mxu0 %v2072
    %3030 = vmatpush1.bf16.msra.mxu0 %v2071
    %3031 = vmatprep.subr.bf16.mxu0 %v2084
    %3032 = vmatpush1.bf16.msra.mxu0 %v2083
    %3033 = vmatprep.subr.bf16.mxu0 %v2096
    %3034 = vmatpush1.bf16.msra.mxu0 %v2095
    %3035 = vmatprep.mubr.bf16.mxu0 %v368
    %3036 = vmatmul.mubr.bf16.gmra.mrb[0].mxu0 %v367
    %v3037 = vpop.f32.mrb[0].mxu0
    %v3038 = vadd.f32 0.0, %v3037
    %v3039 = vpop.f32.mrb[0].mxu0
    %v3040 = vadd.f32 0.0, %v3039
    %v3041 = vpop.f32.mrb[0].mxu0
    %v3042 = vpop.f32.mrb[0].mxu0
    %3043 = vdwg.mxu0
    %3044 = vmatprep.subr.bf16.mxu0 %v2108
    %3045 = vmatpush1.bf16.msra.mxu0 %v2107
    %3046 = vmatprep.subr.bf16.mxu0 %v2120
    %3047 = vmatpush1.bf16.msra.mxu0 %v2119
    %3048 = vmatprep.subr.bf16.mxu0 %v2132
    %3049 = vmatpush1.bf16.msra.mxu0 %v2131
    %3050 = vmatprep.subr.bf16.mxu0 %v2144
    %3051 = vmatpush1.bf16.msra.mxu0 %v2143
    %3052 = vmatprep.subr.bf16.mxu0 %v2156
    %3053 = vmatpush1.bf16.msra.mxu0 %v2155
    %3054 = vmatprep.subr.bf16.mxu0 %v2168
    %3055 = vmatpush1.bf16.msra.mxu0 %v2167
    %3056 = vmatprep.subr.bf16.mxu0 %v2180
    %3057 = vmatpush1.bf16.msra.mxu0 %v2179
    %3058 = vmatprep.subr.bf16.mxu0 %v2192
    %3059 = vmatpush1.bf16.msra.mxu0 %v2191
    %3060 = vmatprep.subr.bf16.mxu0 %v2204
    %3061 = vmatpush1.bf16.msra.mxu0 %v2203
    %3062 = vmatprep.subr.bf16.mxu0 %v2216
    %3063 = vmatpush1.bf16.msra.mxu0 %v2215
    %3064 = vmatprep.subr.bf16.mxu0 %v2228
    %3065 = vmatpush1.bf16.msra.mxu0 %v2227
    %3066 = vmatprep.subr.bf16.mxu0 %v2240
    %3067 = vmatpush1.bf16.msra.mxu0 %v2239
    %3068 = vmatprep.subr.bf16.mxu0 %v2252
    %3069 = vmatpush1.bf16.msra.mxu0 %v2251
    %3070 = vmatprep.subr.bf16.mxu0 %v2264
    %3071 = vmatpush1.bf16.msra.mxu0 %v2263
    %3072 = vmatprep.subr.bf16.mxu0 %v2276
    %3073 = vmatpush1.bf16.msra.mxu0 %v2275
    %3074 = vmatprep.subr.bf16.mxu0 %v2288
    %3075 = vmatpush1.bf16.msra.mxu0 %v2287
    %3076 = vmatprep.mubr.bf16.mxu0 %v370
    %3077 = vmatmul.mubr.bf16.gmra.mrb[0].mxu0 %v369
    %v3078 = vpop.f32.mrb[0].mxu0
    %v3079 = vadd.f32 %v3038, %v3078
    %v3080 = vpop.f32.mrb[0].mxu0
    %v3081 = vadd.f32 %v3040, %v3080
    %v3082 = vpop.f32.mrb[0].mxu0
    %v3083 = vpop.f32.mrb[0].mxu0
    %3084 = vdwg.mxu0
    %3085 = vmatprep.subr.bf16.mxu0 %v1918
    %3086 = vmatpush1.bf16.msra.mxu0 %v1917
    %3087 = vmatprep.subr.bf16.mxu0 %v1930
    %3088 = vmatpush1.bf16.msra.mxu0 %v1929
    %3089 = vmatprep.subr.bf16.mxu0 %v1942
    %3090 = vmatpush1.bf16.msra.mxu0 %v1941
    %3091 = vmatprep.subr.bf16.mxu0 %v1954
    %3092 = vmatpush1.bf16.msra.mxu0 %v1953
    %3093 = vmatprep.subr.bf16.mxu0 %v1966
    %3094 = vmatpush1.bf16.msra.mxu0 %v1965
    %3095 = vmatprep.subr.bf16.mxu0 %v1978
    %3096 = vmatpush1.bf16.msra.mxu0 %v1977
    %3097 = vmatprep.subr.bf16.mxu0 %v1990
    %3098 = vmatpush1.bf16.msra.mxu0 %v1989
    %3099 = vmatprep.subr.bf16.mxu0 %v2002
    %3100 = vmatpush1.bf16.msra.mxu0 %v2001
    %3101 = vmatprep.subr.bf16.mxu0 %v2014
    %3102 = vmatpush1.bf16.msra.mxu0 %v2013
    %3103 = vmatprep.subr.bf16.mxu0 %v2026
    %3104 = vmatpush1.bf16.msra.mxu0 %v2025
    %3105 = vmatprep.subr.bf16.mxu0 %v2038
    %3106 = vmatpush1.bf16.msra.mxu0 %v2037
    %3107 = vmatprep.subr.bf16.mxu0 %v2050
    %3108 = vmatpush1.bf16.msra.mxu0 %v2049
    %3109 = vmatprep.subr.bf16.mxu0 %v2062
    %3110 = vmatpush1.bf16.msra.mxu0 %v2061
    %3111 = vmatprep.subr.bf16.mxu0 %v2074
    %3112 = vmatpush1.bf16.msra.mxu0 %v2073
    %3113 = vmatprep.subr.bf16.mxu0 %v2086
    %3114 = vmatpush1.bf16.msra.mxu0 %v2085
    %3115 = vmatprep.subr.bf16.mxu0 %v2098
    %3116 = vmatpush1.bf16.msra.mxu0 %v2097
    %3117 = vmatprep.mubr.bf16.mxu0 %v368
    %3118 = vmatmul.mubr.bf16.gmra.mrb[0].mxu0 %v367
    %v3119 = vpop.f32.mrb[0].mxu0
    %v3120 = vadd.f32 0.0, %v3119
    %v3121 = vpop.f32.mrb[0].mxu0
    %v3122 = vadd.f32 0.0, %v3121
    %v3123 = vpop.f32.mrb[0].mxu0
    %v3124 = vpop.f32.mrb[0].mxu0
    %3125 = vdwg.mxu0
    %3126 = vmatprep.subr.bf16.mxu0 %v2110
    %3127 = vmatpush1.bf16.msra.mxu0 %v2109
    %3128 = vmatprep.subr.bf16.mxu0 %v2122
    %3129 = vmatpush1.bf16.msra.mxu0 %v2121
    %3130 = vmatprep.subr.bf16.mxu0 %v2134
    %3131 = vmatpush1.bf16.msra.mxu0 %v2133
    %3132 = vmatprep.subr.bf16.mxu0 %v2146
    %3133 = vmatpush1.bf16.msra.mxu0 %v2145
    %3134 = vmatprep.subr.bf16.mxu0 %v2158
    %3135 = vmatpush1.bf16.msra.mxu0 %v2157
    %3136 = vmatprep.subr.bf16.mxu0 %v2170
    %3137 = vmatpush1.bf16.msra.mxu0 %v2169
    %3138 = vmatprep.subr.bf16.mxu0 %v2182
    %3139 = vmatpush1.bf16.msra.mxu0 %v2181
    %3140 = vmatprep.subr.bf16.mxu0 %v2194
    %3141 = vmatpush1.bf16.msra.mxu0 %v2193
    %3142 = vmatprep.subr.bf16.mxu0 %v2206
    %3143 = vmatpush1.bf16.msra.mxu0 %v2205
    %3144 = vmatprep.subr.bf16.mxu0 %v2218
    %3145 = vmatpush1.bf16.msra.mxu0 %v2217
    %3146 = vmatprep.subr.bf16.mxu0 %v2230
    %3147 = vmatpush1.bf16.msra.mxu0 %v2229
    %3148 = vmatprep.subr.bf16.mxu0 %v2242
    %3149 = vmatpush1.bf16.msra.mxu0 %v2241
    %3150 = vmatprep.subr.bf16.mxu0 %v2254
    %3151 = vmatpush1.bf16.msra.mxu0 %v2253
    %3152 = vmatprep.subr.bf16.mxu0 %v2266
    %3153 = vmatpush1.bf16.msra.mxu0 %v2265
    %3154 = vmatprep.subr.bf16.mxu0 %v2278
    %3155 = vmatpush1.bf16.msra.mxu0 %v2277
    %3156 = vmatprep.subr.bf16.mxu0 %v2290
    %3157 = vmatpush1.bf16.msra.mxu0 %v2289
    %3158 = vmatprep.mubr.bf16.mxu0 %v370
    %3159 = vmatmul.mubr.bf16.gmra.mrb[0].mxu0 %v369
    %v3160 = vpop.f32.mrb[0].mxu0
    %v3161 = vadd.f32 %v3120, %v3160
    %v3162 = vpop.f32.mrb[0].mxu0
    %v3163 = vadd.f32 %v3122, %v3162
    %v3164 = vpop.f32.mrb[0].mxu0
    %v3165 = vpop.f32.mrb[0].mxu0
    %3166 = vdwg.mxu0
    %v3167 = vmax.f32 %v2751, -1.0
    %v3168 = vmax.f32 %v2753, -1.0
    %v3169 = vmax.f32 %v2833, -1.0
    %v3170 = vmax.f32 %v2835, -1.0
    %v3171 = vmax.f32 %v2915, -1.0
    %v3172 = vmax.f32 %v2917, -1.0
    %v3173 = vmax.f32 %v2997, -1.0
    %v3174 = vmax.f32 %v2999, -1.0
    %v3175 = vmax.f32 %v3079, -1.0
    %v3176 = vmax.f32 %v3081, -1.0
    %v3177 = vmax.f32 %v3161, -1.0
    %v3178 = vmax.f32 %v3163, -1.0
    %v3179 = vmin.f32 %v3167, 1.0
    %v3180 = vmin.f32 %v3168, 1.0
    %v3181 = vmin.f32 %v3169, 1.0
    %v3182 = vmin.f32 %v3170, 1.0
    %v3183 = vmin.f32 %v3171, 1.0
    %v3184 = vmin.f32 %v3172, 1.0
    %v3185 = vmin.f32 %v3173, 1.0
    %v3186 = vmin.f32 %v3174, 1.0
    %v3187 = vmin.f32 %v3175, 1.0
    %v3188 = vmin.f32 %v3176, 1.0
    %v3189 = vmin.f32 %v3177, 1.0
    %v3190 = vmin.f32 %v3178, 1.0
    %v3191 = vmul.f32 %v3179, %v3179
    %v3192 = vmul.f32 %v3180, %v3180
    %v3193 = vmul.f32 %v3181, %v3181
    %v3194 = vmul.f32 %v3182, %v3182
    %v3195 = vmul.f32 %v3183, %v3183
    %v3196 = vmul.f32 %v3184, %v3184
    %v3197 = vmul.f32 %v3185, %v3185
    %v3198 = vmul.f32 %v3186, %v3186
    %v3199 = vmul.f32 %v3187, %v3187
    %v3200 = vmul.f32 %v3188, %v3188
    %v3201 = vmul.f32 %v3189, %v3189
    %v3202 = vmul.f32 %v3190, %v3190
    %v3203 = vsub.f32 1.0, %v3191
    %v3204 = vsub.f32 1.0, %v3192
    %v3205 = vsub.f32 1.0, %v3193
    %v3206 = vsub.f32 1.0, %v3194
    %v3207 = vsub.f32 1.0, %v3195
    %v3208 = vsub.f32 1.0, %v3196
    %v3209 = vsub.f32 1.0, %v3197
    %v3210 = vsub.f32 1.0, %v3198
    %v3211 = vsub.f32 1.0, %v3199
    %v3212 = vsub.f32 1.0, %v3200
    %v3213 = vsub.f32 1.0, %v3201
    %v3214 = vsub.f32 1.0, %v3202
    %v3215 = vmax.f32 %v3203, 0.0
    %v3216 = vmax.f32 %v3204, 0.0
    %v3217 = vmax.f32 %v3205, 0.0
    %v3218 = vmax.f32 %v3206, 0.0
    %v3219 = vmax.f32 %v3207, 0.0
    %v3220 = vmax.f32 %v3208, 0.0
    %v3221 = vmax.f32 %v3209, 0.0
    %v3222 = vmax.f32 %v3210, 0.0
    %v3223 = vmax.f32 %v3211, 0.0
    %v3224 = vmax.f32 %v3212, 0.0
    %v3225 = vmax.f32 %v3213, 0.0
    %v3226 = vmax.f32 %v3214, 0.0
    %v3227 = vrsqrt.pop %v3215
    %v3228 = vmul.f32 %v3215, %v3227
    %vm3229 = vcmp.eq.f32.partialorder %v3215, inf
    %v3230 = vsel %vm3229, %v3215, %v3228
    %vm3231 = vcmp.eq.f32.partialorder %v3215, 0.0
    %v3232 = vand.u32 %v3215, 2147483648
    %v3233 = vsel %vm3231, %v3232, %v3230
    %v3234 = vrsqrt.pop %v3216
    %v3235 = vmul.f32 %v3216, %v3234
    %vm3236 = vcmp.eq.f32.partialorder %v3216, inf
    %v3237 = vsel %vm3236, %v3216, %v3235
    %vm3238 = vcmp.eq.f32.partialorder %v3216, 0.0
    %v3239 = vand.u32 %v3216, 2147483648
    %v3240 = vsel %vm3238, %v3239, %v3237
    %v3241 = vrsqrt.pop %v3217
    %v3242 = vmul.f32 %v3217, %v3241
    %vm3243 = vcmp.eq.f32.partialorder %v3217, inf
    %v3244 = vsel %vm3243, %v3217, %v3242
    %vm3245 = vcmp.eq.f32.partialorder %v3217, 0.0
    %v3246 = vand.u32 %v3217, 2147483648
    %v3247 = vsel %vm3245, %v3246, %v3244
    %v3248 = vrsqrt.pop %v3218
    %v3249 = vmul.f32 %v3218, %v3248
    %vm3250 = vcmp.eq.f32.partialorder %v3218, inf
    %v3251 = vsel %vm3250, %v3218, %v3249
    %vm3252 = vcmp.eq.f32.partialorder %v3218, 0.0
    %v3253 = vand.u32 %v3218, 2147483648
    %v3254 = vsel %vm3252, %v3253, %v3251
    %v3255 = vrsqrt.pop %v3219
    %v3256 = vmul.f32 %v3219, %v3255
    %vm3257 = vcmp.eq.f32.partialorder %v3219, inf
    %v3258 = vsel %vm3257, %v3219, %v3256
    %vm3259 = vcmp.eq.f32.partialorder %v3219, 0.0
    %v3260 = vand.u32 %v3219, 2147483648
    %v3261 = vsel %vm3259, %v3260, %v3258
    %v3262 = vrsqrt.pop %v3220
    %v3263 = vmul.f32 %v3220, %v3262
    %vm3264 = vcmp.eq.f32.partialorder %v3220, inf
    %v3265 = vsel %vm3264, %v3220, %v3263
    %vm3266 = vcmp.eq.f32.partialorder %v3220, 0.0
    %v3267 = vand.u32 %v3220, 2147483648
    %v3268 = vsel %vm3266, %v3267, %v3265
    %v3269 = vrsqrt.pop %v3221
    %v3270 = vmul.f32 %v3221, %v3269
    %vm3271 = vcmp.eq.f32.partialorder %v3221, inf
    %v3272 = vsel %vm3271, %v3221, %v3270
    %vm3273 = vcmp.eq.f32.partialorder %v3221, 0.0
    %v3274 = vand.u32 %v3221, 2147483648
    %v3275 = vsel %vm3273, %v3274, %v3272
    %v3276 = vrsqrt.pop %v3222
    %v3277 = vmul.f32 %v3222, %v3276
    %vm3278 = vcmp.eq.f32.partialorder %v3222, inf
    %v3279 = vsel %vm3278, %v3222, %v3277
    %vm3280 = vcmp.eq.f32.partialorder %v3222, 0.0
    %v3281 = vand.u32 %v3222, 2147483648
    %v3282 = vsel %vm3280, %v3281, %v3279
    %v3283 = vrsqrt.pop %v3223
    %v3284 = vmul.f32 %v3223, %v3283
    %vm3285 = vcmp.eq.f32.partialorder %v3223, inf
    %v3286 = vsel %vm3285, %v3223, %v3284
    %vm3287 = vcmp.eq.f32.partialorder %v3223, 0.0
    %v3288 = vand.u32 %v3223, 2147483648
    %v3289 = vsel %vm3287, %v3288, %v3286
    %v3290 = vrsqrt.pop %v3224
    %v3291 = vmul.f32 %v3224, %v3290
    %vm3292 = vcmp.eq.f32.partialorder %v3224, inf
    %v3293 = vsel %vm3292, %v3224, %v3291
    %vm3294 = vcmp.eq.f32.partialorder %v3224, 0.0
    %v3295 = vand.u32 %v3224, 2147483648
    %v3296 = vsel %vm3294, %v3295, %v3293
    %v3297 = vrsqrt.pop %v3225
    %v3298 = vmul.f32 %v3225, %v3297
    %vm3299 = vcmp.eq.f32.partialorder %v3225, inf
    %v3300 = vsel %vm3299, %v3225, %v3298
    %vm3301 = vcmp.eq.f32.partialorder %v3225, 0.0
    %v3302 = vand.u32 %v3225, 2147483648
    %v3303 = vsel %vm3301, %v3302, %v3300
    %v3304 = vrsqrt.pop %v3226
    %v3305 = vmul.f32 %v3226, %v3304
    %vm3306 = vcmp.eq.f32.partialorder %v3226, inf
    %v3307 = vsel %vm3306, %v3226, %v3305
    %vm3308 = vcmp.eq.f32.partialorder %v3226, 0.0
    %v3309 = vand.u32 %v3226, 2147483648
    %v3310 = vsel %vm3308, %v3309, %v3307
    %v3311 = vmul.f32 %v3179, 0.87758255
    %v3312 = vmul.f32 %v3180, 0.87758255
    %v3313 = vmul.f32 %v3181, 0.87758255
    %v3314 = vmul.f32 %v3182, 0.87758255
    %v3315 = vmul.f32 %v3183, 0.87758255
    %v3316 = vmul.f32 %v3184, 0.87758255
    %v3317 = vmul.f32 %v3185, 0.87758255
    %v3318 = vmul.f32 %v3186, 0.87758255
    %v3319 = vmul.f32 %v3187, 0.87758255
    %v3320 = vmul.f32 %v3188, 0.87758255
    %v3321 = vmul.f32 %v3189, 0.87758255
    %v3322 = vmul.f32 %v3190, 0.87758255
    %v3323 = vmul.f32 %v3233, 0.47942555
    %v3324 = vmul.f32 %v3240, 0.47942555
    %v3325 = vmul.f32 %v3247, 0.47942555
    %v3326 = vmul.f32 %v3254, 0.47942555
    %v3327 = vmul.f32 %v3261, 0.47942555
    %v3328 = vmul.f32 %v3268, 0.47942555
    %v3329 = vmul.f32 %v3275, 0.47942555
    %v3330 = vmul.f32 %v3282, 0.47942555
    %v3331 = vmul.f32 %v3289, 0.47942555
    %v3332 = vmul.f32 %v3296, 0.47942555
    %v3333 = vmul.f32 %v3303, 0.47942555
    %v3334 = vmul.f32 %v3310, 0.47942555
    %v3335 = vsub.f32 %v3311, %v3323
    %v3336 = vsub.f32 %v3312, %v3324
    %v3337 = vsub.f32 %v3313, %v3325
    %v3338 = vsub.f32 %v3314, %v3326
    %v3339 = vsub.f32 %v3315, %v3327
    %v3340 = vsub.f32 %v3316, %v3328
    %v3341 = vsub.f32 %v3317, %v3329
    %v3342 = vsub.f32 %v3318, %v3330
    %v3343 = vsub.f32 %v3319, %v3331
    %v3344 = vsub.f32 %v3320, %v3332
    %v3345 = vsub.f32 %v3321, %v3333
    %v3346 = vsub.f32 %v3322, %v3334
    %v3347 = vsub.f32 %v3179, -0.87758255
    %v3348 = vsub.f32 %v3180, -0.87758255
    %v3349 = vsub.f32 %v3181, -0.87758255
    %v3350 = vsub.f32 %v3182, -0.87758255
    %v3351 = vsub.f32 %v3183, -0.87758255
    %v3352 = vsub.f32 %v3184, -0.87758255
    %v3353 = vsub.f32 %v3185, -0.87758255
    %v3354 = vsub.f32 %v3186, -0.87758255
    %v3355 = vsub.f32 %v3187, -0.87758255
    %v3356 = vsub.f32 %v3188, -0.87758255
    %v3357 = vsub.f32 %v3189, -0.87758255
    %v3358 = vsub.f32 %v3190, -0.87758255
    %vm3359 = vcmp.le.f32.partialorder %v3347, 0.0
    %vm3360 = vcmp.le.f32.partialorder %v3348, 0.0
    %vm3361 = vcmp.le.f32.partialorder %v3349, 0.0
    %vm3362 = vcmp.le.f32.partialorder %v3350, 0.0
    %vm3363 = vcmp.le.f32.partialorder %v3351, 0.0
    %vm3364 = vcmp.le.f32.partialorder %v3352, 0.0
    %vm3365 = vcmp.le.f32.partialorder %v3353, 0.0
    %vm3366 = vcmp.le.f32.partialorder %v3354, 0.0
    %vm3367 = vcmp.le.f32.partialorder %v3355, 0.0
    %vm3368 = vcmp.le.f32.partialorder %v3356, 0.0
    %vm3369 = vcmp.le.f32.partialorder %v3357, 0.0
    %vm3370 = vcmp.le.f32.partialorder %v3358, 0.0
    %v3371 = vsub.f32 %v3179, 0.23971277
    %v3372 = vsub.f32 %v3180, 0.23971277
    %v3373 = vsub.f32 %v3181, 0.23971277
    %v3374 = vsub.f32 %v3182, 0.23971277
    %v3375 = vsub.f32 %v3183, 0.23971277
    %v3376 = vsub.f32 %v3184, 0.23971277
    %v3377 = vsub.f32 %v3185, 0.23971277
    %v3378 = vsub.f32 %v3186, 0.23971277
    %v3379 = vsub.f32 %v3187, 0.23971277
    %v3380 = vsub.f32 %v3188, 0.23971277
    %v3381 = vsub.f32 %v3189, 0.23971277
    %v3382 = vsub.f32 %v3190, 0.23971277
    %v3383 = vsel %vm3359, %v3371, %v3335
    %v3384 = vsel %vm3360, %v3372, %v3336
    %v3385 = vsel %vm3361, %v3373, %v3337
    %v3386 = vsel %vm3362, %v3374, %v3338
    %v3387 = vsel %vm3363, %v3375, %v3339
    %v3388 = vsel %vm3364, %v3376, %v3340
    %v3389 = vsel %vm3365, %v3377, %v3341
    %v3390 = vsel %vm3366, %v3378, %v3342
    %v3391 = vsel %vm3367, %v3379, %v3343
    %v3392 = vsel %vm3368, %v3380, %v3344
    %v3393 = vsel %vm3369, %v3381, %v3345
    %v3394 = vsel %vm3370, %v3382, %v3346
    %v3395 = vlaneseq
    %v3396 = vand.u32 %v3395, 127
    %v3397 = vadd.s32 %v3396, 128
    %v3398 = vadd.s32 %v3396, 256
    %v3399 = vadd.s32 %v3396, 384
    %v3400 = vadd.s32 %v3396, 512
    %v3401 = vadd.s32 %v3396, 640
    %v3402 = vadd.s32 %v3396, 768
    %v3403 = vadd.s32 %v3396, 896
    %v3404 = vadd.s32 %v3396, 1024
    %v3405 = vadd.s32 %v3396, 1152
    %v3406 = vadd.s32 %v3396, 1280
    %v3407 = vadd.s32 %v3396, 1408
    %v3408 = vld [vmem:[%s6] sm:$0xff]
    %3409 = vset.pattern.permute.xlu0 0
    %3410 = vperm.xlu0 %3409, %v3408
    %v3411 = vpop.permute.xlu0 %3410
    %vm3412 = vcmp.eq.s32.totalorder %v3396, %v3411
    %vm3413 = vcmp.eq.s32.totalorder %v3397, %v3411
    %vm3414 = vcmp.eq.s32.totalorder %v3398, %v3411
    %vm3415 = vcmp.eq.s32.totalorder %v3399, %v3411
    %vm3416 = vcmp.eq.s32.totalorder %v3400, %v3411
    %vm3417 = vcmp.eq.s32.totalorder %v3401, %v3411
    %vm3418 = vcmp.eq.s32.totalorder %v3402, %v3411
    %vm3419 = vcmp.eq.s32.totalorder %v3403, %v3411
    %vm3420 = vcmp.eq.s32.totalorder %v3404, %v3411
    %vm3421 = vcmp.eq.s32.totalorder %v3405, %v3411
    %vm3422 = vcmp.eq.s32.totalorder %v3406, %v3411
    %vm3423 = vcmp.eq.s32.totalorder %v3407, %v3411
    %3424 = vset.pattern.permute.xlu0 1
    %3425 = vperm.xlu0 %3424, %v3408
    %v3426 = vpop.permute.xlu0 %3425
    %vm3427 = vcmp.eq.s32.totalorder %v3396, %v3426
    %vm3428 = vcmp.eq.s32.totalorder %v3397, %v3426
    %vm3429 = vcmp.eq.s32.totalorder %v3398, %v3426
    %vm3430 = vcmp.eq.s32.totalorder %v3399, %v3426
    %vm3431 = vcmp.eq.s32.totalorder %v3400, %v3426
    %vm3432 = vcmp.eq.s32.totalorder %v3401, %v3426
    %vm3433 = vcmp.eq.s32.totalorder %v3402, %v3426
    %vm3434 = vcmp.eq.s32.totalorder %v3403, %v3426
    %vm3435 = vcmp.eq.s32.totalorder %v3404, %v3426
    %vm3436 = vcmp.eq.s32.totalorder %v3405, %v3426
    %vm3437 = vcmp.eq.s32.totalorder %v3406, %v3426
    %vm3438 = vcmp.eq.s32.totalorder %v3407, %v3426
    %vm3439 = vmor %vm3412, %vm3427
    %vm3440 = vmor %vm3413, %vm3428
    %vm3441 = vmor %vm3414, %vm3429
    %vm3442 = vmor %vm3415, %vm3430
    %vm3443 = vmor %vm3416, %vm3431
    %vm3444 = vmor %vm3417, %vm3432
    %vm3445 = vmor %vm3418, %vm3433
    %vm3446 = vmor %vm3419, %vm3434
    %vm3447 = vmor %vm3420, %vm3435
    %vm3448 = vmor %vm3421, %vm3436
    %vm3449 = vmor %vm3422, %vm3437
    %vm3450 = vmor %vm3423, %vm3438
    %3451 = vset.pattern.permute.xlu0 2
    %3452 = vperm.xlu0 %3451, %v3408
    %v3453 = vpop.permute.xlu0 %3452
    %vm3454 = vcmp.eq.s32.totalorder %v3396, %v3453
    %vm3455 = vcmp.eq.s32.totalorder %v3397, %v3453
    %vm3456 = vcmp.eq.s32.totalorder %v3398, %v3453
    %vm3457 = vcmp.eq.s32.totalorder %v3399, %v3453
    %vm3458 = vcmp.eq.s32.totalorder %v3400, %v3453
    %vm3459 = vcmp.eq.s32.totalorder %v3401, %v3453
    %vm3460 = vcmp.eq.s32.totalorder %v3402, %v3453
    %vm3461 = vcmp.eq.s32.totalorder %v3403, %v3453
    %vm3462 = vcmp.eq.s32.totalorder %v3404, %v3453
    %vm3463 = vcmp.eq.s32.totalorder %v3405, %v3453
    %vm3464 = vcmp.eq.s32.totalorder %v3406, %v3453
    %vm3465 = vcmp.eq.s32.totalorder %v3407, %v3453
    %vm3466 = vmor %vm3439, %vm3454
    %vm3467 = vmor %vm3440, %vm3455
    %vm3468 = vmor %vm3441, %vm3456
    %vm3469 = vmor %vm3442, %vm3457
    %vm3470 = vmor %vm3443, %vm3458
    %vm3471 = vmor %vm3444, %vm3459
    %vm3472 = vmor %vm3445, %vm3460
    %vm3473 = vmor %vm3446, %vm3461
    %vm3474 = vmor %vm3447, %vm3462
    %vm3475 = vmor %vm3448, %vm3463
    %vm3476 = vmor %vm3449, %vm3464
    %vm3477 = vmor %vm3450, %vm3465
    %3478 = vset.pattern.permute.xlu0 3
    %3479 = vperm.xlu0 %3478, %v3408
    %v3480 = vpop.permute.xlu0 %3479
    %vm3481 = vcmp.eq.s32.totalorder %v3396, %v3480
    %vm3482 = vcmp.eq.s32.totalorder %v3397, %v3480
    %vm3483 = vcmp.eq.s32.totalorder %v3398, %v3480
    %vm3484 = vcmp.eq.s32.totalorder %v3399, %v3480
    %vm3485 = vcmp.eq.s32.totalorder %v3400, %v3480
    %vm3486 = vcmp.eq.s32.totalorder %v3401, %v3480
    %vm3487 = vcmp.eq.s32.totalorder %v3402, %v3480
    %vm3488 = vcmp.eq.s32.totalorder %v3403, %v3480
    %vm3489 = vcmp.eq.s32.totalorder %v3404, %v3480
    %vm3490 = vcmp.eq.s32.totalorder %v3405, %v3480
    %vm3491 = vcmp.eq.s32.totalorder %v3406, %v3480
    %vm3492 = vcmp.eq.s32.totalorder %v3407, %v3480
    %vm3493 = vmor %vm3466, %vm3481
    %vm3494 = vmor %vm3467, %vm3482
    %vm3495 = vmor %vm3468, %vm3483
    %vm3496 = vmor %vm3469, %vm3484
    %vm3497 = vmor %vm3470, %vm3485
    %vm3498 = vmor %vm3471, %vm3486
    %vm3499 = vmor %vm3472, %vm3487
    %vm3500 = vmor %vm3473, %vm3488
    %vm3501 = vmor %vm3474, %vm3489
    %vm3502 = vmor %vm3475, %vm3490
    %vm3503 = vmor %vm3476, %vm3491
    %vm3504 = vmor %vm3477, %vm3492
    %v3505 = vsel %vm3493, %v3383, %v3179
    %v3506 = vsel %vm3494, %v3384, %v3180
    %v3507 = vsel %vm3495, %v3385, %v3181
    %v3508 = vsel %vm3496, %v3386, %v3182
    %v3509 = vsel %vm3497, %v3387, %v3183
    %v3510 = vsel %vm3498, %v3388, %v3184
    %v3511 = vsel %vm3499, %v3389, %v3185
    %v3512 = vsel %vm3500, %v3390, %v3186
    %v3513 = vsel %vm3501, %v3391, %v3187
    %v3514 = vsel %vm3502, %v3392, %v3188
    %v3515 = vsel %vm3503, %v3393, %v3189
    %v3516 = vsel %vm3504, %v3394, %v3190
    %v3517 = vmul.f32 %v3505, 32.0
    %v3518 = vmul.f32 %v3506, 32.0
    %v3519 = vmul.f32 %v3507, 32.0
    %v3520 = vmul.f32 %v3508, 32.0
    %v3521 = vmul.f32 %v3509, 32.0
    %v3522 = vmul.f32 %v3510, 32.0
    %v3523 = vmul.f32 %v3511, 32.0
    %v3524 = vmul.f32 %v3512, 32.0
    %v3525 = vmul.f32 %v3513, 32.0
    %v3526 = vmul.f32 %v3514, 32.0
    %v3527 = vmul.f32 %v3515, 32.0
    %v3528 = vmul.f32 %v3516, 32.0
    %3529 = vst [vmem:[%s7] sm:$0xff] %v3517
    %3530 = vst [vmem:[%s7 + $0x8] sm:$0xff] %v3518
    %3531 = vst [vmem:[%s7 + $0x10] sm:$0xff] %v3519
    %3532 = vst [vmem:[%s7 + $0x18] sm:$0xff] %v3520
    %3533 = vst [vmem:[%s7 + $0x20] sm:$0xff] %v3521
    %3534 = vst [vmem:[%s7 + $0x28] sm:$0xff] %v3522
    %3535 = vst [vmem:[%s7 + $0x30] sm:$0xff] %v3523
    %3536 = vst [vmem:[%s7 + $0x38] sm:$0xff] %v3524
    %3537 = vst [vmem:[%s7 + $0x40] sm:$0xff] %v3525
    %3538 = vst [vmem:[%s7 + $0x48] sm:$0xff] %v3526
    %3539 = vst [vmem:[%s7 + $0x50] sm:$0xff] %v3527
    %3540 = vst [vmem:[%s7 + $0x58] sm:$0xff] %v3528
    // Predicated region
    $region50: #{multi_head_forward.1} parent=1 // pred_check
      _
    $region51: #{multi_head_forward.1} parent=1 // pred_check_branch
      %3542 = sbr.rel (0) target = $region53
    $region52: #{multi_head_forward.1} parent=1 // pred_region
      _
    $region53: #{multi_head_forward.1} parent=1 // pred_fallthru
      _
    // Predicated region
    $region54: #{multi_head_forward.1} parent=1 // pred_check
      _
    $region55: #{multi_head_forward.1} parent=1 // pred_check_branch
      %3544 = sbr.rel (0) target = $region57
    $region56: #{multi_head_forward.1} parent=1 // pred_region
      _
    $region57: #{multi_head_forward.1} parent=1 // pred_fallthru
      _
    %3545 = vsyncpa [#allocation3], 1
    %3546 = vsyncpa [#allocation5], 1
    %3547 = vsyncpa [#allocation8], 1

</llo_original>
